<compile_context>
chip_gen: v7x
topology: tpu7x:2x2x1
jax: 0.10.0
libtpu: 0.0.40
codegen_flags: <defaults>
</compile_context>

<pallas_src>
import functools

import jax
import jax.numpy as jnp
from jax import lax
from jax.experimental import pallas as pl
from jax.experimental.pallas import tpu as pltpu


def _softclt_row_block_kernel(fo_t_ref, fa_t_ref, st_ref, fo_blk_ref, fa_blk_ref, sblk_ref,
                              out_ref, *, alpha, tau, bn, bf16_mm, mxu_shift):
    tm = fo_blk_ref.shape[0]          # rows of the small (B*N) index space per grid step
    r0 = pl.program_id(0) * tm        # first small-row handled by this grid step
    last = bn - 1

    nn_dims = (((1,), (0,)), ((), ()))   # A(m,k) @ B(k,n): contract LHS lanes w/ RHS sublanes

    def mm(a, b):
        if bf16_mm:                       # native MXU path on v6e/v7x; f32 accumulate
            a = a.astype(jnp.bfloat16)
            b = b.astype(jnp.bfloat16)
        return lax.dot_general(a, b, nn_dims, preferred_element_type=jnp.float32)

    row = lax.broadcasted_iota(jnp.int32, (tm, bn), 0)
    col = lax.broadcasted_iota(jnp.int32, (tm, bn), 1)

    # ---- soft labels: sigmoid evaluated ONCE on the (tm, bn) small stripe ----
    # (series matmul stays f32 even under bf16_mm: ss_row + ss_col - 2*dots cancels)
    st = st_ref[...]                                                  # (T, bn)  resident
    sb = sblk_ref[...]                                                # (tm, T)  row block
    dots = lax.dot_general(sb, st, nn_dims, preferred_element_type=jnp.float32)
    ss_col = jnp.sum(st * st, axis=0, keepdims=True)                  # (1, bn)
    ss_row = jnp.sum(sb * sb, axis=1, keepdims=True)                  # (tm, 1)
    pd = ss_row + ss_col - 2.0 * dots                                 # squared distances
    # 2*alpha*sigmoid(-tau*pd); exp may overflow to +inf for large tau*pd, which correctly
    # yields soft -> 0.  Divide runs on the EUP reciprocal slot.
    soft = (2.0 * alpha) * pl.reciprocal(1.0 + jnp.exp(tau * pd), approx=True)
    # zero padded rows (bn not a multiple of tm) so they drop out of every sum
    soft = jnp.where(row + r0 < bn, soft, 0.0)
    msl_partial = jnp.sum(soft)

    fo_t = fo_t_ref[...]                                              # (D, bn) resident
    fa_t = fa_t_ref[...]                                              # (D, bn) resident

    # column-shift helpers: y[:, j] = x[:, j +/- 1] with an explicit boundary column.
    # Fast path: in-register lane shift (slice + concat).  Fallback: tiny static permutation
    # matrix on the MXU (only used if the lane shift fails to lower).
    def shift_next(x, fill):          # y[:, j] = x[:, j+1];  y[:, bn-1] = fill[:, 0]
        if not mxu_shift:
            return jnp.concatenate([x[:, 1:], fill], axis=1)
        p = (lax.broadcasted_iota(jnp.int32, (bn, bn), 0)
             == lax.broadcasted_iota(jnp.int32, (bn, bn), 1) + 1).astype(jnp.float32)
        y = lax.dot_general(x, p, nn_dims, preferred_element_type=jnp.float32)
        return jnp.where(col == last, fill, y)

    def shift_prev(x, fill):          # y[:, j] = x[:, j-1];  y[:, 0] = fill[:, 0]
        if not mxu_shift:
            return jnp.concatenate([fill, x[:, :last]], axis=1)
        q = (lax.broadcasted_iota(jnp.int32, (bn, bn), 0) + 1
             == lax.broadcasted_iota(jnp.int32, (bn, bn), 1)).astype(jnp.float32)
        y = lax.dot_general(x, q, nn_dims, preferred_element_type=jnp.float32)
        return jnp.where(col == 0, fill, y)

    def stripe_loss(f_blk, row_off):
        # one (tm, M) row stripe of the big similarity matrix, handled as two (tm, bn)
        # column halves so the (tm, bn) soft stripe is reused directly (no concat/tiling).
        g = row + row_off                                   # global big-matrix row index
        sim_l = mm(f_blk, fo_t)                             # sim[g, j]       (left columns)
        sim_r = mm(f_blk, fa_t)                             # sim[g, bn + j]  (right columns)

        nxt_l = shift_next(sim_l, sim_r[:, 0:1])            # sim[g, j+1]     (exact, incl. boundary)
        nxt_r = shift_next(sim_r, sim_r[:, 0:1])            # sim[g, bn+j+1]  (last col unused)
        prv_l = shift_prev(sim_l, sim_l[:, 0:1])            # sim[g, j-1]     (col 0 unused)
        prv_r = shift_prev(sim_r, sim_l[:, last:last + 1])  # sim[g, bn+j-1]  (exact, incl. boundary)

        # torch logits row:  L[g,c] = sim[g,c]*[c<g] + sim[g,c+1]*[c>=g-2],   c = 0..M-2
        a_l = col < g
        a_r = col + bn < g
        z_l = jnp.where(a_l, sim_l, 0.0) + jnp.where(col >= g - 2, nxt_l, 0.0)
        z_r = jnp.where(a_r, sim_r, 0.0) + jnp.where(col + bn >= g - 2, nxt_r, 0.0)

        # log-sum-exp over the valid logits columns (right half's last column is c = M-1)
        z_r_m = jnp.where(col < last, z_r, -1e30)
        zmax = jnp.maximum(jnp.max(z_l, axis=-1, keepdims=True),
                           jnp.max(z_r_m, axis=-1, keepdims=True))
        sumexp = (jnp.sum(jnp.exp(z_l - zmax), axis=-1, keepdims=True)
                  + jnp.sum(jnp.exp(z_r_m - zmax), axis=-1, keepdims=True))
        lse = zmax + jnp.log(sumexp)

        # sum_c (lse - L[g,c]) * soft_nd[g,c], rewritten so only the UNSHIFTED soft stripe is
        # needed:   sum_c (lse - z[c])  * soft[g,c] * [c < g]
        #         + sum_c (lse - zR[c]) * soft[g,c] * [c >= g-1][c >= 1],
        #           zR[c] = sim[g,c-1]*[c<=g] + sim[g,c]
        zr_l = jnp.where(col <= g, prv_l, 0.0) + sim_l
        zr_r = jnp.where(col + bn <= g, prv_r, 0.0) + sim_r
        m_l = jnp.logical_and(col >= g - 1, col >= 1)
        m_r = col + bn >= g - 1

        sa_l = jnp.where(a_l, soft, 0.0)
        sa_r = jnp.where(a_r, soft, 0.0)
        sm_l = jnp.where(m_l, soft, 0.0)
        sm_r = jnp.where(m_r, soft, 0.0)

        term = (lse * (sa_l + sa_r + sm_l + sm_r)
                - z_l * sa_l - z_r * sa_r - zr_l * sm_l - zr_r * sm_r)
        return jnp.sum(term)

    loss_partial = stripe_loss(fo_blk_ref[...], r0) + stripe_loss(fa_blk_ref[...], r0 + bn)

    # lane-dense (1, 8, 128) packed output tile: [0,0,0] = loss partial, [0,0,1] = msl partial
    sub = lax.broadcasted_iota(jnp.int32, (8, 128), 0)
    lane = lax.broadcasted_iota(jnp.int32, (8, 128), 1)
    packed = jnp.where((sub == 0) & (lane == 0), loss_partial,
                       jnp.where((sub == 0) & (lane == 1), msl_partial, 0.0))
    out_ref[...] = packed[None].astype(jnp.float32)


def _round_up(x, m):
    return (x + m - 1) // m * m


def _vmem_capacity_bytes():
    try:
        return int(pltpu.get_tpu_info().vmem_capacity_bytes)
    except Exception:
        return 64 * 1024 * 1024          # conservative default (v7x per-TensorCore VMEM)


def _pick_block_rows(bn, vmem_cap):
    # ~16 live (tm, bn) f32 stripes per row stripe (bn lane-padded to >=128); keep them plus
    # vreg spill headroom and the pipeline buffers inside a generation-aware slice of VMEM
    # (v7x: 64 MiB per TensorCore, v5e/v6e: 128 MiB).
    budget = (12 if vmem_cap <= 64 * 1024 * 1024 else 24) * 1024 * 1024
    per_row = 16 * max(bn, 128) * 4
    tm = max(8, min(512, budget // per_row // 8 * 8))
    # guarantee >= 2 grid steps so dual-TensorCore parts (v7x) get both cores busy
    tm = min(tm, _round_up(max((bn + 1) // 2, 8), 8))
    return int(tm)


def softclt_loss_sub(original_feature, augmented_feature, original_series, augmented_series,
                     W, bias, *, alpha, tau, block_rows=None, use_bf16_matmul=False):
    """hard=False / normalize=False forward path.  Returns (loss, mean_soft_label) scalars
    (the dict / ssl_loss_weight wrapping in the PyTorch module is framework glue)."""
    B, N, K = original_feature.shape
    _, T, _ = original_series.shape
    D = W.shape[0]
    BN = B * N
    M = 2 * BN

    of = original_feature.reshape(BN, K).astype(jnp.float32)
    af = augmented_feature.reshape(BN, K).astype(jnp.float32)
    series = jnp.transpose(original_series, (0, 2, 1)).reshape(BN, T).astype(jnp.float32)
    del augmented_series                      # reshaped but never used by the reference module

    # Tiny one-shot preprocessing in XLA: the (BN,K)x(K,D) nn.Linear mapper, plus transposed
    # copies of the small operands so the kernel's resident inputs are (D, BN)/(T, BN) —
    # sublane- instead of lane-padded (much smaller VMEM for tiny D/T) and directly usable by
    # the NN-contraction dot_general without per-step transposes.
    w_t = W.T.astype(jnp.float32)
    b2 = bias.reshape(1, D).astype(jnp.float32)
    f_o = of @ w_t + b2                          # (BN, D)
    f_a = af @ w_t + b2
    fo_t = jnp.transpose(f_o)                    # (D, BN)   resident: left-half columns
    fa_t = jnp.transpose(f_a)                    # (D, BN)   resident: right-half columns
    st_all = jnp.transpose(series)               # (T, BN)   resident

    vmem_cap = _vmem_capacity_bytes()
    tm = block_rows if block_rows is not None else _pick_block_rows(BN, vmem_cap)
    tm = int(_round_up(max(int(tm), 8), 8))
    G = (BN + tm - 1) // tm
    pad = G * tm - BN
    f_o_pad = jnp.pad(f_o, ((0, pad), (0, 0)))
    f_a_pad = jnp.pad(f_a, ((0, pad), (0, 0)))
    s_pad = jnp.pad(series, ((0, pad), (0, 0)))

    # ~64 MiB scoped limit on 128 MiB parts (v5e/v6e), ~38 MiB on 64 MiB parts (v7x).
    vmem_limit = int(max(32 * 1024 * 1024, min(int(vmem_cap * 0.6), 64 * 1024 * 1024)))

    def _call(resident_pipeline_mode, mxu_shift):
        kernel = functools.partial(_softclt_row_block_kernel, alpha=float(alpha),
                                   tau=float(tau), bn=BN, bf16_mm=bool(use_bf16_matmul),
                                   mxu_shift=mxu_shift)

        def rspec(shape):
            if resident_pipeline_mode is None:
                return pl.BlockSpec(shape, lambda i: (0, 0))
            return pl.BlockSpec(shape, lambda i: (0, 0),
                                pipeline_mode=resident_pipeline_mode)

        out = pl.pallas_call(
            kernel,
            out_shape=jax.ShapeDtypeStruct((G, 8, 128), jnp.float32),
            grid=(G,),
            in_specs=[
                rspec((D, BN)),                             # fo_t    (resident)
                rspec((D, BN)),                             # fa_t    (resident)
                rspec((T, BN)),                             # series  (resident)
                pl.BlockSpec((tm, D), lambda i: (i, 0)),    # f_o row block
                pl.BlockSpec((tm, D), lambda i: (i, 0)),    # f_a row block
                pl.BlockSpec((tm, T), lambda i: (i, 0)),    # series row block
            ],
            out_specs=pl.BlockSpec((1, 8, 128), lambda i: (i, 0, 0)),
            compiler_params=pltpu.CompilerParams(
                dimension_semantics=("parallel",),          # both v7x TensorCores usable
                vmem_limit_bytes=vmem_limit,
            ),
        )(fo_t, fa_t, st_all, f_o_pad, f_a_pad, s_pad)
        return jax.block_until_ready(out)

    # Attempt order: single-buffered residents + lane shift (fastest) -> default buffering +
    # lane shift -> MXU permutation-matrix shift (most conservative lowering).
    attempts = []
    try:
        attempts.append((pl.Buffered(1), False))
    except Exception:
        pass
    attempts.extend([(None, False), (None, True)])

    out, err = None, None
    for pmode, mxu_shift in attempts:
        try:
            out = _call(pmode, mxu_shift)
            break
        except Exception as e:   # pipeline_mode / minor-dim shift support varies by version
            err = e
    if out is None:
        raise err

    loss = jnp.sum(out[:, 0, 0]) / (M * (M - 1))
    msl = jnp.sum(out[:, 0, 1]) / (BN * BN)
    # TODO(synk): hard=True branch (gathered logits[i, B+i-1]) and normalize=True
    #             (F.normalize of the mapped features) are not implemented; default path only.
    return loss, msl


def _reference(original_feature, augmented_feature, original_series, W, bias, alpha, tau):
    B, N, K = original_feature.shape
    _, T, _ = original_series.shape
    D = W.shape[0]
    fo = (original_feature @ W.T + bias).reshape(-1, D)
    fa = (augmented_feature @ W.T + bias).reshape(-1, D)
    series = jnp.transpose(original_series, (0, 2, 1)).reshape(-1, T)
    feat = jnp.concatenate([fo, fa], axis=0)
    sim = feat @ feat.T
    L = jnp.tril(sim, -1)[:, :-1] + jnp.triu(sim, -1)[:, 1:]
    logits = -jax.nn.log_softmax(L, axis=-1)
    ss = jnp.sum(series ** 2, axis=-1)
    pd = ss[:, None] + ss[None, :] - 2.0 * series @ series.T
    pd_rep = jnp.tile(pd, (2, 2))
    soft = 2.0 * alpha * jax.nn.sigmoid(-tau * pd_rep)
    soft_nd = jnp.tril(soft, -1)[:, :-1] + jnp.triu(soft, -1)[:, 1:]
    return jnp.mean(logits * soft_nd), jnp.mean(soft)


def _run_case(key, B, N, T, K, alpha, tau, block_rows=None, use_bf16=False,
              rtol=5e-3, atol=1e-3):
    D = max(1, K // 12)                            # nn.Linear(ssl_input_dim, ssl_input_dim // 12)
    k1, k2, k3, k4, k5 = jax.random.split(key, 5)
    original_feature = jax.random.normal(k1, (B, N, K), jnp.float32)
    augmented_feature = jax.random.normal(k2, (B, N, K), jnp.float32)
    original_series = jax.random.normal(k3, (B, T, N), jnp.float32)
    augmented_series = jax.random.normal(k4, (B, T, N), jnp.float32)

    bound = 1.0 / (K ** 0.5)                       # torch-style uniform Linear init
    kw, kb = jax.random.split(k5)
    W = jax.random.uniform(kw, (D, K), jnp.float32, -bound, bound)
    bias = jax.random.uniform(kb, (D,), jnp.float32, -bound, bound)

    loss, msl = softclt_loss_sub(original_feature, augmented_feature,
                                 original_series, augmented_series,
                                 W, bias, alpha=alpha, tau=tau, block_rows=block_rows,
                                 use_bf16_matmul=use_bf16)
    loss = jax.block_until_ready(loss)
    msl = jax.block_until_ready(msl)

    ref_loss, ref_msl = _reference(original_feature, augmented_feature,
                                   original_series, W, bias, alpha, tau)
    # default tolerance (5e-3 rel) covers the approximate-reciprocal soft-label path
    assert jnp.allclose(loss, ref_loss, rtol=rtol, atol=atol), (loss, ref_loss)
    assert jnp.allclose(msl, ref_msl, rtol=rtol, atol=atol), (msl, ref_msl)


if __name__ == "__main__":
    key = jax.random.PRNGKey(0)
    k_a, k_b, k_c = jax.random.split(key, 3)
    # auto block size: B*N = 16 rows -> 2 grid steps of 8 rows (both TensorCores on v7x)
    _run_case(k_a, B=2, N=8, T=16, K=48, alpha=0.5, tau=0.05)
    # explicit block + padded case: B*N = 20 rows, block_rows=8 -> 3 steps, 4 padded rows
    _run_case(k_b, B=2, N=10, T=16, K=48, alpha=0.3, tau=1.0, block_rows=8)
    # bf16 MXU operands for the feature matmuls (native path on v6e/v7x); looser tolerance
    _run_case(k_c, B=2, N=8, T=16, K=48, alpha=0.5, tau=0.05, use_bf16=True,
              rtol=3e-2, atol=3e-2)
    print("KERNEL_OK")
</pallas_src>

<mosaic_0001>
module attributes {stable_mosaic.version = 11 : i64} {
  func.func @_softclt_row_block_kernel(%arg0: i32, %arg1: memref<4x16xf32, #tpu.memory_space<vmem>>, %arg2: memref<4x16xf32, #tpu.memory_space<vmem>>, %arg3: memref<16x16xf32, #tpu.memory_space<vmem>>, %arg4: memref<8x4xf32, #tpu.memory_space<vmem>>, %arg5: memref<8x4xf32, #tpu.memory_space<vmem>>, %arg6: memref<8x16xf32, #tpu.memory_space<vmem>>, %arg7: memref<1x8x128xf32, #tpu.memory_space<vmem>>) attributes {dimension_semantics = [#tpu.dimension_semantics<parallel>], iteration_bounds = array<i64: 2>, scalar_prefetch = 0 : i64, scratch_operands = 0 : i64, tpu.core_type = #tpu.core_type<tc>, window_params = [{pipeline_mode = #tpu.pipeline_mode<synchronous>, transform_indices = @transform_0, window_bounds = array<i64: 4, 16>}, {pipeline_mode = #tpu.pipeline_mode<synchronous>, transform_indices = @transform_1, window_bounds = array<i64: 4, 16>}, {pipeline_mode = #tpu.pipeline_mode<synchronous>, transform_indices = @transform_2, window_bounds = array<i64: 16, 16>}, {transform_indices = @transform_3, window_bounds = array<i64: 8, 4>}, {transform_indices = @transform_4, window_bounds = array<i64: 8, 4>}, {transform_indices = @transform_5, window_bounds = array<i64: 8, 16>}, {transform_indices = @transform_6, window_bounds = array<i64: 1, 8, 128>}]} {
    %c8_i32 = arith.constant 8 : i32
    %0 = arith.muli %arg0, %c8_i32 : i32
    %1 = tpu.iota {dimensions = array<i32: 0>} : vector<8x16xi32>
    %2 = tpu.iota {dimensions = array<i32: 1>} : vector<8x16xi32>
    %c0 = arith.constant 0 : index
    %c0_0 = arith.constant 0 : index
    %3 = vector.load %arg3[%c0, %c0_0] : memref<16x16xf32, #tpu.memory_space<vmem>>, vector<16x16xf32>
    %c0_1 = arith.constant 0 : index
    %c0_2 = arith.constant 0 : index
    %4 = vector.load %arg6[%c0_1, %c0_2] : memref<8x16xf32, #tpu.memory_space<vmem>>, vector<8x16xf32>
    %cst = arith.constant dense<0.000000e+00> : vector<8x16xf32>
    %5 = tpu.matmul %4, %3, %cst {dimension_numbers = #tpu.dot_dimension_numbers<[1], [0], [0], [1], [0, 0, 1, 1], [], []>} : vector<8x16xf32>, vector<16x16xf32>, vector<8x16xf32> -> vector<8x16xf32>
    %6 = arith.mulf %3, %3 : vector<16x16xf32>
    %cst_3 = arith.constant dense<0.000000e+00> : vector<16xf32>
    %7 = vector.multi_reduction <add>, %6, %cst_3 [0] : vector<16x16xf32> to vector<16xf32>
    %8 = vector.shape_cast %7 : vector<16xf32> to vector<1x16xf32>
    %9 = arith.mulf %4, %4 : vector<8x16xf32>
    %cst_4 = arith.constant dense<0.000000e+00> : vector<8xf32>
    %10 = vector.multi_reduction <add>, %9, %cst_4 [1] : vector<8x16xf32> to vector<8xf32>
    %11 = vector.shape_cast %10 : vector<8xf32> to vector<8x1xf32>
    %12 = vector.broadcast %11 : vector<8x1xf32> to vector<8x16xf32>
    %13 = vector.broadcast %8 : vector<1x16xf32> to vector<8x16xf32>
    %14 = arith.addf %12, %13 : vector<8x16xf32>
    %cst_5 = arith.constant 2.000000e+00 : f32
    %15 = vector.broadcast %cst_5 : f32 to vector<8x16xf32>
    %16 = arith.mulf %15, %5 : vector<8x16xf32>
    %17 = arith.subf %14, %16 : vector<8x16xf32>
    %cst_6 = arith.constant 5.000000e-02 : f32
    %18 = vector.broadcast %cst_6 : f32 to vector<8x16xf32>
    %19 = arith.mulf %18, %17 : vector<8x16xf32>
    %20 = math.exp %19 : vector<8x16xf32>
    %cst_7 = arith.constant 1.000000e+00 : f32
    %21 = vector.broadcast %cst_7 : f32 to vector<8x16xf32>
    %22 = arith.addf %21, %20 : vector<8x16xf32>
    %23 = tpu.reciprocal %22 {approx = true} : vector<8x16xf32> -> vector<8x16xf32>
    %cst_8 = arith.constant 1.000000e+00 : f32
    %24 = vector.broadcast %cst_8 : f32 to vector<8x16xf32>
    %25 = arith.mulf %24, %23 : vector<8x16xf32>
    %26 = vector.broadcast %0 : i32 to vector<8x16xi32>
    %27 = arith.addi %1, %26 : vector<8x16xi32>
    %c16_i32 = arith.constant 16 : i32
    %28 = vector.broadcast %c16_i32 : i32 to vector<8x16xi32>
    %29 = arith.cmpi slt, %27, %28 : vector<8x16xi32>
    %cst_9 = arith.constant 0.000000e+00 : f32
    %30 = vector.broadcast %cst_9 : f32 to vector<8x16xf32>
    %31 = arith.select %29, %25, %30 : vector<8x16xi1>, vector<8x16xf32>
    %32 = vector.shape_cast %31 : vector<8x16xf32> to vector<1x8x16xf32>
    %cst_10 = arith.constant dense<0.000000e+00> : vector<1xf32>
    %33 = vector.multi_reduction <add>, %32, %cst_10 [1, 2] : vector<1x8x16xf32> to vector<1xf32>
    %34 = vector.shape_cast %33 : vector<1xf32> to vector<1x1x1xf32>
    %35 = vector.extract %34[0, 0, 0] : f32 from vector<1x1x1xf32>
    %c0_11 = arith.constant 0 : index
    %c0_12 = arith.constant 0 : index
    %36 = vector.load %arg1[%c0_11, %c0_12] : memref<4x16xf32, #tpu.memory_space<vmem>>, vector<4x16xf32>
    %c0_13 = arith.constant 0 : index
    %c0_14 = arith.constant 0 : index
    %37 = vector.load %arg2[%c0_13, %c0_14] : memref<4x16xf32, #tpu.memory_space<vmem>>, vector<4x16xf32>
    %c0_15 = arith.constant 0 : index
    %c0_16 = arith.constant 0 : index
    %38 = vector.load %arg4[%c0_15, %c0_16] : memref<8x4xf32, #tpu.memory_space<vmem>>, vector<8x4xf32>
    %39 = vector.broadcast %0 : i32 to vector<8x16xi32>
    %40 = arith.addi %1, %39 : vector<8x16xi32>
    %cst_17 = arith.constant dense<0.000000e+00> : vector<8x16xf32>
    %41 = tpu.matmul %38, %36, %cst_17 {dimension_numbers = #tpu.dot_dimension_numbers<[1], [0], [0], [1], [0, 0, 1, 1], [], []>} : vector<8x4xf32>, vector<4x16xf32>, vector<8x16xf32> -> vector<8x16xf32>
    %cst_18 = arith.constant dense<0.000000e+00> : vector<8x16xf32>
    %42 = tpu.matmul %38, %37, %cst_18 {dimension_numbers = #tpu.dot_dimension_numbers<[1], [0], [0], [1], [0, 0, 1, 1], [], []>} : vector<8x4xf32>, vector<4x16xf32>, vector<8x16xf32> -> vector<8x16xf32>
    %43 = vector.extract_strided_slice %42 {offsets = [0, 0], sizes = [8, 1], strides = [1, 1]} : vector<8x16xf32> to vector<8x1xf32>
    %44 = vector.extract_strided_slice %41 {offsets = [0, 1], sizes = [8, 15], strides = [1, 1]} : vector<8x16xf32> to vector<8x15xf32>
    %45 = tpu.concatenate %44, %43 in 1 : vector<8x15xf32>, vector<8x1xf32> -> vector<8x16xf32>
    %46 = vector.extract_strided_slice %42 {offsets = [0, 0], sizes = [8, 1], strides = [1, 1]} : vector<8x16xf32> to vector<8x1xf32>
    %47 = vector.extract_strided_slice %42 {offsets = [0, 1], sizes = [8, 15], strides = [1, 1]} : vector<8x16xf32> to vector<8x15xf32>
    %48 = tpu.concatenate %47, %46 in 1 : vector<8x15xf32>, vector<8x1xf32> -> vector<8x16xf32>
    %49 = vector.extract_strided_slice %41 {offsets = [0, 0], sizes = [8, 1], strides = [1, 1]} : vector<8x16xf32> to vector<8x1xf32>
    %50 = vector.extract_strided_slice %41 {offsets = [0, 0], sizes = [8, 15], strides = [1, 1]} : vector<8x16xf32> to vector<8x15xf32>
    %51 = tpu.concatenate %49, %50 in 1 : vector<8x1xf32>, vector<8x15xf32> -> vector<8x16xf32>
    %52 = vector.extract_strided_slice %41 {offsets = [0, 15], sizes = [8, 1], strides = [1, 1]} : vector<8x16xf32> to vector<8x1xf32>
    %53 = vector.extract_strided_slice %42 {offsets = [0, 0], sizes = [8, 15], strides = [1, 1]} : vector<8x16xf32> to vector<8x15xf32>
    %54 = tpu.concatenate %52, %53 in 1 : vector<8x1xf32>, vector<8x15xf32> -> vector<8x16xf32>
    %55 = arith.cmpi slt, %2, %40 : vector<8x16xi32>
    %c16_i32_19 = arith.constant 16 : i32
    %56 = vector.broadcast %c16_i32_19 : i32 to vector<8x16xi32>
    %57 = arith.addi %2, %56 : vector<8x16xi32>
    %58 = arith.cmpi slt, %57, %40 : vector<8x16xi32>
    %cst_20 = arith.constant 0.000000e+00 : f32
    %59 = vector.broadcast %cst_20 : f32 to vector<8x16xf32>
    %60 = arith.select %55, %41, %59 : vector<8x16xi1>, vector<8x16xf32>
    %c2_i32 = arith.constant 2 : i32
    %61 = vector.broadcast %c2_i32 : i32 to vector<8x16xi32>
    %62 = arith.subi %40, %61 : vector<8x16xi32>
    %63 = arith.cmpi sge, %2, %62 : vector<8x16xi32>
    %cst_21 = arith.constant 0.000000e+00 : f32
    %64 = vector.broadcast %cst_21 : f32 to vector<8x16xf32>
    %65 = arith.select %63, %45, %64 : vector<8x16xi1>, vector<8x16xf32>
    %66 = arith.addf %60, %65 : vector<8x16xf32>
    %cst_22 = arith.constant 0.000000e+00 : f32
    %67 = vector.broadcast %cst_22 : f32 to vector<8x16xf32>
    %68 = arith.select %58, %42, %67 : vector<8x16xi1>, vector<8x16xf32>
    %c16_i32_23 = arith.constant 16 : i32
    %69 = vector.broadcast %c16_i32_23 : i32 to vector<8x16xi32>
    %70 = arith.addi %2, %69 : vector<8x16xi32>
    %c2_i32_24 = arith.constant 2 : i32
    %71 = vector.broadcast %c2_i32_24 : i32 to vector<8x16xi32>
    %72 = arith.subi %40, %71 : vector<8x16xi32>
    %73 = arith.cmpi sge, %70, %72 : vector<8x16xi32>
    %cst_25 = arith.constant 0.000000e+00 : f32
    %74 = vector.broadcast %cst_25 : f32 to vector<8x16xf32>
    %75 = arith.select %73, %48, %74 : vector<8x16xi1>, vector<8x16xf32>
    %76 = arith.addf %68, %75 : vector<8x16xf32>
    %c15_i32 = arith.constant 15 : i32
    %77 = vector.broadcast %c15_i32 : i32 to vector<8x16xi32>
    %78 = arith.cmpi slt, %2, %77 : vector<8x16xi32>
    %cst_26 = arith.constant -1.000000e+30 : f32
    %79 = vector.broadcast %cst_26 : f32 to vector<8x16xf32>
    %80 = arith.select %78, %76, %79 : vector<8x16xi1>, vector<8x16xf32>
    %cst_27 = arith.constant dense<0xFF800000> : vector<8xf32>
    %81 = vector.multi_reduction <maximumf>, %66, %cst_27 [1] : vector<8x16xf32> to vector<8xf32>
    %82 = vector.shape_cast %81 : vector<8xf32> to vector<8x1xf32>
    %cst_28 = arith.constant dense<0xFF800000> : vector<8xf32>
    %83 = vector.multi_reduction <maximumf>, %80, %cst_28 [1] : vector<8x16xf32> to vector<8xf32>
    %84 = vector.shape_cast %83 : vector<8xf32> to vector<8x1xf32>
    %85 = arith.maximumf %82, %84 : vector<8x1xf32>
    %86 = vector.broadcast %85 : vector<8x1xf32> to vector<8x16xf32>
    %87 = arith.subf %66, %86 : vector<8x16xf32>
    %88 = math.exp %87 : vector<8x16xf32>
    %cst_29 = arith.constant dense<0.000000e+00> : vector<8xf32>
    %89 = vector.multi_reduction <add>, %88, %cst_29 [1] : vector<8x16xf32> to vector<8xf32>
    %90 = vector.shape_cast %89 : vector<8xf32> to vector<8x1xf32>
    %91 = vector.broadcast %85 : vector<8x1xf32> to vector<8x16xf32>
    %92 = arith.subf %80, %91 : vector<8x16xf32>
    %93 = math.exp %92 : vector<8x16xf32>
    %cst_30 = arith.constant dense<0.000000e+00> : vector<8xf32>
    %94 = vector.multi_reduction <add>, %93, %cst_30 [1] : vector<8x16xf32> to vector<8xf32>
    %95 = vector.shape_cast %94 : vector<8xf32> to vector<8x1xf32>
    %96 = arith.addf %90, %95 : vector<8x1xf32>
    %97 = math.log %96 : vector<8x1xf32>
    %98 = arith.addf %85, %97 : vector<8x1xf32>
    %99 = arith.cmpi sle, %2, %40 : vector<8x16xi32>
    %cst_31 = arith.constant 0.000000e+00 : f32
    %100 = vector.broadcast %cst_31 : f32 to vector<8x16xf32>
    %101 = arith.select %99, %51, %100 : vector<8x16xi1>, vector<8x16xf32>
    %102 = arith.addf %101, %41 : vector<8x16xf32>
    %c16_i32_32 = arith.constant 16 : i32
    %103 = vector.broadcast %c16_i32_32 : i32 to vector<8x16xi32>
    %104 = arith.addi %2, %103 : vector<8x16xi32>
    %105 = arith.cmpi sle, %104, %40 : vector<8x16xi32>
    %cst_33 = arith.constant 0.000000e+00 : f32
    %106 = vector.broadcast %cst_33 : f32 to vector<8x16xf32>
    %107 = arith.select %105, %54, %106 : vector<8x16xi1>, vector<8x16xf32>
    %108 = arith.addf %107, %42 : vector<8x16xf32>
    %c1_i32 = arith.constant 1 : i32
    %109 = vector.broadcast %c1_i32 : i32 to vector<8x16xi32>
    %110 = arith.subi %40, %109 : vector<8x16xi32>
    %111 = arith.cmpi sge, %2, %110 : vector<8x16xi32>
    %c1_i32_34 = arith.constant 1 : i32
    %112 = vector.broadcast %c1_i32_34 : i32 to vector<8x16xi32>
    %113 = arith.cmpi sge, %2, %112 : vector<8x16xi32>
    %114 = arith.andi %111, %113 : vector<8x16xi1>
    %c16_i32_35 = arith.constant 16 : i32
    %115 = vector.broadcast %c16_i32_35 : i32 to vector<8x16xi32>
    %116 = arith.addi %2, %115 : vector<8x16xi32>
    %c1_i32_36 = arith.constant 1 : i32
    %117 = vector.broadcast %c1_i32_36 : i32 to vector<8x16xi32>
    %118 = arith.subi %40, %117 : vector<8x16xi32>
    %119 = arith.cmpi sge, %116, %118 : vector<8x16xi32>
    %cst_37 = arith.constant 0.000000e+00 : f32
    %120 = vector.broadcast %cst_37 : f32 to vector<8x16xf32>
    %121 = arith.select %55, %31, %120 : vector<8x16xi1>, vector<8x16xf32>
    %cst_38 = arith.constant 0.000000e+00 : f32
    %122 = vector.broadcast %cst_38 : f32 to vector<8x16xf32>
    %123 = arith.select %58, %31, %122 : vector<8x16xi1>, vector<8x16xf32>
    %cst_39 = arith.constant 0.000000e+00 : f32
    %124 = vector.broadcast %cst_39 : f32 to vector<8x16xf32>
    %125 = arith.select %114, %31, %124 : vector<8x16xi1>, vector<8x16xf32>
    %cst_40 = arith.constant 0.000000e+00 : f32
    %126 = vector.broadcast %cst_40 : f32 to vector<8x16xf32>
    %127 = arith.select %119, %31, %126 : vector<8x16xi1>, vector<8x16xf32>
    %128 = arith.addf %121, %123 : vector<8x16xf32>
    %129 = arith.addf %128, %125 : vector<8x16xf32>
    %130 = arith.addf %129, %127 : vector<8x16xf32>
    %131 = vector.broadcast %98 : vector<8x1xf32> to vector<8x16xf32>
    %132 = arith.mulf %131, %130 : vector<8x16xf32>
    %133 = arith.mulf %66, %121 : vector<8x16xf32>
    %134 = arith.subf %132, %133 : vector<8x16xf32>
    %135 = arith.mulf %76, %123 : vector<8x16xf32>
    %136 = arith.subf %134, %135 : vector<8x16xf32>
    %137 = arith.mulf %102, %125 : vector<8x16xf32>
    %138 = arith.subf %136, %137 : vector<8x16xf32>
    %139 = arith.mulf %108, %127 : vector<8x16xf32>
    %140 = arith.subf %138, %139 : vector<8x16xf32>
    %141 = vector.shape_cast %140 : vector<8x16xf32> to vector<1x8x16xf32>
    %cst_41 = arith.constant dense<0.000000e+00> : vector<1xf32>
    %142 = vector.multi_reduction <add>, %141, %cst_41 [1, 2] : vector<1x8x16xf32> to vector<1xf32>
    %143 = vector.shape_cast %142 : vector<1xf32> to vector<1x1x1xf32>
    %144 = vector.extract %143[0, 0, 0] : f32 from vector<1x1x1xf32>
    %c0_42 = arith.constant 0 : index
    %c0_43 = arith.constant 0 : index
    %145 = vector.load %arg5[%c0_42, %c0_43] : memref<8x4xf32, #tpu.memory_space<vmem>>, vector<8x4xf32>
    %c16_i32_44 = arith.constant 16 : i32
    %146 = arith.addi %0, %c16_i32_44 : i32
    %147 = vector.broadcast %146 : i32 to vector<8x16xi32>
    %148 = arith.addi %1, %147 : vector<8x16xi32>
    %cst_45 = arith.constant dense<0.000000e+00> : vector<8x16xf32>
    %149 = tpu.matmul %145, %36, %cst_45 {dimension_numbers = #tpu.dot_dimension_numbers<[1], [0], [0], [1], [0, 0, 1, 1], [], []>} : vector<8x4xf32>, vector<4x16xf32>, vector<8x16xf32> -> vector<8x16xf32>
    %cst_46 = arith.constant dense<0.000000e+00> : vector<8x16xf32>
    %150 = tpu.matmul %145, %37, %cst_46 {dimension_numbers = #tpu.dot_dimension_numbers<[1], [0], [0], [1], [0, 0, 1, 1], [], []>} : vector<8x4xf32>, vector<4x16xf32>, vector<8x16xf32> -> vector<8x16xf32>
    %151 = vector.extract_strided_slice %150 {offsets = [0, 0], sizes = [8, 1], strides = [1, 1]} : vector<8x16xf32> to vector<8x1xf32>
    %152 = vector.extract_strided_slice %149 {offsets = [0, 1], sizes = [8, 15], strides = [1, 1]} : vector<8x16xf32> to vector<8x15xf32>
    %153 = tpu.concatenate %152, %151 in 1 : vector<8x15xf32>, vector<8x1xf32> -> vector<8x16xf32>
    %154 = vector.extract_strided_slice %150 {offsets = [0, 0], sizes = [8, 1], strides = [1, 1]} : vector<8x16xf32> to vector<8x1xf32>
    %155 = vector.extract_strided_slice %150 {offsets = [0, 1], sizes = [8, 15], strides = [1, 1]} : vector<8x16xf32> to vector<8x15xf32>
    %156 = tpu.concatenate %155, %154 in 1 : vector<8x15xf32>, vector<8x1xf32> -> vector<8x16xf32>
    %157 = vector.extract_strided_slice %149 {offsets = [0, 0], sizes = [8, 1], strides = [1, 1]} : vector<8x16xf32> to vector<8x1xf32>
    %158 = vector.extract_strided_slice %149 {offsets = [0, 0], sizes = [8, 15], strides = [1, 1]} : vector<8x16xf32> to vector<8x15xf32>
    %159 = tpu.concatenate %157, %158 in 1 : vector<8x1xf32>, vector<8x15xf32> -> vector<8x16xf32>
    %160 = vector.extract_strided_slice %149 {offsets = [0, 15], sizes = [8, 1], strides = [1, 1]} : vector<8x16xf32> to vector<8x1xf32>
    %161 = vector.extract_strided_slice %150 {offsets = [0, 0], sizes = [8, 15], strides = [1, 1]} : vector<8x16xf32> to vector<8x15xf32>
    %162 = tpu.concatenate %160, %161 in 1 : vector<8x1xf32>, vector<8x15xf32> -> vector<8x16xf32>
    %163 = arith.cmpi slt, %2, %148 : vector<8x16xi32>
    %c16_i32_47 = arith.constant 16 : i32
    %164 = vector.broadcast %c16_i32_47 : i32 to vector<8x16xi32>
    %165 = arith.addi %2, %164 : vector<8x16xi32>
    %166 = arith.cmpi slt, %165, %148 : vector<8x16xi32>
    %cst_48 = arith.constant 0.000000e+00 : f32
    %167 = vector.broadcast %cst_48 : f32 to vector<8x16xf32>
    %168 = arith.select %163, %149, %167 : vector<8x16xi1>, vector<8x16xf32>
    %c2_i32_49 = arith.constant 2 : i32
    %169 = vector.broadcast %c2_i32_49 : i32 to vector<8x16xi32>
    %170 = arith.subi %148, %169 : vector<8x16xi32>
    %171 = arith.cmpi sge, %2, %170 : vector<8x16xi32>
    %cst_50 = arith.constant 0.000000e+00 : f32
    %172 = vector.broadcast %cst_50 : f32 to vector<8x16xf32>
    %173 = arith.select %171, %153, %172 : vector<8x16xi1>, vector<8x16xf32>
    %174 = arith.addf %168, %173 : vector<8x16xf32>
    %cst_51 = arith.constant 0.000000e+00 : f32
    %175 = vector.broadcast %cst_51 : f32 to vector<8x16xf32>
    %176 = arith.select %166, %150, %175 : vector<8x16xi1>, vector<8x16xf32>
    %c16_i32_52 = arith.constant 16 : i32
    %177 = vector.broadcast %c16_i32_52 : i32 to vector<8x16xi32>
    %178 = arith.addi %2, %177 : vector<8x16xi32>
    %c2_i32_53 = arith.constant 2 : i32
    %179 = vector.broadcast %c2_i32_53 : i32 to vector<8x16xi32>
    %180 = arith.subi %148, %179 : vector<8x16xi32>
    %181 = arith.cmpi sge, %178, %180 : vector<8x16xi32>
    %cst_54 = arith.constant 0.000000e+00 : f32
    %182 = vector.broadcast %cst_54 : f32 to vector<8x16xf32>
    %183 = arith.select %181, %156, %182 : vector<8x16xi1>, vector<8x16xf32>
    %184 = arith.addf %176, %183 : vector<8x16xf32>
    %c15_i32_55 = arith.constant 15 : i32
    %185 = vector.broadcast %c15_i32_55 : i32 to vector<8x16xi32>
    %186 = arith.cmpi slt, %2, %185 : vector<8x16xi32>
    %cst_56 = arith.constant -1.000000e+30 : f32
    %187 = vector.broadcast %cst_56 : f32 to vector<8x16xf32>
    %188 = arith.select %186, %184, %187 : vector<8x16xi1>, vector<8x16xf32>
    %cst_57 = arith.constant dense<0xFF800000> : vector<8xf32>
    %189 = vector.multi_reduction <maximumf>, %174, %cst_57 [1] : vector<8x16xf32> to vector<8xf32>
    %190 = vector.shape_cast %189 : vector<8xf32> to vector<8x1xf32>
    %cst_58 = arith.constant dense<0xFF800000> : vector<8xf32>
    %191 = vector.multi_reduction <maximumf>, %188, %cst_58 [1] : vector<8x16xf32> to vector<8xf32>
    %192 = vector.shape_cast %191 : vector<8xf32> to vector<8x1xf32>
    %193 = arith.maximumf %190, %192 : vector<8x1xf32>
    %194 = vector.broadcast %193 : vector<8x1xf32> to vector<8x16xf32>
    %195 = arith.subf %174, %194 : vector<8x16xf32>
    %196 = math.exp %195 : vector<8x16xf32>
    %cst_59 = arith.constant dense<0.000000e+00> : vector<8xf32>
    %197 = vector.multi_reduction <add>, %196, %cst_59 [1] : vector<8x16xf32> to vector<8xf32>
    %198 = vector.shape_cast %197 : vector<8xf32> to vector<8x1xf32>
    %199 = vector.broadcast %193 : vector<8x1xf32> to vector<8x16xf32>
    %200 = arith.subf %188, %199 : vector<8x16xf32>
    %201 = math.exp %200 : vector<8x16xf32>
    %cst_60 = arith.constant dense<0.000000e+00> : vector<8xf32>
    %202 = vector.multi_reduction <add>, %201, %cst_60 [1] : vector<8x16xf32> to vector<8xf32>
    %203 = vector.shape_cast %202 : vector<8xf32> to vector<8x1xf32>
    %204 = arith.addf %198, %203 : vector<8x1xf32>
    %205 = math.log %204 : vector<8x1xf32>
    %206 = arith.addf %193, %205 : vector<8x1xf32>
    %207 = arith.cmpi sle, %2, %148 : vector<8x16xi32>
    %cst_61 = arith.constant 0.000000e+00 : f32
    %208 = vector.broadcast %cst_61 : f32 to vector<8x16xf32>
    %209 = arith.select %207, %159, %208 : vector<8x16xi1>, vector<8x16xf32>
    %210 = arith.addf %209, %149 : vector<8x16xf32>
    %c16_i32_62 = arith.constant 16 : i32
    %211 = vector.broadcast %c16_i32_62 : i32 to vector<8x16xi32>
    %212 = arith.addi %2, %211 : vector<8x16xi32>
    %213 = arith.cmpi sle, %212, %148 : vector<8x16xi32>
    %cst_63 = arith.constant 0.000000e+00 : f32
    %214 = vector.broadcast %cst_63 : f32 to vector<8x16xf32>
    %215 = arith.select %213, %162, %214 : vector<8x16xi1>, vector<8x16xf32>
    %216 = arith.addf %215, %150 : vector<8x16xf32>
    %c1_i32_64 = arith.constant 1 : i32
    %217 = vector.broadcast %c1_i32_64 : i32 to vector<8x16xi32>
    %218 = arith.subi %148, %217 : vector<8x16xi32>
    %219 = arith.cmpi sge, %2, %218 : vector<8x16xi32>
    %c1_i32_65 = arith.constant 1 : i32
    %220 = vector.broadcast %c1_i32_65 : i32 to vector<8x16xi32>
    %221 = arith.cmpi sge, %2, %220 : vector<8x16xi32>
    %222 = arith.andi %219, %221 : vector<8x16xi1>
    %c16_i32_66 = arith.constant 16 : i32
    %223 = vector.broadcast %c16_i32_66 : i32 to vector<8x16xi32>
    %224 = arith.addi %2, %223 : vector<8x16xi32>
    %c1_i32_67 = arith.constant 1 : i32
    %225 = vector.broadcast %c1_i32_67 : i32 to vector<8x16xi32>
    %226 = arith.subi %148, %225 : vector<8x16xi32>
    %227 = arith.cmpi sge, %224, %226 : vector<8x16xi32>
    %cst_68 = arith.constant 0.000000e+00 : f32
    %228 = vector.broadcast %cst_68 : f32 to vector<8x16xf32>
    %229 = arith.select %163, %31, %228 : vector<8x16xi1>, vector<8x16xf32>
    %cst_69 = arith.constant 0.000000e+00 : f32
    %230 = vector.broadcast %cst_69 : f32 to vector<8x16xf32>
    %231 = arith.select %166, %31, %230 : vector<8x16xi1>, vector<8x16xf32>
    %cst_70 = arith.constant 0.000000e+00 : f32
    %232 = vector.broadcast %cst_70 : f32 to vector<8x16xf32>
    %233 = arith.select %222, %31, %232 : vector<8x16xi1>, vector<8x16xf32>
    %cst_71 = arith.constant 0.000000e+00 : f32
    %234 = vector.broadcast %cst_71 : f32 to vector<8x16xf32>
    %235 = arith.select %227, %31, %234 : vector<8x16xi1>, vector<8x16xf32>
    %236 = arith.addf %229, %231 : vector<8x16xf32>
    %237 = arith.addf %236, %233 : vector<8x16xf32>
    %238 = arith.addf %237, %235 : vector<8x16xf32>
    %239 = vector.broadcast %206 : vector<8x1xf32> to vector<8x16xf32>
    %240 = arith.mulf %239, %238 : vector<8x16xf32>
    %241 = arith.mulf %174, %229 : vector<8x16xf32>
    %242 = arith.subf %240, %241 : vector<8x16xf32>
    %243 = arith.mulf %184, %231 : vector<8x16xf32>
    %244 = arith.subf %242, %243 : vector<8x16xf32>
    %245 = arith.mulf %210, %233 : vector<8x16xf32>
    %246 = arith.subf %244, %245 : vector<8x16xf32>
    %247 = arith.mulf %216, %235 : vector<8x16xf32>
    %248 = arith.subf %246, %247 : vector<8x16xf32>
    %249 = vector.shape_cast %248 : vector<8x16xf32> to vector<1x8x16xf32>
    %cst_72 = arith.constant dense<0.000000e+00> : vector<1xf32>
    %250 = vector.multi_reduction <add>, %249, %cst_72 [1, 2] : vector<1x8x16xf32> to vector<1xf32>
    %251 = vector.shape_cast %250 : vector<1xf32> to vector<1x1x1xf32>
    %252 = vector.extract %251[0, 0, 0] : f32 from vector<1x1x1xf32>
    %253 = arith.addf %144, %252 : f32
    %254 = tpu.iota {dimensions = array<i32: 0>} : vector<8x128xi32>
    %255 = tpu.iota {dimensions = array<i32: 1>} : vector<8x128xi32>
    %c0_i32 = arith.constant 0 : i32
    %256 = vector.broadcast %c0_i32 : i32 to vector<8x128xi32>
    %257 = arith.cmpi eq, %254, %256 : vector<8x128xi32>
    %c0_i32_73 = arith.constant 0 : i32
    %258 = vector.broadcast %c0_i32_73 : i32 to vector<8x128xi32>
    %259 = arith.cmpi eq, %255, %258 : vector<8x128xi32>
    %260 = arith.andi %257, %259 : vector<8x128xi1>
    %c0_i32_74 = arith.constant 0 : i32
    %261 = vector.broadcast %c0_i32_74 : i32 to vector<8x128xi32>
    %262 = arith.cmpi eq, %254, %261 : vector<8x128xi32>
    %c1_i32_75 = arith.constant 1 : i32
    %263 = vector.broadcast %c1_i32_75 : i32 to vector<8x128xi32>
    %264 = arith.cmpi eq, %255, %263 : vector<8x128xi32>
    %265 = arith.andi %262, %264 : vector<8x128xi1>
    %cst_76 = arith.constant 0.000000e+00 : f32
    %266 = vector.broadcast %35 : f32 to vector<8x128xf32>
    %267 = vector.broadcast %cst_76 : f32 to vector<8x128xf32>
    %268 = arith.select %265, %266, %267 : vector<8x128xi1>, vector<8x128xf32>
    %269 = vector.broadcast %253 : f32 to vector<8x128xf32>
    %270 = arith.select %260, %269, %268 : vector<8x128xi1>, vector<8x128xf32>
    %271 = vector.shape_cast %270 : vector<8x128xf32> to vector<1x8x128xf32>
    %c0_77 = arith.constant 0 : index
    %c0_78 = arith.constant 0 : index
    %c0_79 = arith.constant 0 : index
    %272 = vector.load %arg7[%c0_77, %c0_78, %c0_79] : memref<1x8x128xf32, #tpu.memory_space<vmem>>, vector<1x8x128xf32>
    tpu.vector_store %arg7[%c0_77, %c0_78, %c0_79], %271 {strides = array<i32>} : memref<1x8x128xf32, #tpu.memory_space<vmem>>, vector<1x8x128xf32>,
    return
  }
  func.func @transform_0(%arg0: i32) -> (i32, i32) {
    %c0_i32 = arith.constant 0 : i32
    %c0_i32_0 = arith.constant 0 : i32
    %c0_i32_1 = arith.constant 0 : i32
    return %c0_i32, %c0_i32_0 : i32, i32
  }
  func.func @transform_1(%arg0: i32) -> (i32, i32) {
    %c0_i32 = arith.constant 0 : i32
    %c0_i32_0 = arith.constant 0 : i32
    %c0_i32_1 = arith.constant 0 : i32
    return %c0_i32, %c0_i32_0 : i32, i32
  }
  func.func @transform_2(%arg0: i32) -> (i32, i32) {
    %c0_i32 = arith.constant 0 : i32
    %c0_i32_0 = arith.constant 0 : i32
    %c0_i32_1 = arith.constant 0 : i32
    return %c0_i32, %c0_i32_0 : i32, i32
  }
  func.func @transform_3(%arg0: i32) -> (i32, i32) {
    %c0_i32 = arith.constant 0 : i32
    %c0_i32_0 = arith.constant 0 : i32
    return %arg0, %c0_i32 : i32, i32
  }
  func.func @transform_4(%arg0: i32) -> (i32, i32) {
    %c0_i32 = arith.constant 0 : i32
    %c0_i32_0 = arith.constant 0 : i32
    return %arg0, %c0_i32 : i32, i32
  }
  func.func @transform_5(%arg0: i32) -> (i32, i32) {
    %c0_i32 = arith.constant 0 : i32
    %c0_i32_0 = arith.constant 0 : i32
    return %arg0, %c0_i32 : i32, i32
  }
  func.func @transform_6(%arg0: i32) -> (i32, i32, i32) {
    %c0_i32 = arith.constant 0 : i32
    %c0_i32_0 = arith.constant 0 : i32
    %c0_i32_1 = arith.constant 0 : i32
    return %arg0, %c0_i32, %c0_i32_0 : i32, i32, i32
  }
}

module attributes {stable_mosaic.version = 11 : i64} {
  func.func @_softclt_row_block_kernel(%arg0: i32, %arg1: memref<4x16xf32, #tpu.memory_space<vmem>>, %arg2: memref<4x16xf32, #tpu.memory_space<vmem>>, %arg3: memref<16x16xf32, #tpu.memory_space<vmem>>, %arg4: memref<8x4xf32, #tpu.memory_space<vmem>>, %arg5: memref<8x4xf32, #tpu.memory_space<vmem>>, %arg6: memref<8x16xf32, #tpu.memory_space<vmem>>, %arg7: memref<1x8x128xf32, #tpu.memory_space<vmem>>) attributes {dimension_semantics = [#tpu.dimension_semantics<parallel>], iteration_bounds = array<i64: 2>, scalar_prefetch = 0 : i64, scratch_operands = 0 : i64, tpu.core_type = #tpu.core_type<tc>, window_params = [{pipeline_mode = #tpu.pipeline_mode<synchronous>, transform_indices = @transform_0, window_bounds = array<i64: 4, 16>}, {pipeline_mode = #tpu.pipeline_mode<synchronous>, transform_indices = @transform_1, window_bounds = array<i64: 4, 16>}, {pipeline_mode = #tpu.pipeline_mode<synchronous>, transform_indices = @transform_2, window_bounds = array<i64: 16, 16>}, {transform_indices = @transform_3, window_bounds = array<i64: 8, 4>}, {transform_indices = @transform_4, window_bounds = array<i64: 8, 4>}, {transform_indices = @transform_5, window_bounds = array<i64: 8, 16>}, {transform_indices = @transform_6, window_bounds = array<i64: 1, 8, 128>}]} {
    %c8_i32 = arith.constant 8 : i32
    %0 = arith.muli %arg0, %c8_i32 : i32
    %1 = tpu.iota {dimensions = array<i32: 0>} : vector<8x16xi32>
    %2 = tpu.iota {dimensions = array<i32: 1>} : vector<8x16xi32>
    %c0 = arith.constant 0 : index
    %c0_0 = arith.constant 0 : index
    %3 = vector.load %arg3[%c0, %c0_0] : memref<16x16xf32, #tpu.memory_space<vmem>>, vector<16x16xf32>
    %c0_1 = arith.constant 0 : index
    %c0_2 = arith.constant 0 : index
    %4 = vector.load %arg6[%c0_1, %c0_2] : memref<8x16xf32, #tpu.memory_space<vmem>>, vector<8x16xf32>
    %cst = arith.constant dense<0.000000e+00> : vector<8x16xf32>
    %5 = tpu.matmul %4, %3, %cst {dimension_numbers = #tpu.dot_dimension_numbers<[1], [0], [0], [1], [0, 0, 1, 1], [], []>} : vector<8x16xf32>, vector<16x16xf32>, vector<8x16xf32> -> vector<8x16xf32>
    %6 = arith.mulf %3, %3 : vector<16x16xf32>
    %cst_3 = arith.constant dense<0.000000e+00> : vector<16xf32>
    %7 = vector.multi_reduction <add>, %6, %cst_3 [0] : vector<16x16xf32> to vector<16xf32>
    %8 = vector.shape_cast %7 : vector<16xf32> to vector<1x16xf32>
    %9 = arith.mulf %4, %4 : vector<8x16xf32>
    %cst_4 = arith.constant dense<0.000000e+00> : vector<8xf32>
    %10 = vector.multi_reduction <add>, %9, %cst_4 [1] : vector<8x16xf32> to vector<8xf32>
    %11 = vector.shape_cast %10 : vector<8xf32> to vector<8x1xf32>
    %12 = vector.broadcast %11 : vector<8x1xf32> to vector<8x16xf32>
    %13 = vector.broadcast %8 : vector<1x16xf32> to vector<8x16xf32>
    %14 = arith.addf %12, %13 : vector<8x16xf32>
    %cst_5 = arith.constant 2.000000e+00 : f32
    %15 = vector.broadcast %cst_5 : f32 to vector<8x16xf32>
    %16 = arith.mulf %15, %5 : vector<8x16xf32>
    %17 = arith.subf %14, %16 : vector<8x16xf32>
    %cst_6 = arith.constant 5.000000e-02 : f32
    %18 = vector.broadcast %cst_6 : f32 to vector<8x16xf32>
    %19 = arith.mulf %18, %17 : vector<8x16xf32>
    %20 = math.exp %19 : vector<8x16xf32>
    %cst_7 = arith.constant 1.000000e+00 : f32
    %21 = vector.broadcast %cst_7 : f32 to vector<8x16xf32>
    %22 = arith.addf %21, %20 : vector<8x16xf32>
    %23 = tpu.reciprocal %22 {approx = true} : vector<8x16xf32> -> vector<8x16xf32>
    %cst_8 = arith.constant 1.000000e+00 : f32
    %24 = vector.broadcast %cst_8 : f32 to vector<8x16xf32>
    %25 = arith.mulf %24, %23 : vector<8x16xf32>
    %26 = vector.broadcast %0 : i32 to vector<8x16xi32>
    %27 = arith.addi %1, %26 : vector<8x16xi32>
    %c16_i32 = arith.constant 16 : i32
    %28 = vector.broadcast %c16_i32 : i32 to vector<8x16xi32>
    %29 = arith.cmpi slt, %27, %28 : vector<8x16xi32>
    %cst_9 = arith.constant 0.000000e+00 : f32
    %30 = vector.broadcast %cst_9 : f32 to vector<8x16xf32>
    %31 = arith.select %29, %25, %30 : vector<8x16xi1>, vector<8x16xf32>
    %32 = vector.shape_cast %31 : vector<8x16xf32> to vector<1x8x16xf32>
    %cst_10 = arith.constant dense<0.000000e+00> : vector<1xf32>
    %33 = vector.multi_reduction <add>, %32, %cst_10 [1, 2] : vector<1x8x16xf32> to vector<1xf32>
    %34 = vector.shape_cast %33 : vector<1xf32> to vector<1x1x1xf32>
    %35 = vector.extract %34[0, 0, 0] : f32 from vector<1x1x1xf32>
    %c0_11 = arith.constant 0 : index
    %c0_12 = arith.constant 0 : index
    %36 = vector.load %arg1[%c0_11, %c0_12] : memref<4x16xf32, #tpu.memory_space<vmem>>, vector<4x16xf32>
    %c0_13 = arith.constant 0 : index
    %c0_14 = arith.constant 0 : index
    %37 = vector.load %arg2[%c0_13, %c0_14] : memref<4x16xf32, #tpu.memory_space<vmem>>, vector<4x16xf32>
    %c0_15 = arith.constant 0 : index
    %c0_16 = arith.constant 0 : index
    %38 = vector.load %arg4[%c0_15, %c0_16] : memref<8x4xf32, #tpu.memory_space<vmem>>, vector<8x4xf32>
    %39 = vector.broadcast %0 : i32 to vector<8x16xi32>
    %40 = arith.addi %1, %39 : vector<8x16xi32>
    %cst_17 = arith.constant dense<0.000000e+00> : vector<8x16xf32>
    %41 = tpu.matmul %38, %36, %cst_17 {dimension_numbers = #tpu.dot_dimension_numbers<[1], [0], [0], [1], [0, 0, 1, 1], [], []>} : vector<8x4xf32>, vector<4x16xf32>, vector<8x16xf32> -> vector<8x16xf32>
    %cst_18 = arith.constant dense<0.000000e+00> : vector<8x16xf32>
    %42 = tpu.matmul %38, %37, %cst_18 {dimension_numbers = #tpu.dot_dimension_numbers<[1], [0], [0], [1], [0, 0, 1, 1], [], []>} : vector<8x4xf32>, vector<4x16xf32>, vector<8x16xf32> -> vector<8x16xf32>
    %43 = vector.extract_strided_slice %42 {offsets = [0, 0], sizes = [8, 1], strides = [1, 1]} : vector<8x16xf32> to vector<8x1xf32>
    %44 = vector.extract_strided_slice %41 {offsets = [0, 1], sizes = [8, 15], strides = [1, 1]} : vector<8x16xf32> to vector<8x15xf32>
    %45 = tpu.concatenate %44, %43 in 1 : vector<8x15xf32>, vector<8x1xf32> -> vector<8x16xf32>
    %46 = vector.extract_strided_slice %42 {offsets = [0, 0], sizes = [8, 1], strides = [1, 1]} : vector<8x16xf32> to vector<8x1xf32>
    %47 = vector.extract_strided_slice %42 {offsets = [0, 1], sizes = [8, 15], strides = [1, 1]} : vector<8x16xf32> to vector<8x15xf32>
    %48 = tpu.concatenate %47, %46 in 1 : vector<8x15xf32>, vector<8x1xf32> -> vector<8x16xf32>
    %49 = vector.extract_strided_slice %41 {offsets = [0, 0], sizes = [8, 1], strides = [1, 1]} : vector<8x16xf32> to vector<8x1xf32>
    %50 = vector.extract_strided_slice %41 {offsets = [0, 0], sizes = [8, 15], strides = [1, 1]} : vector<8x16xf32> to vector<8x15xf32>
    %51 = tpu.concatenate %49, %50 in 1 : vector<8x1xf32>, vector<8x15xf32> -> vector<8x16xf32>
    %52 = vector.extract_strided_slice %41 {offsets = [0, 15], sizes = [8, 1], strides = [1, 1]} : vector<8x16xf32> to vector<8x1xf32>
    %53 = vector.extract_strided_slice %42 {offsets = [0, 0], sizes = [8, 15], strides = [1, 1]} : vector<8x16xf32> to vector<8x15xf32>
    %54 = tpu.concatenate %52, %53 in 1 : vector<8x1xf32>, vector<8x15xf32> -> vector<8x16xf32>
    %55 = arith.cmpi slt, %2, %40 : vector<8x16xi32>
    %c16_i32_19 = arith.constant 16 : i32
    %56 = vector.broadcast %c16_i32_19 : i32 to vector<8x16xi32>
    %57 = arith.addi %2, %56 : vector<8x16xi32>
    %58 = arith.cmpi slt, %57, %40 : vector<8x16xi32>
    %cst_20 = arith.constant 0.000000e+00 : f32
    %59 = vector.broadcast %cst_20 : f32 to vector<8x16xf32>
    %60 = arith.select %55, %41, %59 : vector<8x16xi1>, vector<8x16xf32>
    %c2_i32 = arith.constant 2 : i32
    %61 = vector.broadcast %c2_i32 : i32 to vector<8x16xi32>
    %62 = arith.subi %40, %61 : vector<8x16xi32>
    %63 = arith.cmpi sge, %2, %62 : vector<8x16xi32>
    %cst_21 = arith.constant 0.000000e+00 : f32
    %64 = vector.broadcast %cst_21 : f32 to vector<8x16xf32>
    %65 = arith.select %63, %45, %64 : vector<8x16xi1>, vector<8x16xf32>
    %66 = arith.addf %60, %65 : vector<8x16xf32>
    %cst_22 = arith.constant 0.000000e+00 : f32
    %67 = vector.broadcast %cst_22 : f32 to vector<8x16xf32>
    %68 = arith.select %58, %42, %67 : vector<8x16xi1>, vector<8x16xf32>
    %c16_i32_23 = arith.constant 16 : i32
    %69 = vector.broadcast %c16_i32_23 : i32 to vector<8x16xi32>
    %70 = arith.addi %2, %69 : vector<8x16xi32>
    %c2_i32_24 = arith.constant 2 : i32
    %71 = vector.broadcast %c2_i32_24 : i32 to vector<8x16xi32>
    %72 = arith.subi %40, %71 : vector<8x16xi32>
    %73 = arith.cmpi sge, %70, %72 : vector<8x16xi32>
    %cst_25 = arith.constant 0.000000e+00 : f32
    %74 = vector.broadcast %cst_25 : f32 to vector<8x16xf32>
    %75 = arith.select %73, %48, %74 : vector<8x16xi1>, vector<8x16xf32>
    %76 = arith.addf %68, %75 : vector<8x16xf32>
    %c15_i32 = arith.constant 15 : i32
    %77 = vector.broadcast %c15_i32 : i32 to vector<8x16xi32>
    %78 = arith.cmpi slt, %2, %77 : vector<8x16xi32>
    %cst_26 = arith.constant -1.000000e+30 : f32
    %79 = vector.broadcast %cst_26 : f32 to vector<8x16xf32>
    %80 = arith.select %78, %76, %79 : vector<8x16xi1>, vector<8x16xf32>
    %cst_27 = arith.constant dense<0xFF800000> : vector<8xf32>
    %81 = vector.multi_reduction <maximumf>, %66, %cst_27 [1] : vector<8x16xf32> to vector<8xf32>
    %82 = vector.shape_cast %81 : vector<8xf32> to vector<8x1xf32>
    %cst_28 = arith.constant dense<0xFF800000> : vector<8xf32>
    %83 = vector.multi_reduction <maximumf>, %80, %cst_28 [1] : vector<8x16xf32> to vector<8xf32>
    %84 = vector.shape_cast %83 : vector<8xf32> to vector<8x1xf32>
    %85 = arith.maximumf %82, %84 : vector<8x1xf32>
    %86 = vector.broadcast %85 : vector<8x1xf32> to vector<8x16xf32>
    %87 = arith.subf %66, %86 : vector<8x16xf32>
    %88 = math.exp %87 : vector<8x16xf32>
    %cst_29 = arith.constant dense<0.000000e+00> : vector<8xf32>
    %89 = vector.multi_reduction <add>, %88, %cst_29 [1] : vector<8x16xf32> to vector<8xf32>
    %90 = vector.shape_cast %89 : vector<8xf32> to vector<8x1xf32>
    %91 = vector.broadcast %85 : vector<8x1xf32> to vector<8x16xf32>
    %92 = arith.subf %80, %91 : vector<8x16xf32>
    %93 = math.exp %92 : vector<8x16xf32>
    %cst_30 = arith.constant dense<0.000000e+00> : vector<8xf32>
    %94 = vector.multi_reduction <add>, %93, %cst_30 [1] : vector<8x16xf32> to vector<8xf32>
    %95 = vector.shape_cast %94 : vector<8xf32> to vector<8x1xf32>
    %96 = arith.addf %90, %95 : vector<8x1xf32>
    %97 = math.log %96 : vector<8x1xf32>
    %98 = arith.addf %85, %97 : vector<8x1xf32>
    %99 = arith.cmpi sle, %2, %40 : vector<8x16xi32>
    %cst_31 = arith.constant 0.000000e+00 : f32
    %100 = vector.broadcast %cst_31 : f32 to vector<8x16xf32>
    %101 = arith.select %99, %51, %100 : vector<8x16xi1>, vector<8x16xf32>
    %102 = arith.addf %101, %41 : vector<8x16xf32>
    %c16_i32_32 = arith.constant 16 : i32
    %103 = vector.broadcast %c16_i32_32 : i32 to vector<8x16xi32>
    %104 = arith.addi %2, %103 : vector<8x16xi32>
    %105 = arith.cmpi sle, %104, %40 : vector<8x16xi32>
    %cst_33 = arith.constant 0.000000e+00 : f32
    %106 = vector.broadcast %cst_33 : f32 to vector<8x16xf32>
    %107 = arith.select %105, %54, %106 : vector<8x16xi1>, vector<8x16xf32>
    %108 = arith.addf %107, %42 : vector<8x16xf32>
    %c1_i32 = arith.constant 1 : i32
    %109 = vector.broadcast %c1_i32 : i32 to vector<8x16xi32>
    %110 = arith.subi %40, %109 : vector<8x16xi32>
    %111 = arith.cmpi sge, %2, %110 : vector<8x16xi32>
    %c1_i32_34 = arith.constant 1 : i32
    %112 = vector.broadcast %c1_i32_34 : i32 to vector<8x16xi32>
    %113 = arith.cmpi sge, %2, %112 : vector<8x16xi32>
    %114 = arith.andi %111, %113 : vector<8x16xi1>
    %c16_i32_35 = arith.constant 16 : i32
    %115 = vector.broadcast %c16_i32_35 : i32 to vector<8x16xi32>
    %116 = arith.addi %2, %115 : vector<8x16xi32>
    %c1_i32_36 = arith.constant 1 : i32
    %117 = vector.broadcast %c1_i32_36 : i32 to vector<8x16xi32>
    %118 = arith.subi %40, %117 : vector<8x16xi32>
    %119 = arith.cmpi sge, %116, %118 : vector<8x16xi32>
    %cst_37 = arith.constant 0.000000e+00 : f32
    %120 = vector.broadcast %cst_37 : f32 to vector<8x16xf32>
    %121 = arith.select %55, %31, %120 : vector<8x16xi1>, vector<8x16xf32>
    %cst_38 = arith.constant 0.000000e+00 : f32
    %122 = vector.broadcast %cst_38 : f32 to vector<8x16xf32>
    %123 = arith.select %58, %31, %122 : vector<8x16xi1>, vector<8x16xf32>
    %cst_39 = arith.constant 0.000000e+00 : f32
    %124 = vector.broadcast %cst_39 : f32 to vector<8x16xf32>
    %125 = arith.select %114, %31, %124 : vector<8x16xi1>, vector<8x16xf32>
    %cst_40 = arith.constant 0.000000e+00 : f32
    %126 = vector.broadcast %cst_40 : f32 to vector<8x16xf32>
    %127 = arith.select %119, %31, %126 : vector<8x16xi1>, vector<8x16xf32>
    %128 = arith.addf %121, %123 : vector<8x16xf32>
    %129 = arith.addf %128, %125 : vector<8x16xf32>
    %130 = arith.addf %129, %127 : vector<8x16xf32>
    %131 = vector.broadcast %98 : vector<8x1xf32> to vector<8x16xf32>
    %132 = arith.mulf %131, %130 : vector<8x16xf32>
    %133 = arith.mulf %66, %121 : vector<8x16xf32>
    %134 = arith.subf %132, %133 : vector<8x16xf32>
    %135 = arith.mulf %76, %123 : vector<8x16xf32>
    %136 = arith.subf %134, %135 : vector<8x16xf32>
    %137 = arith.mulf %102, %125 : vector<8x16xf32>
    %138 = arith.subf %136, %137 : vector<8x16xf32>
    %139 = arith.mulf %108, %127 : vector<8x16xf32>
    %140 = arith.subf %138, %139 : vector<8x16xf32>
    %141 = vector.shape_cast %140 : vector<8x16xf32> to vector<1x8x16xf32>
    %cst_41 = arith.constant dense<0.000000e+00> : vector<1xf32>
    %142 = vector.multi_reduction <add>, %141, %cst_41 [1, 2] : vector<1x8x16xf32> to vector<1xf32>
    %143 = vector.shape_cast %142 : vector<1xf32> to vector<1x1x1xf32>
    %144 = vector.extract %143[0, 0, 0] : f32 from vector<1x1x1xf32>
    %c0_42 = arith.constant 0 : index
    %c0_43 = arith.constant 0 : index
    %145 = vector.load %arg5[%c0_42, %c0_43] : memref<8x4xf32, #tpu.memory_space<vmem>>, vector<8x4xf32>
    %c16_i32_44 = arith.constant 16 : i32
    %146 = arith.addi %0, %c16_i32_44 : i32
    %147 = vector.broadcast %146 : i32 to vector<8x16xi32>
    %148 = arith.addi %1, %147 : vector<8x16xi32>
    %cst_45 = arith.constant dense<0.000000e+00> : vector<8x16xf32>
    %149 = tpu.matmul %145, %36, %cst_45 {dimension_numbers = #tpu.dot_dimension_numbers<[1], [0], [0], [1], [0, 0, 1, 1], [], []>} : vector<8x4xf32>, vector<4x16xf32>, vector<8x16xf32> -> vector<8x16xf32>
    %cst_46 = arith.constant dense<0.000000e+00> : vector<8x16xf32>
    %150 = tpu.matmul %145, %37, %cst_46 {dimension_numbers = #tpu.dot_dimension_numbers<[1], [0], [0], [1], [0, 0, 1, 1], [], []>} : vector<8x4xf32>, vector<4x16xf32>, vector<8x16xf32> -> vector<8x16xf32>
    %151 = vector.extract_strided_slice %150 {offsets = [0, 0], sizes = [8, 1], strides = [1, 1]} : vector<8x16xf32> to vector<8x1xf32>
    %152 = vector.extract_strided_slice %149 {offsets = [0, 1], sizes = [8, 15], strides = [1, 1]} : vector<8x16xf32> to vector<8x15xf32>
    %153 = tpu.concatenate %152, %151 in 1 : vector<8x15xf32>, vector<8x1xf32> -> vector<8x16xf32>
    %154 = vector.extract_strided_slice %150 {offsets = [0, 0], sizes = [8, 1], strides = [1, 1]} : vector<8x16xf32> to vector<8x1xf32>
    %155 = vector.extract_strided_slice %150 {offsets = [0, 1], sizes = [8, 15], strides = [1, 1]} : vector<8x16xf32> to vector<8x15xf32>
    %156 = tpu.concatenate %155, %154 in 1 : vector<8x15xf32>, vector<8x1xf32> -> vector<8x16xf32>
    %157 = vector.extract_strided_slice %149 {offsets = [0, 0], sizes = [8, 1], strides = [1, 1]} : vector<8x16xf32> to vector<8x1xf32>
    %158 = vector.extract_strided_slice %149 {offsets = [0, 0], sizes = [8, 15], strides = [1, 1]} : vector<8x16xf32> to vector<8x15xf32>
    %159 = tpu.concatenate %157, %158 in 1 : vector<8x1xf32>, vector<8x15xf32> -> vector<8x16xf32>
    %160 = vector.extract_strided_slice %149 {offsets = [0, 15], sizes = [8, 1], strides = [1, 1]} : vector<8x16xf32> to vector<8x1xf32>
    %161 = vector.extract_strided_slice %150 {offsets = [0, 0], sizes = [8, 15], strides = [1, 1]} : vector<8x16xf32> to vector<8x15xf32>
    %162 = tpu.concatenate %160, %161 in 1 : vector<8x1xf32>, vector<8x15xf32> -> vector<8x16xf32>
    %163 = arith.cmpi slt, %2, %148 : vector<8x16xi32>
    %c16_i32_47 = arith.constant 16 : i32
    %164 = vector.broadcast %c16_i32_47 : i32 to vector<8x16xi32>
    %165 = arith.addi %2, %164 : vector<8x16xi32>
    %166 = arith.cmpi slt, %165, %148 : vector<8x16xi32>
    %cst_48 = arith.constant 0.000000e+00 : f32
    %167 = vector.broadcast %cst_48 : f32 to vector<8x16xf32>
    %168 = arith.select %163, %149, %167 : vector<8x16xi1>, vector<8x16xf32>
    %c2_i32_49 = arith.constant 2 : i32
    %169 = vector.broadcast %c2_i32_49 : i32 to vector<8x16xi32>
    %170 = arith.subi %148, %169 : vector<8x16xi32>
    %171 = arith.cmpi sge, %2, %170 : vector<8x16xi32>
    %cst_50 = arith.constant 0.000000e+00 : f32
    %172 = vector.broadcast %cst_50 : f32 to vector<8x16xf32>
    %173 = arith.select %171, %153, %172 : vector<8x16xi1>, vector<8x16xf32>
    %174 = arith.addf %168, %173 : vector<8x16xf32>
    %cst_51 = arith.constant 0.000000e+00 : f32
    %175 = vector.broadcast %cst_51 : f32 to vector<8x16xf32>
    %176 = arith.select %166, %150, %175 : vector<8x16xi1>, vector<8x16xf32>
    %c16_i32_52 = arith.constant 16 : i32
    %177 = vector.broadcast %c16_i32_52 : i32 to vector<8x16xi32>
    %178 = arith.addi %2, %177 : vector<8x16xi32>
    %c2_i32_53 = arith.constant 2 : i32
    %179 = vector.broadcast %c2_i32_53 : i32 to vector<8x16xi32>
    %180 = arith.subi %148, %179 : vector<8x16xi32>
    %181 = arith.cmpi sge, %178, %180 : vector<8x16xi32>
    %cst_54 = arith.constant 0.000000e+00 : f32
    %182 = vector.broadcast %cst_54 : f32 to vector<8x16xf32>
    %183 = arith.select %181, %156, %182 : vector<8x16xi1>, vector<8x16xf32>
    %184 = arith.addf %176, %183 : vector<8x16xf32>
    %c15_i32_55 = arith.constant 15 : i32
    %185 = vector.broadcast %c15_i32_55 : i32 to vector<8x16xi32>
    %186 = arith.cmpi slt, %2, %185 : vector<8x16xi32>
    %cst_56 = arith.constant -1.000000e+30 : f32
    %187 = vector.broadcast %cst_56 : f32 to vector<8x16xf32>
    %188 = arith.select %186, %184, %187 : vector<8x16xi1>, vector<8x16xf32>
    %cst_57 = arith.constant dense<0xFF800000> : vector<8xf32>
    %189 = vector.multi_reduction <maximumf>, %174, %cst_57 [1] : vector<8x16xf32> to vector<8xf32>
    %190 = vector.shape_cast %189 : vector<8xf32> to vector<8x1xf32>
    %cst_58 = arith.constant dense<0xFF800000> : vector<8xf32>
    %191 = vector.multi_reduction <maximumf>, %188, %cst_58 [1] : vector<8x16xf32> to vector<8xf32>
    %192 = vector.shape_cast %191 : vector<8xf32> to vector<8x1xf32>
    %193 = arith.maximumf %190, %192 : vector<8x1xf32>
    %194 = vector.broadcast %193 : vector<8x1xf32> to vector<8x16xf32>
    %195 = arith.subf %174, %194 : vector<8x16xf32>
    %196 = math.exp %195 : vector<8x16xf32>
    %cst_59 = arith.constant dense<0.000000e+00> : vector<8xf32>
    %197 = vector.multi_reduction <add>, %196, %cst_59 [1] : vector<8x16xf32> to vector<8xf32>
    %198 = vector.shape_cast %197 : vector<8xf32> to vector<8x1xf32>
    %199 = vector.broadcast %193 : vector<8x1xf32> to vector<8x16xf32>
    %200 = arith.subf %188, %199 : vector<8x16xf32>
    %201 = math.exp %200 : vector<8x16xf32>
    %cst_60 = arith.constant dense<0.000000e+00> : vector<8xf32>
    %202 = vector.multi_reduction <add>, %201, %cst_60 [1] : vector<8x16xf32> to vector<8xf32>
    %203 = vector.shape_cast %202 : vector<8xf32> to vector<8x1xf32>
    %204 = arith.addf %198, %203 : vector<8x1xf32>
    %205 = math.log %204 : vector<8x1xf32>
    %206 = arith.addf %193, %205 : vector<8x1xf32>
    %207 = arith.cmpi sle, %2, %148 : vector<8x16xi32>
    %cst_61 = arith.constant 0.000000e+00 : f32
    %208 = vector.broadcast %cst_61 : f32 to vector<8x16xf32>
    %209 = arith.select %207, %159, %208 : vector<8x16xi1>, vector<8x16xf32>
    %210 = arith.addf %209, %149 : vector<8x16xf32>
    %c16_i32_62 = arith.constant 16 : i32
    %211 = vector.broadcast %c16_i32_62 : i32 to vector<8x16xi32>
    %212 = arith.addi %2, %211 : vector<8x16xi32>
    %213 = arith.cmpi sle, %212, %148 : vector<8x16xi32>
    %cst_63 = arith.constant 0.000000e+00 : f32
    %214 = vector.broadcast %cst_63 : f32 to vector<8x16xf32>
    %215 = arith.select %213, %162, %214 : vector<8x16xi1>, vector<8x16xf32>
    %216 = arith.addf %215, %150 : vector<8x16xf32>
    %c1_i32_64 = arith.constant 1 : i32
    %217 = vector.broadcast %c1_i32_64 : i32 to vector<8x16xi32>
    %218 = arith.subi %148, %217 : vector<8x16xi32>
    %219 = arith.cmpi sge, %2, %218 : vector<8x16xi32>
    %c1_i32_65 = arith.constant 1 : i32
    %220 = vector.broadcast %c1_i32_65 : i32 to vector<8x16xi32>
    %221 = arith.cmpi sge, %2, %220 : vector<8x16xi32>
    %222 = arith.andi %219, %221 : vector<8x16xi1>
    %c16_i32_66 = arith.constant 16 : i32
    %223 = vector.broadcast %c16_i32_66 : i32 to vector<8x16xi32>
    %224 = arith.addi %2, %223 : vector<8x16xi32>
    %c1_i32_67 = arith.constant 1 : i32
    %225 = vector.broadcast %c1_i32_67 : i32 to vector<8x16xi32>
    %226 = arith.subi %148, %225 : vector<8x16xi32>
    %227 = arith.cmpi sge, %224, %226 : vector<8x16xi32>
    %cst_68 = arith.constant 0.000000e+00 : f32
    %228 = vector.broadcast %cst_68 : f32 to vector<8x16xf32>
    %229 = arith.select %163, %31, %228 : vector<8x16xi1>, vector<8x16xf32>
    %cst_69 = arith.constant 0.000000e+00 : f32
    %230 = vector.broadcast %cst_69 : f32 to vector<8x16xf32>
    %231 = arith.select %166, %31, %230 : vector<8x16xi1>, vector<8x16xf32>
    %cst_70 = arith.constant 0.000000e+00 : f32
    %232 = vector.broadcast %cst_70 : f32 to vector<8x16xf32>
    %233 = arith.select %222, %31, %232 : vector<8x16xi1>, vector<8x16xf32>
    %cst_71 = arith.constant 0.000000e+00 : f32
    %234 = vector.broadcast %cst_71 : f32 to vector<8x16xf32>
    %235 = arith.select %227, %31, %234 : vector<8x16xi1>, vector<8x16xf32>
    %236 = arith.addf %229, %231 : vector<8x16xf32>
    %237 = arith.addf %236, %233 : vector<8x16xf32>
    %238 = arith.addf %237, %235 : vector<8x16xf32>
    %239 = vector.broadcast %206 : vector<8x1xf32> to vector<8x16xf32>
    %240 = arith.mulf %239, %238 : vector<8x16xf32>
    %241 = arith.mulf %174, %229 : vector<8x16xf32>
    %242 = arith.subf %240, %241 : vector<8x16xf32>
    %243 = arith.mulf %184, %231 : vector<8x16xf32>
    %244 = arith.subf %242, %243 : vector<8x16xf32>
    %245 = arith.mulf %210, %233 : vector<8x16xf32>
    %246 = arith.subf %244, %245 : vector<8x16xf32>
    %247 = arith.mulf %216, %235 : vector<8x16xf32>
    %248 = arith.subf %246, %247 : vector<8x16xf32>
    %249 = vector.shape_cast %248 : vector<8x16xf32> to vector<1x8x16xf32>
    %cst_72 = arith.constant dense<0.000000e+00> : vector<1xf32>
    %250 = vector.multi_reduction <add>, %249, %cst_72 [1, 2] : vector<1x8x16xf32> to vector<1xf32>
    %251 = vector.shape_cast %250 : vector<1xf32> to vector<1x1x1xf32>
    %252 = vector.extract %251[0, 0, 0] : f32 from vector<1x1x1xf32>
    %253 = arith.addf %144, %252 : f32
    %254 = tpu.iota {dimensions = array<i32: 0>} : vector<8x128xi32>
    %255 = tpu.iota {dimensions = array<i32: 1>} : vector<8x128xi32>
    %c0_i32 = arith.constant 0 : i32
    %256 = vector.broadcast %c0_i32 : i32 to vector<8x128xi32>
    %257 = arith.cmpi eq, %254, %256 : vector<8x128xi32>
    %c0_i32_73 = arith.constant 0 : i32
    %258 = vector.broadcast %c0_i32_73 : i32 to vector<8x128xi32>
    %259 = arith.cmpi eq, %255, %258 : vector<8x128xi32>
    %260 = arith.andi %257, %259 : vector<8x128xi1>
    %c0_i32_74 = arith.constant 0 : i32
    %261 = vector.broadcast %c0_i32_74 : i32 to vector<8x128xi32>
    %262 = arith.cmpi eq, %254, %261 : vector<8x128xi32>
    %c1_i32_75 = arith.constant 1 : i32
    %263 = vector.broadcast %c1_i32_75 : i32 to vector<8x128xi32>
    %264 = arith.cmpi eq, %255, %263 : vector<8x128xi32>
    %265 = arith.andi %262, %264 : vector<8x128xi1>
    %cst_76 = arith.constant 0.000000e+00 : f32
    %266 = vector.broadcast %35 : f32 to vector<8x128xf32>
    %267 = vector.broadcast %cst_76 : f32 to vector<8x128xf32>
    %268 = arith.select %265, %266, %267 : vector<8x128xi1>, vector<8x128xf32>
    %269 = vector.broadcast %253 : f32 to vector<8x128xf32>
    %270 = arith.select %260, %269, %268 : vector<8x128xi1>, vector<8x128xf32>
    %271 = vector.shape_cast %270 : vector<8x128xf32> to vector<1x8x128xf32>
    %c0_77 = arith.constant 0 : index
    %c0_78 = arith.constant 0 : index
    %c0_79 = arith.constant 0 : index
    %272 = vector.load %arg7[%c0_77, %c0_78, %c0_79] : memref<1x8x128xf32, #tpu.memory_space<vmem>>, vector<1x8x128xf32>
    tpu.vector_store %arg7[%c0_77, %c0_78, %c0_79], %271 {strides = array<i32>} : memref<1x8x128xf32, #tpu.memory_space<vmem>>, vector<1x8x128xf32>,
    return
  }
  func.func @transform_0(%arg0: i32) -> (i32, i32) {
    %c0_i32 = arith.constant 0 : i32
    %c0_i32_0 = arith.constant 0 : i32
    %c0_i32_1 = arith.constant 0 : i32
    return %c0_i32, %c0_i32_0 : i32, i32
  }
  func.func @transform_1(%arg0: i32) -> (i32, i32) {
    %c0_i32 = arith.constant 0 : i32
    %c0_i32_0 = arith.constant 0 : i32
    %c0_i32_1 = arith.constant 0 : i32
    return %c0_i32, %c0_i32_0 : i32, i32
  }
  func.func @transform_2(%arg0: i32) -> (i32, i32) {
    %c0_i32 = arith.constant 0 : i32
    %c0_i32_0 = arith.constant 0 : i32
    %c0_i32_1 = arith.constant 0 : i32
    return %c0_i32, %c0_i32_0 : i32, i32
  }
  func.func @transform_3(%arg0: i32) -> (i32, i32) {
    %c0_i32 = arith.constant 0 : i32
    %c0_i32_0 = arith.constant 0 : i32
    return %arg0, %c0_i32 : i32, i32
  }
  func.func @transform_4(%arg0: i32) -> (i32, i32) {
    %c0_i32 = arith.constant 0 : i32
    %c0_i32_0 = arith.constant 0 : i32
    return %arg0, %c0_i32 : i32, i32
  }
  func.func @transform_5(%arg0: i32) -> (i32, i32) {
    %c0_i32 = arith.constant 0 : i32
    %c0_i32_0 = arith.constant 0 : i32
    return %arg0, %c0_i32 : i32, i32
  }
  func.func @transform_6(%arg0: i32) -> (i32, i32, i32) {
    %c0_i32 = arith.constant 0 : i32
    %c0_i32_0 = arith.constant 0 : i32
    %c0_i32_1 = arith.constant 0 : i32
    return %arg0, %c0_i32, %c0_i32_0 : i32, i32, i32
  }
}

module attributes {stable_mosaic.version = 11 : i64} {
  func.func @_softclt_row_block_kernel(%arg0: i32, %arg1: memref<4x16xf32, #tpu.memory_space<vmem>>, %arg2: memref<4x16xf32, #tpu.memory_space<vmem>>, %arg3: memref<16x16xf32, #tpu.memory_space<vmem>>, %arg4: memref<8x4xf32, #tpu.memory_space<vmem>>, %arg5: memref<8x4xf32, #tpu.memory_space<vmem>>, %arg6: memref<8x16xf32, #tpu.memory_space<vmem>>, %arg7: memref<1x8x128xf32, #tpu.memory_space<vmem>>) attributes {dimension_semantics = [#tpu.dimension_semantics<parallel>], iteration_bounds = array<i64: 2>, scalar_prefetch = 0 : i64, scratch_operands = 0 : i64, tpu.core_type = #tpu.core_type<tc>, window_params = [{pipeline_mode = #tpu.pipeline_mode<synchronous>, transform_indices = @transform_0, window_bounds = array<i64: 4, 16>}, {pipeline_mode = #tpu.pipeline_mode<synchronous>, transform_indices = @transform_1, window_bounds = array<i64: 4, 16>}, {pipeline_mode = #tpu.pipeline_mode<synchronous>, transform_indices = @transform_2, window_bounds = array<i64: 16, 16>}, {transform_indices = @transform_3, window_bounds = array<i64: 8, 4>}, {transform_indices = @transform_4, window_bounds = array<i64: 8, 4>}, {transform_indices = @transform_5, window_bounds = array<i64: 8, 16>}, {transform_indices = @transform_6, window_bounds = array<i64: 1, 8, 128>}]} {
    %c8_i32 = arith.constant 8 : i32
    %0 = arith.muli %arg0, %c8_i32 : i32
    %1 = tpu.iota {dimensions = array<i32: 0>} : vector<8x16xi32>
    %2 = tpu.iota {dimensions = array<i32: 1>} : vector<8x16xi32>
    %c0 = arith.constant 0 : index
    %c0_0 = arith.constant 0 : index
    %3 = vector.load %arg3[%c0, %c0_0] : memref<16x16xf32, #tpu.memory_space<vmem>>, vector<16x16xf32>
    %c0_1 = arith.constant 0 : index
    %c0_2 = arith.constant 0 : index
    %4 = vector.load %arg6[%c0_1, %c0_2] : memref<8x16xf32, #tpu.memory_space<vmem>>, vector<8x16xf32>
    %cst = arith.constant dense<0.000000e+00> : vector<8x16xf32>
    %5 = tpu.matmul %4, %3, %cst {dimension_numbers = #tpu.dot_dimension_numbers<[1], [0], [0], [1], [0, 0, 1, 1], [], []>} : vector<8x16xf32>, vector<16x16xf32>, vector<8x16xf32> -> vector<8x16xf32>
    %6 = arith.mulf %3, %3 : vector<16x16xf32>
    %cst_3 = arith.constant dense<0.000000e+00> : vector<16xf32>
    %7 = vector.multi_reduction <add>, %6, %cst_3 [0] : vector<16x16xf32> to vector<16xf32>
    %8 = vector.shape_cast %7 : vector<16xf32> to vector<1x16xf32>
    %9 = arith.mulf %4, %4 : vector<8x16xf32>
    %cst_4 = arith.constant dense<0.000000e+00> : vector<8xf32>
    %10 = vector.multi_reduction <add>, %9, %cst_4 [1] : vector<8x16xf32> to vector<8xf32>
    %11 = vector.shape_cast %10 : vector<8xf32> to vector<8x1xf32>
    %12 = vector.broadcast %11 : vector<8x1xf32> to vector<8x16xf32>
    %13 = vector.broadcast %8 : vector<1x16xf32> to vector<8x16xf32>
    %14 = arith.addf %12, %13 : vector<8x16xf32>
    %cst_5 = arith.constant 2.000000e+00 : f32
    %15 = vector.broadcast %cst_5 : f32 to vector<8x16xf32>
    %16 = arith.mulf %15, %5 : vector<8x16xf32>
    %17 = arith.subf %14, %16 : vector<8x16xf32>
    %cst_6 = arith.constant 5.000000e-02 : f32
    %18 = vector.broadcast %cst_6 : f32 to vector<8x16xf32>
    %19 = arith.mulf %18, %17 : vector<8x16xf32>
    %20 = math.exp %19 : vector<8x16xf32>
    %cst_7 = arith.constant 1.000000e+00 : f32
    %21 = vector.broadcast %cst_7 : f32 to vector<8x16xf32>
    %22 = arith.addf %21, %20 : vector<8x16xf32>
    %23 = tpu.reciprocal %22 {approx = true} : vector<8x16xf32> -> vector<8x16xf32>
    %cst_8 = arith.constant 1.000000e+00 : f32
    %24 = vector.broadcast %cst_8 : f32 to vector<8x16xf32>
    %25 = arith.mulf %24, %23 : vector<8x16xf32>
    %26 = vector.broadcast %0 : i32 to vector<8x16xi32>
    %27 = arith.addi %1, %26 : vector<8x16xi32>
    %c16_i32 = arith.constant 16 : i32
    %28 = vector.broadcast %c16_i32 : i32 to vector<8x16xi32>
    %29 = arith.cmpi slt, %27, %28 : vector<8x16xi32>
    %cst_9 = arith.constant 0.000000e+00 : f32
    %30 = vector.broadcast %cst_9 : f32 to vector<8x16xf32>
    %31 = arith.select %29, %25, %30 : vector<8x16xi1>, vector<8x16xf32>
    %32 = vector.shape_cast %31 : vector<8x16xf32> to vector<1x8x16xf32>
    %cst_10 = arith.constant dense<0.000000e+00> : vector<1xf32>
    %33 = vector.multi_reduction <add>, %32, %cst_10 [1, 2] : vector<1x8x16xf32> to vector<1xf32>
    %34 = vector.shape_cast %33 : vector<1xf32> to vector<1x1x1xf32>
    %35 = vector.extract %34[0, 0, 0] : f32 from vector<1x1x1xf32>
    %c0_11 = arith.constant 0 : index
    %c0_12 = arith.constant 0 : index
    %36 = vector.load %arg1[%c0_11, %c0_12] : memref<4x16xf32, #tpu.memory_space<vmem>>, vector<4x16xf32>
    %c0_13 = arith.constant 0 : index
    %c0_14 = arith.constant 0 : index
    %37 = vector.load %arg2[%c0_13, %c0_14] : memref<4x16xf32, #tpu.memory_space<vmem>>, vector<4x16xf32>
    %c0_15 = arith.constant 0 : index
    %c0_16 = arith.constant 0 : index
    %38 = vector.load %arg4[%c0_15, %c0_16] : memref<8x4xf32, #tpu.memory_space<vmem>>, vector<8x4xf32>
    %39 = vector.broadcast %0 : i32 to vector<8x16xi32>
    %40 = arith.addi %1, %39 : vector<8x16xi32>
    %cst_17 = arith.constant dense<0.000000e+00> : vector<8x16xf32>
    %41 = tpu.matmul %38, %36, %cst_17 {dimension_numbers = #tpu.dot_dimension_numbers<[1], [0], [0], [1], [0, 0, 1, 1], [], []>} : vector<8x4xf32>, vector<4x16xf32>, vector<8x16xf32> -> vector<8x16xf32>
    %cst_18 = arith.constant dense<0.000000e+00> : vector<8x16xf32>
    %42 = tpu.matmul %38, %37, %cst_18 {dimension_numbers = #tpu.dot_dimension_numbers<[1], [0], [0], [1], [0, 0, 1, 1], [], []>} : vector<8x4xf32>, vector<4x16xf32>, vector<8x16xf32> -> vector<8x16xf32>
    %43 = vector.extract_strided_slice %42 {offsets = [0, 0], sizes = [8, 1], strides = [1, 1]} : vector<8x16xf32> to vector<8x1xf32>
    %44 = tpu.iota {dimensions = array<i32: 0>} : vector<16x16xi32>
    %45 = tpu.iota {dimensions = array<i32: 1>} : vector<16x16xi32>
    %c1_i32 = arith.constant 1 : i32
    %46 = vector.broadcast %c1_i32 : i32 to vector<16x16xi32>
    %47 = arith.addi %45, %46 : vector<16x16xi32>
    %48 = arith.cmpi eq, %44, %47 : vector<16x16xi32>
    %49 = arith.extui %48 : vector<16x16xi1> to vector<16x16xi32>
    %50 = arith.sitofp %49 : vector<16x16xi32> to vector<16x16xf32>
    %cst_19 = arith.constant dense<0.000000e+00> : vector<8x16xf32>
    %51 = tpu.matmul %41, %50, %cst_19 {dimension_numbers = #tpu.dot_dimension_numbers<[1], [0], [0], [1], [0, 0, 1, 1], [], []>} : vector<8x16xf32>, vector<16x16xf32>, vector<8x16xf32> -> vector<8x16xf32>
    %c15_i32 = arith.constant 15 : i32
    %52 = vector.broadcast %c15_i32 : i32 to vector<8x16xi32>
    %53 = arith.cmpi eq, %2, %52 : vector<8x16xi32>
    %54 = vector.shape_cast %43 : vector<8x1xf32> to vector<8x1xf32>
    %55 = vector.broadcast %54 : vector<8x1xf32> to vector<8x16xf32>
    %56 = arith.select %53, %55, %51 : vector<8x16xi1>, vector<8x16xf32>
    %57 = vector.extract_strided_slice %42 {offsets = [0, 0], sizes = [8, 1], strides = [1, 1]} : vector<8x16xf32> to vector<8x1xf32>
    %58 = tpu.iota {dimensions = array<i32: 0>} : vector<16x16xi32>
    %59 = tpu.iota {dimensions = array<i32: 1>} : vector<16x16xi32>
    %c1_i32_20 = arith.constant 1 : i32
    %60 = vector.broadcast %c1_i32_20 : i32 to vector<16x16xi32>
    %61 = arith.addi %59, %60 : vector<16x16xi32>
    %62 = arith.cmpi eq, %58, %61 : vector<16x16xi32>
    %63 = arith.extui %62 : vector<16x16xi1> to vector<16x16xi32>
    %64 = arith.sitofp %63 : vector<16x16xi32> to vector<16x16xf32>
    %cst_21 = arith.constant dense<0.000000e+00> : vector<8x16xf32>
    %65 = tpu.matmul %42, %64, %cst_21 {dimension_numbers = #tpu.dot_dimension_numbers<[1], [0], [0], [1], [0, 0, 1, 1], [], []>} : vector<8x16xf32>, vector<16x16xf32>, vector<8x16xf32> -> vector<8x16xf32>
    %c15_i32_22 = arith.constant 15 : i32
    %66 = vector.broadcast %c15_i32_22 : i32 to vector<8x16xi32>
    %67 = arith.cmpi eq, %2, %66 : vector<8x16xi32>
    %68 = vector.shape_cast %57 : vector<8x1xf32> to vector<8x1xf32>
    %69 = vector.broadcast %68 : vector<8x1xf32> to vector<8x16xf32>
    %70 = arith.select %67, %69, %65 : vector<8x16xi1>, vector<8x16xf32>
    %71 = vector.extract_strided_slice %41 {offsets = [0, 0], sizes = [8, 1], strides = [1, 1]} : vector<8x16xf32> to vector<8x1xf32>
    %72 = tpu.iota {dimensions = array<i32: 0>} : vector<16x16xi32>
    %c1_i32_23 = arith.constant 1 : i32
    %73 = vector.broadcast %c1_i32_23 : i32 to vector<16x16xi32>
    %74 = arith.addi %72, %73 : vector<16x16xi32>
    %75 = tpu.iota {dimensions = array<i32: 1>} : vector<16x16xi32>
    %76 = arith.cmpi eq, %74, %75 : vector<16x16xi32>
    %77 = arith.extui %76 : vector<16x16xi1> to vector<16x16xi32>
    %78 = arith.sitofp %77 : vector<16x16xi32> to vector<16x16xf32>
    %cst_24 = arith.constant dense<0.000000e+00> : vector<8x16xf32>
    %79 = tpu.matmul %41, %78, %cst_24 {dimension_numbers = #tpu.dot_dimension_numbers<[1], [0], [0], [1], [0, 0, 1, 1], [], []>} : vector<8x16xf32>, vector<16x16xf32>, vector<8x16xf32> -> vector<8x16xf32>
    %c0_i32 = arith.constant 0 : i32
    %80 = vector.broadcast %c0_i32 : i32 to vector<8x16xi32>
    %81 = arith.cmpi eq, %2, %80 : vector<8x16xi32>
    %82 = vector.shape_cast %71 : vector<8x1xf32> to vector<8x1xf32>
    %83 = vector.broadcast %82 : vector<8x1xf32> to vector<8x16xf32>
    %84 = arith.select %81, %83, %79 : vector<8x16xi1>, vector<8x16xf32>
    %85 = vector.extract_strided_slice %41 {offsets = [0, 15], sizes = [8, 1], strides = [1, 1]} : vector<8x16xf32> to vector<8x1xf32>
    %86 = tpu.iota {dimensions = array<i32: 0>} : vector<16x16xi32>
    %c1_i32_25 = arith.constant 1 : i32
    %87 = vector.broadcast %c1_i32_25 : i32 to vector<16x16xi32>
    %88 = arith.addi %86, %87 : vector<16x16xi32>
    %89 = tpu.iota {dimensions = array<i32: 1>} : vector<16x16xi32>
    %90 = arith.cmpi eq, %88, %89 : vector<16x16xi32>
    %91 = arith.extui %90 : vector<16x16xi1> to vector<16x16xi32>
    %92 = arith.sitofp %91 : vector<16x16xi32> to vector<16x16xf32>
    %cst_26 = arith.constant dense<0.000000e+00> : vector<8x16xf32>
    %93 = tpu.matmul %42, %92, %cst_26 {dimension_numbers = #tpu.dot_dimension_numbers<[1], [0], [0], [1], [0, 0, 1, 1], [], []>} : vector<8x16xf32>, vector<16x16xf32>, vector<8x16xf32> -> vector<8x16xf32>
    %c0_i32_27 = arith.constant 0 : i32
    %94 = vector.broadcast %c0_i32_27 : i32 to vector<8x16xi32>
    %95 = arith.cmpi eq, %2, %94 : vector<8x16xi32>
    %96 = vector.shape_cast %85 : vector<8x1xf32> to vector<8x1xf32>
    %97 = vector.broadcast %96 : vector<8x1xf32> to vector<8x16xf32>
    %98 = arith.select %95, %97, %93 : vector<8x16xi1>, vector<8x16xf32>
    %99 = arith.cmpi slt, %2, %40 : vector<8x16xi32>
    %c16_i32_28 = arith.constant 16 : i32
    %100 = vector.broadcast %c16_i32_28 : i32 to vector<8x16xi32>
    %101 = arith.addi %2, %100 : vector<8x16xi32>
    %102 = arith.cmpi slt, %101, %40 : vector<8x16xi32>
    %cst_29 = arith.constant 0.000000e+00 : f32
    %103 = vector.broadcast %cst_29 : f32 to vector<8x16xf32>
    %104 = arith.select %99, %41, %103 : vector<8x16xi1>, vector<8x16xf32>
    %c2_i32 = arith.constant 2 : i32
    %105 = vector.broadcast %c2_i32 : i32 to vector<8x16xi32>
    %106 = arith.subi %40, %105 : vector<8x16xi32>
    %107 = arith.cmpi sge, %2, %106 : vector<8x16xi32>
    %cst_30 = arith.constant 0.000000e+00 : f32
    %108 = vector.broadcast %cst_30 : f32 to vector<8x16xf32>
    %109 = arith.select %107, %56, %108 : vector<8x16xi1>, vector<8x16xf32>
    %110 = arith.addf %104, %109 : vector<8x16xf32>
    %cst_31 = arith.constant 0.000000e+00 : f32
    %111 = vector.broadcast %cst_31 : f32 to vector<8x16xf32>
    %112 = arith.select %102, %42, %111 : vector<8x16xi1>, vector<8x16xf32>
    %c16_i32_32 = arith.constant 16 : i32
    %113 = vector.broadcast %c16_i32_32 : i32 to vector<8x16xi32>
    %114 = arith.addi %2, %113 : vector<8x16xi32>
    %c2_i32_33 = arith.constant 2 : i32
    %115 = vector.broadcast %c2_i32_33 : i32 to vector<8x16xi32>
    %116 = arith.subi %40, %115 : vector<8x16xi32>
    %117 = arith.cmpi sge, %114, %116 : vector<8x16xi32>
    %cst_34 = arith.constant 0.000000e+00 : f32
    %118 = vector.broadcast %cst_34 : f32 to vector<8x16xf32>
    %119 = arith.select %117, %70, %118 : vector<8x16xi1>, vector<8x16xf32>
    %120 = arith.addf %112, %119 : vector<8x16xf32>
    %c15_i32_35 = arith.constant 15 : i32
    %121 = vector.broadcast %c15_i32_35 : i32 to vector<8x16xi32>
    %122 = arith.cmpi slt, %2, %121 : vector<8x16xi32>
    %cst_36 = arith.constant -1.000000e+30 : f32
    %123 = vector.broadcast %cst_36 : f32 to vector<8x16xf32>
    %124 = arith.select %122, %120, %123 : vector<8x16xi1>, vector<8x16xf32>
    %cst_37 = arith.constant dense<0xFF800000> : vector<8xf32>
    %125 = vector.multi_reduction <maximumf>, %110, %cst_37 [1] : vector<8x16xf32> to vector<8xf32>
    %126 = vector.shape_cast %125 : vector<8xf32> to vector<8x1xf32>
    %cst_38 = arith.constant dense<0xFF800000> : vector<8xf32>
    %127 = vector.multi_reduction <maximumf>, %124, %cst_38 [1] : vector<8x16xf32> to vector<8xf32>
    %128 = vector.shape_cast %127 : vector<8xf32> to vector<8x1xf32>
    %129 = arith.maximumf %126, %128 : vector<8x1xf32>
    %130 = vector.broadcast %129 : vector<8x1xf32> to vector<8x16xf32>
    %131 = arith.subf %110, %130 : vector<8x16xf32>
    %132 = math.exp %131 : vector<8x16xf32>
    %cst_39 = arith.constant dense<0.000000e+00> : vector<8xf32>
    %133 = vector.multi_reduction <add>, %132, %cst_39 [1] : vector<8x16xf32> to vector<8xf32>
    %134 = vector.shape_cast %133 : vector<8xf32> to vector<8x1xf32>
    %135 = vector.broadcast %129 : vector<8x1xf32> to vector<8x16xf32>
    %136 = arith.subf %124, %135 : vector<8x16xf32>
    %137 = math.exp %136 : vector<8x16xf32>
    %cst_40 = arith.constant dense<0.000000e+00> : vector<8xf32>
    %138 = vector.multi_reduction <add>, %137, %cst_40 [1] : vector<8x16xf32> to vector<8xf32>
    %139 = vector.shape_cast %138 : vector<8xf32> to vector<8x1xf32>
    %140 = arith.addf %134, %139 : vector<8x1xf32>
    %141 = math.log %140 : vector<8x1xf32>
    %142 = arith.addf %129, %141 : vector<8x1xf32>
    %143 = arith.cmpi sle, %2, %40 : vector<8x16xi32>
    %cst_41 = arith.constant 0.000000e+00 : f32
    %144 = vector.broadcast %cst_41 : f32 to vector<8x16xf32>
    %145 = arith.select %143, %84, %144 : vector<8x16xi1>, vector<8x16xf32>
    %146 = arith.addf %145, %41 : vector<8x16xf32>
    %c16_i32_42 = arith.constant 16 : i32
    %147 = vector.broadcast %c16_i32_42 : i32 to vector<8x16xi32>
    %148 = arith.addi %2, %147 : vector<8x16xi32>
    %149 = arith.cmpi sle, %148, %40 : vector<8x16xi32>
    %cst_43 = arith.constant 0.000000e+00 : f32
    %150 = vector.broadcast %cst_43 : f32 to vector<8x16xf32>
    %151 = arith.select %149, %98, %150 : vector<8x16xi1>, vector<8x16xf32>
    %152 = arith.addf %151, %42 : vector<8x16xf32>
    %c1_i32_44 = arith.constant 1 : i32
    %153 = vector.broadcast %c1_i32_44 : i32 to vector<8x16xi32>
    %154 = arith.subi %40, %153 : vector<8x16xi32>
    %155 = arith.cmpi sge, %2, %154 : vector<8x16xi32>
    %c1_i32_45 = arith.constant 1 : i32
    %156 = vector.broadcast %c1_i32_45 : i32 to vector<8x16xi32>
    %157 = arith.cmpi sge, %2, %156 : vector<8x16xi32>
    %158 = arith.andi %155, %157 : vector<8x16xi1>
    %c16_i32_46 = arith.constant 16 : i32
    %159 = vector.broadcast %c16_i32_46 : i32 to vector<8x16xi32>
    %160 = arith.addi %2, %159 : vector<8x16xi32>
    %c1_i32_47 = arith.constant 1 : i32
    %161 = vector.broadcast %c1_i32_47 : i32 to vector<8x16xi32>
    %162 = arith.subi %40, %161 : vector<8x16xi32>
    %163 = arith.cmpi sge, %160, %162 : vector<8x16xi32>
    %cst_48 = arith.constant 0.000000e+00 : f32
    %164 = vector.broadcast %cst_48 : f32 to vector<8x16xf32>
    %165 = arith.select %99, %31, %164 : vector<8x16xi1>, vector<8x16xf32>
    %cst_49 = arith.constant 0.000000e+00 : f32
    %166 = vector.broadcast %cst_49 : f32 to vector<8x16xf32>
    %167 = arith.select %102, %31, %166 : vector<8x16xi1>, vector<8x16xf32>
    %cst_50 = arith.constant 0.000000e+00 : f32
    %168 = vector.broadcast %cst_50 : f32 to vector<8x16xf32>
    %169 = arith.select %158, %31, %168 : vector<8x16xi1>, vector<8x16xf32>
    %cst_51 = arith.constant 0.000000e+00 : f32
    %170 = vector.broadcast %cst_51 : f32 to vector<8x16xf32>
    %171 = arith.select %163, %31, %170 : vector<8x16xi1>, vector<8x16xf32>
    %172 = arith.addf %165, %167 : vector<8x16xf32>
    %173 = arith.addf %172, %169 : vector<8x16xf32>
    %174 = arith.addf %173, %171 : vector<8x16xf32>
    %175 = vector.broadcast %142 : vector<8x1xf32> to vector<8x16xf32>
    %176 = arith.mulf %175, %174 : vector<8x16xf32>
    %177 = arith.mulf %110, %165 : vector<8x16xf32>
    %178 = arith.subf %176, %177 : vector<8x16xf32>
    %179 = arith.mulf %120, %167 : vector<8x16xf32>
    %180 = arith.subf %178, %179 : vector<8x16xf32>
    %181 = arith.mulf %146, %169 : vector<8x16xf32>
    %182 = arith.subf %180, %181 : vector<8x16xf32>
    %183 = arith.mulf %152, %171 : vector<8x16xf32>
    %184 = arith.subf %182, %183 : vector<8x16xf32>
    %185 = vector.shape_cast %184 : vector<8x16xf32> to vector<1x8x16xf32>
    %cst_52 = arith.constant dense<0.000000e+00> : vector<1xf32>
    %186 = vector.multi_reduction <add>, %185, %cst_52 [1, 2] : vector<1x8x16xf32> to vector<1xf32>
    %187 = vector.shape_cast %186 : vector<1xf32> to vector<1x1x1xf32>
    %188 = vector.extract %187[0, 0, 0] : f32 from vector<1x1x1xf32>
    %c0_53 = arith.constant 0 : index
    %c0_54 = arith.constant 0 : index
    %189 = vector.load %arg5[%c0_53, %c0_54] : memref<8x4xf32, #tpu.memory_space<vmem>>, vector<8x4xf32>
    %c16_i32_55 = arith.constant 16 : i32
    %190 = arith.addi %0, %c16_i32_55 : i32
    %191 = vector.broadcast %190 : i32 to vector<8x16xi32>
    %192 = arith.addi %1, %191 : vector<8x16xi32>
    %cst_56 = arith.constant dense<0.000000e+00> : vector<8x16xf32>
    %193 = tpu.matmul %189, %36, %cst_56 {dimension_numbers = #tpu.dot_dimension_numbers<[1], [0], [0], [1], [0, 0, 1, 1], [], []>} : vector<8x4xf32>, vector<4x16xf32>, vector<8x16xf32> -> vector<8x16xf32>
    %cst_57 = arith.constant dense<0.000000e+00> : vector<8x16xf32>
    %194 = tpu.matmul %189, %37, %cst_57 {dimension_numbers = #tpu.dot_dimension_numbers<[1], [0], [0], [1], [0, 0, 1, 1], [], []>} : vector<8x4xf32>, vector<4x16xf32>, vector<8x16xf32> -> vector<8x16xf32>
    %195 = vector.extract_strided_slice %194 {offsets = [0, 0], sizes = [8, 1], strides = [1, 1]} : vector<8x16xf32> to vector<8x1xf32>
    %196 = tpu.iota {dimensions = array<i32: 0>} : vector<16x16xi32>
    %197 = tpu.iota {dimensions = array<i32: 1>} : vector<16x16xi32>
    %c1_i32_58 = arith.constant 1 : i32
    %198 = vector.broadcast %c1_i32_58 : i32 to vector<16x16xi32>
    %199 = arith.addi %197, %198 : vector<16x16xi32>
    %200 = arith.cmpi eq, %196, %199 : vector<16x16xi32>
    %201 = arith.extui %200 : vector<16x16xi1> to vector<16x16xi32>
    %202 = arith.sitofp %201 : vector<16x16xi32> to vector<16x16xf32>
    %cst_59 = arith.constant dense<0.000000e+00> : vector<8x16xf32>
    %203 = tpu.matmul %193, %202, %cst_59 {dimension_numbers = #tpu.dot_dimension_numbers<[1], [0], [0], [1], [0, 0, 1, 1], [], []>} : vector<8x16xf32>, vector<16x16xf32>, vector<8x16xf32> -> vector<8x16xf32>
    %c15_i32_60 = arith.constant 15 : i32
    %204 = vector.broadcast %c15_i32_60 : i32 to vector<8x16xi32>
    %205 = arith.cmpi eq, %2, %204 : vector<8x16xi32>
    %206 = vector.shape_cast %195 : vector<8x1xf32> to vector<8x1xf32>
    %207 = vector.broadcast %206 : vector<8x1xf32> to vector<8x16xf32>
    %208 = arith.select %205, %207, %203 : vector<8x16xi1>, vector<8x16xf32>
    %209 = vector.extract_strided_slice %194 {offsets = [0, 0], sizes = [8, 1], strides = [1, 1]} : vector<8x16xf32> to vector<8x1xf32>
    %210 = tpu.iota {dimensions = array<i32: 0>} : vector<16x16xi32>
    %211 = tpu.iota {dimensions = array<i32: 1>} : vector<16x16xi32>
    %c1_i32_61 = arith.constant 1 : i32
    %212 = vector.broadcast %c1_i32_61 : i32 to vector<16x16xi32>
    %213 = arith.addi %211, %212 : vector<16x16xi32>
    %214 = arith.cmpi eq, %210, %213 : vector<16x16xi32>
    %215 = arith.extui %214 : vector<16x16xi1> to vector<16x16xi32>
    %216 = arith.sitofp %215 : vector<16x16xi32> to vector<16x16xf32>
    %cst_62 = arith.constant dense<0.000000e+00> : vector<8x16xf32>
    %217 = tpu.matmul %194, %216, %cst_62 {dimension_numbers = #tpu.dot_dimension_numbers<[1], [0], [0], [1], [0, 0, 1, 1], [], []>} : vector<8x16xf32>, vector<16x16xf32>, vector<8x16xf32> -> vector<8x16xf32>
    %c15_i32_63 = arith.constant 15 : i32
    %218 = vector.broadcast %c15_i32_63 : i32 to vector<8x16xi32>
    %219 = arith.cmpi eq, %2, %218 : vector<8x16xi32>
    %220 = vector.shape_cast %209 : vector<8x1xf32> to vector<8x1xf32>
    %221 = vector.broadcast %220 : vector<8x1xf32> to vector<8x16xf32>
    %222 = arith.select %219, %221, %217 : vector<8x16xi1>, vector<8x16xf32>
    %223 = vector.extract_strided_slice %193 {offsets = [0, 0], sizes = [8, 1], strides = [1, 1]} : vector<8x16xf32> to vector<8x1xf32>
    %224 = tpu.iota {dimensions = array<i32: 0>} : vector<16x16xi32>
    %c1_i32_64 = arith.constant 1 : i32
    %225 = vector.broadcast %c1_i32_64 : i32 to vector<16x16xi32>
    %226 = arith.addi %224, %225 : vector<16x16xi32>
    %227 = tpu.iota {dimensions = array<i32: 1>} : vector<16x16xi32>
    %228 = arith.cmpi eq, %226, %227 : vector<16x16xi32>
    %229 = arith.extui %228 : vector<16x16xi1> to vector<16x16xi32>
    %230 = arith.sitofp %229 : vector<16x16xi32> to vector<16x16xf32>
    %cst_65 = arith.constant dense<0.000000e+00> : vector<8x16xf32>
    %231 = tpu.matmul %193, %230, %cst_65 {dimension_numbers = #tpu.dot_dimension_numbers<[1], [0], [0], [1], [0, 0, 1, 1], [], []>} : vector<8x16xf32>, vector<16x16xf32>, vector<8x16xf32> -> vector<8x16xf32>
    %c0_i32_66 = arith.constant 0 : i32
    %232 = vector.broadcast %c0_i32_66 : i32 to vector<8x16xi32>
    %233 = arith.cmpi eq, %2, %232 : vector<8x16xi32>
    %234 = vector.shape_cast %223 : vector<8x1xf32> to vector<8x1xf32>
    %235 = vector.broadcast %234 : vector<8x1xf32> to vector<8x16xf32>
    %236 = arith.select %233, %235, %231 : vector<8x16xi1>, vector<8x16xf32>
    %237 = vector.extract_strided_slice %193 {offsets = [0, 15], sizes = [8, 1], strides = [1, 1]} : vector<8x16xf32> to vector<8x1xf32>
    %238 = tpu.iota {dimensions = array<i32: 0>} : vector<16x16xi32>
    %c1_i32_67 = arith.constant 1 : i32
    %239 = vector.broadcast %c1_i32_67 : i32 to vector<16x16xi32>
    %240 = arith.addi %238, %239 : vector<16x16xi32>
    %241 = tpu.iota {dimensions = array<i32: 1>} : vector<16x16xi32>
    %242 = arith.cmpi eq, %240, %241 : vector<16x16xi32>
    %243 = arith.extui %242 : vector<16x16xi1> to vector<16x16xi32>
    %244 = arith.sitofp %243 : vector<16x16xi32> to vector<16x16xf32>
    %cst_68 = arith.constant dense<0.000000e+00> : vector<8x16xf32>
    %245 = tpu.matmul %194, %244, %cst_68 {dimension_numbers = #tpu.dot_dimension_numbers<[1], [0], [0], [1], [0, 0, 1, 1], [], []>} : vector<8x16xf32>, vector<16x16xf32>, vector<8x16xf32> -> vector<8x16xf32>
    %c0_i32_69 = arith.constant 0 : i32
    %246 = vector.broadcast %c0_i32_69 : i32 to vector<8x16xi32>
    %247 = arith.cmpi eq, %2, %246 : vector<8x16xi32>
    %248 = vector.shape_cast %237 : vector<8x1xf32> to vector<8x1xf32>
    %249 = vector.broadcast %248 : vector<8x1xf32> to vector<8x16xf32>
    %250 = arith.select %247, %249, %245 : vector<8x16xi1>, vector<8x16xf32>
    %251 = arith.cmpi slt, %2, %192 : vector<8x16xi32>
    %c16_i32_70 = arith.constant 16 : i32
    %252 = vector.broadcast %c16_i32_70 : i32 to vector<8x16xi32>
    %253 = arith.addi %2, %252 : vector<8x16xi32>
    %254 = arith.cmpi slt, %253, %192 : vector<8x16xi32>
    %cst_71 = arith.constant 0.000000e+00 : f32
    %255 = vector.broadcast %cst_71 : f32 to vector<8x16xf32>
    %256 = arith.select %251, %193, %255 : vector<8x16xi1>, vector<8x16xf32>
    %c2_i32_72 = arith.constant 2 : i32
    %257 = vector.broadcast %c2_i32_72 : i32 to vector<8x16xi32>
    %258 = arith.subi %192, %257 : vector<8x16xi32>
    %259 = arith.cmpi sge, %2, %258 : vector<8x16xi32>
    %cst_73 = arith.constant 0.000000e+00 : f32
    %260 = vector.broadcast %cst_73 : f32 to vector<8x16xf32>
    %261 = arith.select %259, %208, %260 : vector<8x16xi1>, vector<8x16xf32>
    %262 = arith.addf %256, %261 : vector<8x16xf32>
    %cst_74 = arith.constant 0.000000e+00 : f32
    %263 = vector.broadcast %cst_74 : f32 to vector<8x16xf32>
    %264 = arith.select %254, %194, %263 : vector<8x16xi1>, vector<8x16xf32>
    %c16_i32_75 = arith.constant 16 : i32
    %265 = vector.broadcast %c16_i32_75 : i32 to vector<8x16xi32>
    %266 = arith.addi %2, %265 : vector<8x16xi32>
    %c2_i32_76 = arith.constant 2 : i32
    %267 = vector.broadcast %c2_i32_76 : i32 to vector<8x16xi32>
    %268 = arith.subi %192, %267 : vector<8x16xi32>
    %269 = arith.cmpi sge, %266, %268 : vector<8x16xi32>
    %cst_77 = arith.constant 0.000000e+00 : f32
    %270 = vector.broadcast %cst_77 : f32 to vector<8x16xf32>
    %271 = arith.select %269, %222, %270 : vector<8x16xi1>, vector<8x16xf32>
    %272 = arith.addf %264, %271 : vector<8x16xf32>
    %c15_i32_78 = arith.constant 15 : i32
    %273 = vector.broadcast %c15_i32_78 : i32 to vector<8x16xi32>
    %274 = arith.cmpi slt, %2, %273 : vector<8x16xi32>
    %cst_79 = arith.constant -1.000000e+30 : f32
    %275 = vector.broadcast %cst_79 : f32 to vector<8x16xf32>
    %276 = arith.select %274, %272, %275 : vector<8x16xi1>, vector<8x16xf32>
    %cst_80 = arith.constant dense<0xFF800000> : vector<8xf32>
    %277 = vector.multi_reduction <maximumf>, %262, %cst_80 [1] : vector<8x16xf32> to vector<8xf32>
    %278 = vector.shape_cast %277 : vector<8xf32> to vector<8x1xf32>
    %cst_81 = arith.constant dense<0xFF800000> : vector<8xf32>
    %279 = vector.multi_reduction <maximumf>, %276, %cst_81 [1] : vector<8x16xf32> to vector<8xf32>
    %280 = vector.shape_cast %279 : vector<8xf32> to vector<8x1xf32>
    %281 = arith.maximumf %278, %280 : vector<8x1xf32>
    %282 = vector.broadcast %281 : vector<8x1xf32> to vector<8x16xf32>
    %283 = arith.subf %262, %282 : vector<8x16xf32>
    %284 = math.exp %283 : vector<8x16xf32>
    %cst_82 = arith.constant dense<0.000000e+00> : vector<8xf32>
    %285 = vector.multi_reduction <add>, %284, %cst_82 [1] : vector<8x16xf32> to vector<8xf32>
    %286 = vector.shape_cast %285 : vector<8xf32> to vector<8x1xf32>
    %287 = vector.broadcast %281 : vector<8x1xf32> to vector<8x16xf32>
    %288 = arith.subf %276, %287 : vector<8x16xf32>
    %289 = math.exp %288 : vector<8x16xf32>
    %cst_83 = arith.constant dense<0.000000e+00> : vector<8xf32>
    %290 = vector.multi_reduction <add>, %289, %cst_83 [1] : vector<8x16xf32> to vector<8xf32>
    %291 = vector.shape_cast %290 : vector<8xf32> to vector<8x1xf32>
    %292 = arith.addf %286, %291 : vector<8x1xf32>
    %293 = math.log %292 : vector<8x1xf32>
    %294 = arith.addf %281, %293 : vector<8x1xf32>
    %295 = arith.cmpi sle, %2, %192 : vector<8x16xi32>
    %cst_84 = arith.constant 0.000000e+00 : f32
    %296 = vector.broadcast %cst_84 : f32 to vector<8x16xf32>
    %297 = arith.select %295, %236, %296 : vector<8x16xi1>, vector<8x16xf32>
    %298 = arith.addf %297, %193 : vector<8x16xf32>
    %c16_i32_85 = arith.constant 16 : i32
    %299 = vector.broadcast %c16_i32_85 : i32 to vector<8x16xi32>
    %300 = arith.addi %2, %299 : vector<8x16xi32>
    %301 = arith.cmpi sle, %300, %192 : vector<8x16xi32>
    %cst_86 = arith.constant 0.000000e+00 : f32
    %302 = vector.broadcast %cst_86 : f32 to vector<8x16xf32>
    %303 = arith.select %301, %250, %302 : vector<8x16xi1>, vector<8x16xf32>
    %304 = arith.addf %303, %194 : vector<8x16xf32>
    %c1_i32_87 = arith.constant 1 : i32
    %305 = vector.broadcast %c1_i32_87 : i32 to vector<8x16xi32>
    %306 = arith.subi %192, %305 : vector<8x16xi32>
    %307 = arith.cmpi sge, %2, %306 : vector<8x16xi32>
    %c1_i32_88 = arith.constant 1 : i32
    %308 = vector.broadcast %c1_i32_88 : i32 to vector<8x16xi32>
    %309 = arith.cmpi sge, %2, %308 : vector<8x16xi32>
    %310 = arith.andi %307, %309 : vector<8x16xi1>
    %c16_i32_89 = arith.constant 16 : i32
    %311 = vector.broadcast %c16_i32_89 : i32 to vector<8x16xi32>
    %312 = arith.addi %2, %311 : vector<8x16xi32>
    %c1_i32_90 = arith.constant 1 : i32
    %313 = vector.broadcast %c1_i32_90 : i32 to vector<8x16xi32>
    %314 = arith.subi %192, %313 : vector<8x16xi32>
    %315 = arith.cmpi sge, %312, %314 : vector<8x16xi32>
    %cst_91 = arith.constant 0.000000e+00 : f32
    %316 = vector.broadcast %cst_91 : f32 to vector<8x16xf32>
    %317 = arith.select %251, %31, %316 : vector<8x16xi1>, vector<8x16xf32>
    %cst_92 = arith.constant 0.000000e+00 : f32
    %318 = vector.broadcast %cst_92 : f32 to vector<8x16xf32>
    %319 = arith.select %254, %31, %318 : vector<8x16xi1>, vector<8x16xf32>
    %cst_93 = arith.constant 0.000000e+00 : f32
    %320 = vector.broadcast %cst_93 : f32 to vector<8x16xf32>
    %321 = arith.select %310, %31, %320 : vector<8x16xi1>, vector<8x16xf32>
    %cst_94 = arith.constant 0.000000e+00 : f32
    %322 = vector.broadcast %cst_94 : f32 to vector<8x16xf32>
    %323 = arith.select %315, %31, %322 : vector<8x16xi1>, vector<8x16xf32>
    %324 = arith.addf %317, %319 : vector<8x16xf32>
    %325 = arith.addf %324, %321 : vector<8x16xf32>
    %326 = arith.addf %325, %323 : vector<8x16xf32>
    %327 = vector.broadcast %294 : vector<8x1xf32> to vector<8x16xf32>
    %328 = arith.mulf %327, %326 : vector<8x16xf32>
    %329 = arith.mulf %262, %317 : vector<8x16xf32>
    %330 = arith.subf %328, %329 : vector<8x16xf32>
    %331 = arith.mulf %272, %319 : vector<8x16xf32>
    %332 = arith.subf %330, %331 : vector<8x16xf32>
    %333 = arith.mulf %298, %321 : vector<8x16xf32>
    %334 = arith.subf %332, %333 : vector<8x16xf32>
    %335 = arith.mulf %304, %323 : vector<8x16xf32>
    %336 = arith.subf %334, %335 : vector<8x16xf32>
    %337 = vector.shape_cast %336 : vector<8x16xf32> to vector<1x8x16xf32>
    %cst_95 = arith.constant dense<0.000000e+00> : vector<1xf32>
    %338 = vector.multi_reduction <add>, %337, %cst_95 [1, 2] : vector<1x8x16xf32> to vector<1xf32>
    %339 = vector.shape_cast %338 : vector<1xf32> to vector<1x1x1xf32>
    %340 = vector.extract %339[0, 0, 0] : f32 from vector<1x1x1xf32>
    %341 = arith.addf %188, %340 : f32
    %342 = tpu.iota {dimensions = array<i32: 0>} : vector<8x128xi32>
    %343 = tpu.iota {dimensions = array<i32: 1>} : vector<8x128xi32>
    %c0_i32_96 = arith.constant 0 : i32
    %344 = vector.broadcast %c0_i32_96 : i32 to vector<8x128xi32>
    %345 = arith.cmpi eq, %342, %344 : vector<8x128xi32>
    %c0_i32_97 = arith.constant 0 : i32
    %346 = vector.broadcast %c0_i32_97 : i32 to vector<8x128xi32>
    %347 = arith.cmpi eq, %343, %346 : vector<8x128xi32>
    %348 = arith.andi %345, %347 : vector<8x128xi1>
    %c0_i32_98 = arith.constant 0 : i32
    %349 = vector.broadcast %c0_i32_98 : i32 to vector<8x128xi32>
    %350 = arith.cmpi eq, %342, %349 : vector<8x128xi32>
    %c1_i32_99 = arith.constant 1 : i32
    %351 = vector.broadcast %c1_i32_99 : i32 to vector<8x128xi32>
    %352 = arith.cmpi eq, %343, %351 : vector<8x128xi32>
    %353 = arith.andi %350, %352 : vector<8x128xi1>
    %cst_100 = arith.constant 0.000000e+00 : f32
    %354 = vector.broadcast %35 : f32 to vector<8x128xf32>
    %355 = vector.broadcast %cst_100 : f32 to vector<8x128xf32>
    %356 = arith.select %353, %354, %355 : vector<8x128xi1>, vector<8x128xf32>
    %357 = vector.broadcast %341 : f32 to vector<8x128xf32>
    %358 = arith.select %348, %357, %356 : vector<8x128xi1>, vector<8x128xf32>
    %359 = vector.shape_cast %358 : vector<8x128xf32> to vector<1x8x128xf32>
    %c0_101 = arith.constant 0 : index
    %c0_102 = arith.constant 0 : index
    %c0_103 = arith.constant 0 : index
    %360 = vector.load %arg7[%c0_101, %c0_102, %c0_103] : memref<1x8x128xf32, #tpu.memory_space<vmem>>, vector<1x8x128xf32>
    tpu.vector_store %arg7[%c0_101, %c0_102, %c0_103], %359 {strides = array<i32>} : memref<1x8x128xf32, #tpu.memory_space<vmem>>, vector<1x8x128xf32>,
    return
  }
  func.func @transform_0(%arg0: i32) -> (i32, i32) {
    %c0_i32 = arith.constant 0 : i32
    %c0_i32_0 = arith.constant 0 : i32
    %c0_i32_1 = arith.constant 0 : i32
    return %c0_i32, %c0_i32_0 : i32, i32
  }
  func.func @transform_1(%arg0: i32) -> (i32, i32) {
    %c0_i32 = arith.constant 0 : i32
    %c0_i32_0 = arith.constant 0 : i32
    %c0_i32_1 = arith.constant 0 : i32
    return %c0_i32, %c0_i32_0 : i32, i32
  }
  func.func @transform_2(%arg0: i32) -> (i32, i32) {
    %c0_i32 = arith.constant 0 : i32
    %c0_i32_0 = arith.constant 0 : i32
    %c0_i32_1 = arith.constant 0 : i32
    return %c0_i32, %c0_i32_0 : i32, i32
  }
  func.func @transform_3(%arg0: i32) -> (i32, i32) {
    %c0_i32 = arith.constant 0 : i32
    %c0_i32_0 = arith.constant 0 : i32
    return %arg0, %c0_i32 : i32, i32
  }
  func.func @transform_4(%arg0: i32) -> (i32, i32) {
    %c0_i32 = arith.constant 0 : i32
    %c0_i32_0 = arith.constant 0 : i32
    return %arg0, %c0_i32 : i32, i32
  }
  func.func @transform_5(%arg0: i32) -> (i32, i32) {
    %c0_i32 = arith.constant 0 : i32
    %c0_i32_0 = arith.constant 0 : i32
    return %arg0, %c0_i32 : i32, i32
  }
  func.func @transform_6(%arg0: i32) -> (i32, i32, i32) {
    %c0_i32 = arith.constant 0 : i32
    %c0_i32_0 = arith.constant 0 : i32
    %c0_i32_1 = arith.constant 0 : i32
    return %arg0, %c0_i32, %c0_i32_0 : i32, i32, i32
  }
}

</mosaic_0001>

<llo_original>
// kernel: tpu_custom_call.1
$region0: #{tpu_custom_call.1}
  #allocation0 [shape = 'u32[]', space=smem, size = 0x4, offset = 0x4, fixed_abs, tag = 'smem constant byte address 0x4 - core index']
  #allocation1 [shape = 'u32[144,128]{1,0:T(1,128)}', space=vmem, size = 0x12000, scoped, tag = 'internal scratch']
  %s0 = inlined_call_operand.vmem [shape: f32[4,16], index: 0, kind: input, shape index: {}]
  %s1 = inlined_call_operand.hbm [shape: f32[4,16], index: 1, kind: input, shape index: {}]
  %s2 = inlined_call_operand.vmem [shape: f32[16,16], index: 2, kind: input, shape index: {}]
  %s3 = inlined_call_operand.vmem [shape: f32[16,4], index: 3, kind: input, shape index: {}]
  %s4 = inlined_call_operand.vmem [shape: f32[16,4], index: 4, kind: input, shape index: {}]
  %s5 = inlined_call_operand.vmem [shape: f32[16,16], index: 5, kind: input, shape index: {}]
  %s6 = inlined_call_operand.hbm [shape: f32[2,8,128], index: 6, kind: output, shape index: {}]
  %s7 = sld [smem:[#allocation0]]
  $region61: #{tpu_custom_call.1} parent=0
    _
  %s9 = ssub.s32 1, %s7
  %s10 = scalar_select 0, %s9, %s7
  $region1: #{tpu_custom_call.1} parent=0
    #allocation2 [shape = 'u8[2048]{0}', space=vmem, size = 0x800, scoped, tag = 'input window, operand 1, single buffered']
    #allocation3 [shape = 's32[2]{0}', space=sflag, size = 0x8, scoped, tag = 'scoped memory for tpu_custom_call.1']
    #allocation4 [shape = 's32[2]{0}', space=sflag, size = 0x8, scoped, tag = 'scoped memory for tpu_custom_call.1']
    #allocation5 [shape = 'u8[8192]{0}', space=vmem, size = 0x2000, scoped, tag = 'output window, operand 0']
    %11 = vsyncpa [#allocation3], 0
    %12 = vsyncpa [#allocation4], 0
    %s13 = scalar_lea.sflag [#allocation4], 1
    %14 = vsyncpa %s13, 0
    loop: start=0, step=1, limit=4
    $region2: #{tpu_custom_call.1} parent=1 // loop_pre_header
      _
    $region3: #{tpu_custom_call.1} parent=1 // loop_header
      %s16 = sphi 0, %s20
      %p17 = scmp.ge.s32.totalorder %s16, 4
      %s24 = sphi 0, %s24
      %s26 = sphi 0, %s24
      %s27 = sphi 0, %s26
      %s41 = sphi 0, %s27
      %s45 = sphi 0, %s45
      %s47 = sphi 0, %s45
      %s48 = sphi 0, %s47
      %s62 = sphi 0, %s48
      %s66 = sphi 0, %s66
      %s68 = sphi 0, %s66
      %s69 = sphi 0, %s68
      %s83 = sphi 0, %s69
      %s89 = sphi 0, %s91
      %s92 = sphi 0, %s89
      %s93 = sphi 0, %s92
      %s109 = sphi 0, %s93
      %s115 = sphi 0, %s117
      %s118 = sphi 0, %s115
      %s119 = sphi 0, %s118
      %s135 = sphi 0, %s119
      %s141 = sphi 0, %s143
      %s144 = sphi 0, %s141
      %s145 = sphi 0, %s144
      %s161 = sphi 0, %s145
      %s167 = sphi 0, %s169
      %s170 = sphi 0, %s167
      %s171 = sphi 0, %s170
      %s187 = sphi 0, %s171
    $region4: #{tpu_custom_call.1} parent=1 // loop_header_branch
      %19 = sbr.rel (%p17) target = $region8
    $region5: #{tpu_custom_call.1} parent=1 // loop_body
      %s21 = ssub.s32 %s16, 1
      %s22 = ssub.s32 %s16, 2
      %s23 = sadd.s32 %s16, 1
      %s25 = sadd.s32 %s24, 1
      %p28 = scmp.eq.s32.totalorder %s16, 1
      %p29 = scmp.ne.s32.totalorder %s24, %s26
      %p30 = scmp.eq.s32.totalorder %s16, 0
      %p31 = por %p29, %p30
      %p32 = scmp.ne.s32.totalorder %s24, %s26
      %p33 = scmp.eq.s32.totalorder %s21, 1
      %p34 = por %p32, %p33
      %p35 = scmp.ne.s32.totalorder %s26, %s27
      %p36 = scmp.eq.s32.totalorder %s21, 0
      %p37 = por %p35, %p36
      %p38 = scmp.ne.s32.totalorder %s26, %s27
      %p39 = scmp.eq.s32.totalorder %s22, 1
      %p40 = por %p38, %p39
      %p42 = scmp.ne.s32.totalorder %s27, %s41
      %p43 = scmp.eq.s32.totalorder %s22, 0
      %p44 = por %p42, %p43
      %s46 = sadd.s32 %s45, 1
      %p49 = scmp.eq.s32.totalorder %s16, 1
      %p50 = scmp.ne.s32.totalorder %s45, %s47
      %p51 = scmp.eq.s32.totalorder %s16, 0
      %p52 = por %p50, %p51
      %p53 = scmp.ne.s32.totalorder %s45, %s47
      %p54 = scmp.eq.s32.totalorder %s21, 1
      %p55 = por %p53, %p54
      %p56 = scmp.ne.s32.totalorder %s47, %s48
      %p57 = scmp.eq.s32.totalorder %s21, 0
      %p58 = por %p56, %p57
      %p59 = scmp.ne.s32.totalorder %s47, %s48
      %p60 = scmp.eq.s32.totalorder %s22, 1
      %p61 = por %p59, %p60
      %p63 = scmp.ne.s32.totalorder %s48, %s62
      %p64 = scmp.eq.s32.totalorder %s22, 0
      %p65 = por %p63, %p64
      %s67 = sadd.s32 %s66, 1
      %p70 = scmp.eq.s32.totalorder %s16, 1
      %p71 = scmp.ne.s32.totalorder %s66, %s68
      %p72 = scmp.eq.s32.totalorder %s16, 0
      %p73 = por %p71, %p72
      %p74 = scmp.ne.s32.totalorder %s66, %s68
      %p75 = scmp.eq.s32.totalorder %s21, 1
      %p76 = por %p74, %p75
      %p77 = scmp.ne.s32.totalorder %s68, %s69
      %p78 = scmp.eq.s32.totalorder %s21, 0
      %p79 = por %p77, %p78
      %p80 = scmp.ne.s32.totalorder %s68, %s69
      %p81 = scmp.eq.s32.totalorder %s22, 1
      %p82 = por %p80, %p81
      %p84 = scmp.ne.s32.totalorder %s69, %s83
      %p85 = scmp.eq.s32.totalorder %s22, 0
      %p86 = por %p84, %p85
      %s87 = ssub.s32 %s16, %s23
      %p88 = scmp.eq.s32.totalorder %s87, 0
      %s90 = sadd.s32 %s89, 1
      %s91 = scalar_select %p88, %s89, %s90
      %p94 = pneg %p88
      %p95 = scmp.eq.s32.totalorder %s16, 1
      %p96 = por %p94, %p95
      %p97 = scmp.ne.s32.totalorder %s89, %s92
      %p98 = scmp.eq.s32.totalorder %s16, 0
      %p99 = por %p97, %p98
      %p100 = scmp.ne.s32.totalorder %s89, %s92
      %p101 = scmp.eq.s32.totalorder %s21, 1
      %p102 = por %p100, %p101
      %p103 = scmp.ne.s32.totalorder %s92, %s93
      %p104 = scmp.eq.s32.totalorder %s21, 0
      %p105 = por %p103, %p104
      %p106 = scmp.ne.s32.totalorder %s92, %s93
      %p107 = scmp.eq.s32.totalorder %s22, 1
      %p108 = por %p106, %p107
      %p110 = scmp.ne.s32.totalorder %s93, %s109
      %p111 = scmp.eq.s32.totalorder %s22, 0
      %p112 = por %p110, %p111
      %s113 = ssub.s32 %s16, %s23
      %p114 = scmp.eq.s32.totalorder %s113, 0
      %s116 = sadd.s32 %s115, 1
      %s117 = scalar_select %p114, %s115, %s116
      %p120 = pneg %p114
      %p121 = scmp.eq.s32.totalorder %s16, 1
      %p122 = por %p120, %p121
      %p123 = scmp.ne.s32.totalorder %s115, %s118
      %p124 = scmp.eq.s32.totalorder %s16, 0
      %p125 = por %p123, %p124
      %p126 = scmp.ne.s32.totalorder %s115, %s118
      %p127 = scmp.eq.s32.totalorder %s21, 1
      %p128 = por %p126, %p127
      %p129 = scmp.ne.s32.totalorder %s118, %s119
      %p130 = scmp.eq.s32.totalorder %s21, 0
      %p131 = por %p129, %p130
      %p132 = scmp.ne.s32.totalorder %s118, %s119
      %p133 = scmp.eq.s32.totalorder %s22, 1
      %p134 = por %p132, %p133
      %p136 = scmp.ne.s32.totalorder %s119, %s135
      %p137 = scmp.eq.s32.totalorder %s22, 0
      %p138 = por %p136, %p137
      %s139 = ssub.s32 %s16, %s23
      %p140 = scmp.eq.s32.totalorder %s139, 0
      %s142 = sadd.s32 %s141, 1
      %s143 = scalar_select %p140, %s141, %s142
      %p146 = pneg %p140
      %p147 = scmp.eq.s32.totalorder %s16, 1
      %p148 = por %p146, %p147
      %p149 = scmp.ne.s32.totalorder %s141, %s144
      %p150 = scmp.eq.s32.totalorder %s16, 0
      %p151 = por %p149, %p150
      %p152 = scmp.ne.s32.totalorder %s141, %s144
      %p153 = scmp.eq.s32.totalorder %s21, 1
      %p154 = por %p152, %p153
      %p155 = scmp.ne.s32.totalorder %s144, %s145
      %p156 = scmp.eq.s32.totalorder %s21, 0
      %p157 = por %p155, %p156
      %p158 = scmp.ne.s32.totalorder %s144, %s145
      %p159 = scmp.eq.s32.totalorder %s22, 1
      %p160 = por %p158, %p159
      %p162 = scmp.ne.s32.totalorder %s145, %s161
      %p163 = scmp.eq.s32.totalorder %s22, 0
      %p164 = por %p162, %p163
      %s165 = ssub.s32 %s16, %s23
      %p166 = scmp.eq.s32.totalorder %s165, 0
      %s168 = sadd.s32 %s167, 1
      %s169 = scalar_select %p166, %s167, %s168
      %p172 = pneg %p166
      %p173 = scmp.eq.s32.totalorder %s16, 1
      %p174 = por %p172, %p173
      %p175 = scmp.ne.s32.totalorder %s167, %s170
      %p176 = scmp.eq.s32.totalorder %s16, 0
      %p177 = por %p175, %p176
      %p178 = scmp.ne.s32.totalorder %s167, %s170
      %p179 = scmp.eq.s32.totalorder %s21, 1
      %p180 = por %p178, %p179
      %p181 = scmp.ne.s32.totalorder %s170, %s171
      %p182 = scmp.eq.s32.totalorder %s21, 0
      %p183 = por %p181, %p182
      %p184 = scmp.ne.s32.totalorder %s170, %s171
      %p185 = scmp.eq.s32.totalorder %s22, 1
      %p186 = por %p184, %p185
      %p188 = scmp.ne.s32.totalorder %s171, %s187
      %p189 = scmp.eq.s32.totalorder %s22, 0
      %p190 = por %p188, %p189
      %p191 = scmp.le.s32.totalorder 1, %s16
      %p192 = scmp.lt.s32.totalorder %s16, 3
      %p193 = pnand %p191, %p192
      %p194 = pneg %p193
      // Predicated region
      $region9: #{tpu_custom_call.1} parent=5 // pred_check
        _
      $region10: #{tpu_custom_call.1} parent=5 // pred_check_branch
        %196 = sbr.rel (%p193) target = $region12
      $region11: #{tpu_custom_call.1} parent=5 // pred_region
        %s197 = ssub.s32 %s16, 1
        // Predicated region
        $region13: #{tpu_custom_call.1} parent=11 // pred_check
          %p198 = pneg %p37
        $region14: #{tpu_custom_call.1} parent=11 // pred_check_branch
          %200 = sbr.rel (%p198) target = $region16
        $region15: #{tpu_custom_call.1} parent=11 // pred_region
          _
        $region16: #{tpu_custom_call.1} parent=11 // pred_fallthru
          _
        // Predicated region
        $region17: #{tpu_custom_call.1} parent=11 // pred_check
          %p201 = pneg %p58
        $region18: #{tpu_custom_call.1} parent=11 // pred_check_branch
          %203 = sbr.rel (%p201) target = $region20
        $region19: #{tpu_custom_call.1} parent=11 // pred_region
          %s205 = ssub.s32 64, 64
          %206 = vsyncadd [#allocation3], %s205
          %s208 = sshll.u32 [#allocation2], 4
          %s209 = int_to_ptr.vmem [resolvable:$true] %s208
          %211 = dma.hbm_to_vmem [thread:$0]  %s1, 64, %s209, [#allocation3]
        $region20: #{tpu_custom_call.1} parent=11 // pred_fallthru
          _
        // Predicated region
        $region21: #{tpu_custom_call.1} parent=11 // pred_check
          %p212 = pneg %p79
        $region22: #{tpu_custom_call.1} parent=11 // pred_check_branch
          %214 = sbr.rel (%p212) target = $region24
        $region23: #{tpu_custom_call.1} parent=11 // pred_region
          _
        $region24: #{tpu_custom_call.1} parent=11 // pred_fallthru
          _
      $region12: #{tpu_custom_call.1} parent=5 // pred_fallthru
        _
      %p215 = scmp.lt.s32.totalorder %s16, 2
      // Predicated region
      $region25: #{tpu_custom_call.1} parent=5 // pred_check
        %p216 = pneg %p215
      $region26: #{tpu_custom_call.1} parent=5 // pred_check_branch
        %218 = sbr.rel (%p216) target = $region28
      $region27: #{tpu_custom_call.1} parent=5 // pred_region
        // Predicated region
        $region29: #{tpu_custom_call.1} parent=27 // pred_check
          %p219 = pneg %p99
        $region30: #{tpu_custom_call.1} parent=27 // pred_check_branch
          %221 = sbr.rel (%p219) target = $region32
        $region31: #{tpu_custom_call.1} parent=27 // pred_region
          %p222 = scmp.lt.s32.totalorder %s16, 1
          %s223 = scalar_select %p222, %s16, 1
          %s224 = smul.addr %s223, 8
          %s225 = scalar_lea.vmem %s3, %s224
        $region32: #{tpu_custom_call.1} parent=27 // pred_fallthru
          _
        // Predicated region
        $region33: #{tpu_custom_call.1} parent=27 // pred_check
          %p226 = pneg %p125
        $region34: #{tpu_custom_call.1} parent=27 // pred_check_branch
          %228 = sbr.rel (%p226) target = $region36
        $region35: #{tpu_custom_call.1} parent=27 // pred_region
          %p229 = scmp.lt.s32.totalorder %s16, 1
          %s230 = scalar_select %p229, %s16, 1
          %s231 = smul.addr %s230, 8
          %s232 = scalar_lea.vmem %s4, %s231
        $region36: #{tpu_custom_call.1} parent=27 // pred_fallthru
          _
        // Predicated region
        $region37: #{tpu_custom_call.1} parent=27 // pred_check
          %p233 = pneg %p151
        $region38: #{tpu_custom_call.1} parent=27 // pred_check_branch
          %235 = sbr.rel (%p233) target = $region40
        $region39: #{tpu_custom_call.1} parent=27 // pred_region
          %p236 = scmp.lt.s32.totalorder %s16, 1
          %s237 = scalar_select %p236, %s16, 1
          %s238 = smul.addr %s237, 8
          %s239 = scalar_lea.vmem %s5, %s238
        $region40: #{tpu_custom_call.1} parent=27 // pred_fallthru
          _
      $region28: #{tpu_custom_call.1} parent=5 // pred_fallthru
        _
      %p240 = scmp.le.s32.totalorder 1, %s16
      %p241 = scmp.lt.s32.totalorder %s16, 3
      %p242 = pnand %p240, %p241
      %p243 = pneg %p242
      // Predicated region
      $region41: #{tpu_custom_call.1} parent=5 // pred_check
        _
      $region42: #{tpu_custom_call.1} parent=5 // pred_check_branch
        %245 = sbr.rel (%p242) target = $region44
      $region43: #{tpu_custom_call.1} parent=5 // pred_region
        %s246 = ssub.s32 %s16, 1
        // Predicated region
        $region45: #{tpu_custom_call.1} parent=43 // pred_check
          %p247 = pneg %p58
        $region46: #{tpu_custom_call.1} parent=43 // pred_check_branch
          %249 = sbr.rel (%p247) target = $region48
        $region47: #{tpu_custom_call.1} parent=43 // pred_region
          %250 = dma.done [#allocation3], 64
        $region48: #{tpu_custom_call.1} parent=43 // pred_fallthru
          _
        %p251 = pneg %p37
        %p252 = pneg %p34
        %p253 = pneg %p58
        %p254 = pneg %p55
        %p255 = pneg %p79
        %p256 = pneg %p76
        %p257 = scmp.lt.s32.totalorder %s21, 1
        %s258 = scalar_select %p257, %s21, 1
        %s259 = smul.addr %s258, 8
        %s260 = scalar_lea.vmem %s3, %s259
        %p261 = pneg %p105
        %p262 = pneg %p102
        %p263 = scmp.lt.s32.totalorder %s21, 1
        %s264 = scalar_select %p263, %s21, 1
        %s265 = smul.addr %s264, 8
        %s266 = scalar_lea.vmem %s4, %s265
        %p267 = pneg %p131
        %p268 = pneg %p128
        %p269 = scmp.lt.s32.totalorder %s21, 1
        %s270 = scalar_select %p269, %s21, 1
        %s271 = smul.addr %s270, 8
        %s272 = scalar_lea.vmem %s5, %s271
        %p273 = pneg %p157
        %p274 = pneg %p154
        %p275 = pneg %p183
        %p276 = pneg %p180
        %s277 = sand.u32 %s170, 1
        %s278 = scalar_lea.sflag [#allocation4], %s277
        %s279 = sand.u32 %s170, 1
        %s280 = smul.addr %s279, 8
        %s281 = scalar_lea.vmem [#allocation5], %s280
        %p282 = scmp.lt.s32.totalorder %s21, 1
        %s283 = scalar_select %p282, %s21, 1
        %s284 = smul.addr %s283, 8
        %s285 = scalar_lea.vmem %s3, %s284
        %p286 = scmp.lt.s32.totalorder %s21, 1
        %s287 = scalar_select %p286, %s21, 1
        %s288 = smul.addr %s287, 8
        %s289 = scalar_lea.vmem %s4, %s288
        %p290 = scmp.lt.s32.totalorder %s21, 1
        %s291 = scalar_select %p290, %s21, 1
        %s292 = smul.addr %s291, 8
        %s293 = scalar_lea.vmem %s5, %s292
        %s294 = smul.u32 %s21, 8
        %v295 = vlaneseq
        %v296 = vshrl.u32 %v295, 7
        %v297 = vlaneseq
        %v298 = vand.u32 %v297, 127
        %v299 = vld [vmem:[%s2] sm:$0xff]
        %v300 = vld [vmem:[%s2 + $0x8] sm:$0xff]
        %v301 = vld [vmem:[%s293] sm:$0xff]
        %vm302 = vcmask 130048
        %v304 = vsel %vm302, %v301, 0
        %306 = vmatprep.subr.mxu0 0.0
        %307 = vmatpush1.msra.mxu0 %v299
        %308 = vmatprep.subr.mxu0 0.0
        %309 = vmatpush1.msra.mxu0 %v300
        %310 = vmatprep.subr.mxu0 0.0
        %311 = vmatpush1.msra.mxu0 0.0
        %312 = vmatprep.subr.mxu0 0.0
        %313 = vmatpush1.msra.mxu0 0.0
        %314 = vmatprep.subr.mxu0 0.0
        %315 = vmatpush1.msra.mxu0 0.0
        %316 = vmatprep.subr.mxu0 0.0
        %317 = vmatpush1.msra.mxu0 0.0
        %318 = vmatprep.subr.mxu0 0.0
        %319 = vmatpush1.msra.mxu0 0.0
        %320 = vmatprep.subr.mxu0 0.0
        %321 = vmatpush1.msra.mxu0 0.0
        %322 = vmatprep.subr.mxu0 0.0
        %323 = vmatpush1.msra.mxu0 0.0
        %324 = vmatprep.subr.mxu0 0.0
        %325 = vmatpush1.msra.mxu0 0.0
        %326 = vmatprep.subr.mxu0 0.0
        %327 = vmatpush1.msra.mxu0 0.0
        %328 = vmatprep.subr.mxu0 0.0
        %329 = vmatpush1.msra.mxu0 0.0
        %330 = vmatprep.subr.mxu0 0.0
        %331 = vmatpush1.msra.mxu0 0.0
        %332 = vmatprep.subr.mxu0 0.0
        %333 = vmatpush1.msra.mxu0 0.0
        %334 = vmatprep.subr.mxu0 0.0
        %335 = vmatpush1.msra.mxu0 0.0
        %336 = vmatprep.subr.mxu0 0.0
        %337 = vmatpush1.msra.mxu0 0.0
        %338 = vmatprep.subr.mxu0 0.0
        %339 = vmatpush1.msra.mxu0 0.0
        %340 = vmatprep.subr.mxu0 0.0
        %341 = vmatpush1.msra.mxu0 0.0
        %342 = vmatprep.subr.mxu0 0.0
        %343 = vmatpush1.msra.mxu0 0.0
        %344 = vmatprep.subr.mxu0 0.0
        %345 = vmatpush1.msra.mxu0 0.0
        %346 = vmatprep.subr.mxu0 0.0
        %347 = vmatpush1.msra.mxu0 0.0
        %348 = vmatprep.subr.mxu0 0.0
        %349 = vmatpush1.msra.mxu0 0.0
        %350 = vmatprep.subr.mxu0 0.0
        %351 = vmatpush1.msra.mxu0 0.0
        %352 = vmatprep.subr.mxu0 0.0
        %353 = vmatpush1.msra.mxu0 0.0
        %354 = vmatprep.subr.mxu0 0.0
        %355 = vmatpush1.msra.mxu0 0.0
        %356 = vmatprep.subr.mxu0 0.0
        %357 = vmatpush1.msra.mxu0 0.0
        %358 = vmatprep.subr.mxu0 0.0
        %359 = vmatpush1.msra.mxu0 0.0
        %360 = vmatprep.subr.mxu0 0.0
        %361 = vmatpush1.msra.mxu0 0.0
        %362 = vmatprep.subr.mxu0 0.0
        %363 = vmatpush1.msra.mxu0 0.0
        %364 = vmatprep.subr.mxu0 0.0
        %365 = vmatpush1.msra.mxu0 0.0
        %366 = vmatprep.subr.mxu0 0.0
        %367 = vmatpush1.msra.mxu0 0.0
        %368 = vmatprep.subr.mxu0 0.0
        %369 = vmatpush1.msra.mxu0 0.0
        %370 = vmatprep.mubr.f32.mxu0 0.0
        %371 = vmatmul.mubr.f32.gmra.mrb[0].mxu0 %v304
        %v372 = vpop.f32.mrb[0].mxu0
        %v373 = vadd.f32 0.0, %v372
        %v374 = vpop.f32.mrb[0].mxu0
        %375 = vdwg.mxu0
        %v376 = vmul.f32 %v299, %v299
        %v377 = vmul.f32 %v300, %v300
        %v378 = vsel %vm302, %v376, 0.0
        %v379 = vsel %vm302, %v377, 0.0
        %v380 = vadd.f32 %v378, %v379
        %v381 = vrot.slane %v380, 4
        %v382 = vadd.f32 %v380, %v381
        %v383 = vrot.slane %v382, 2
        %v384 = vadd.f32 %v382, %v383
        %v385 = vrot.slane %v384, 1
        %v386 = vadd.f32 %v384, %v385
        %v387 = vmul.f32 %v301, %v301
        %v388 = vsel %vm302, %v387, 0.0
        %389 = vadd.xlane.f32.xlu0 %v388
        %v390 = vpop.xlane.xlu0 %389
        %v391 = vadd.f32 %v390, %v386
        %v392 = vmul.f32 %v373, 2.0
        %v393 = vsub.f32 %v391, %v392
        %v394 = vmul.f32 %v393, 0.05
        %v395 = vmul.f32 %v394, 1.442695
        %v396 = vpow.pop %v395
        %v397 = vadd.f32 %v396, 1.0
        %v398 = vrcp.pop %v397
        %v399 = vstv %s294
        %v400 = vadd.s32 %v296, %v399
        %vm401 = vcmp.lt.s32.totalorder %v400, 16
        %v402 = vsel %vm401, %v398, 0.0
        %v403 = vsel %vm302, %v402, 0.0
        %404 = vadd.xlane.f32.xlu0 %v403
        %v405 = vpop.xlane.xlu0 %404
        %v406 = vrot.slane %v405, 4
        %v407 = vadd.f32 %v405, %v406
        %v408 = vrot.slane %v407, 2
        %v409 = vadd.f32 %v407, %v408
        %v410 = vrot.slane %v409, 1
        %v411 = vadd.f32 %v409, %v410
        %s412 = vtos %v411
        %v413 = vld [vmem:[%s0] sm:$0xf]
        %v414 = vld [vmem:[#allocation2] sm:$0xf]
        %v415 = vld [vmem:[%s285] sm:$0xff]
        %vm416 = vcmask 31744
        %v418 = vsel %vm416, %v415, 0
        %vm420 = vcmask 1043456
        %v422 = vsel %vm420, %v413, 0
        %424 = vmatprep.subr.mxu0 0.0
        %425 = vmatpush1.msra.mxu0 %v422
        %426 = vmatprep.subr.mxu0 0.0
        %427 = vmatpush1.msra.mxu0 0.0
        %428 = vmatprep.subr.mxu0 0.0
        %429 = vmatpush1.msra.mxu0 0.0
        %430 = vmatprep.subr.mxu0 0.0
        %431 = vmatpush1.msra.mxu0 0.0
        %432 = vmatprep.subr.mxu0 0.0
        %433 = vmatpush1.msra.mxu0 0.0
        %434 = vmatprep.subr.mxu0 0.0
        %435 = vmatpush1.msra.mxu0 0.0
        %436 = vmatprep.subr.mxu0 0.0
        %437 = vmatpush1.msra.mxu0 0.0
        %438 = vmatprep.subr.mxu0 0.0
        %439 = vmatpush1.msra.mxu0 0.0
        %440 = vmatprep.subr.mxu0 0.0
        %441 = vmatpush1.msra.mxu0 0.0
        %442 = vmatprep.subr.mxu0 0.0
        %443 = vmatpush1.msra.mxu0 0.0
        %444 = vmatprep.subr.mxu0 0.0
        %445 = vmatpush1.msra.mxu0 0.0
        %446 = vmatprep.subr.mxu0 0.0
        %447 = vmatpush1.msra.mxu0 0.0
        %448 = vmatprep.subr.mxu0 0.0
        %449 = vmatpush1.msra.mxu0 0.0
        %450 = vmatprep.subr.mxu0 0.0
        %451 = vmatpush1.msra.mxu0 0.0
        %452 = vmatprep.subr.mxu0 0.0
        %453 = vmatpush1.msra.mxu0 0.0
        %454 = vmatprep.subr.mxu0 0.0
        %455 = vmatpush1.msra.mxu0 0.0
        %456 = vmatprep.subr.mxu0 0.0
        %457 = vmatpush1.msra.mxu0 0.0
        %458 = vmatprep.subr.mxu0 0.0
        %459 = vmatpush1.msra.mxu0 0.0
        %460 = vmatprep.subr.mxu0 0.0
        %461 = vmatpush1.msra.mxu0 0.0
        %462 = vmatprep.subr.mxu0 0.0
        %463 = vmatpush1.msra.mxu0 0.0
        %464 = vmatprep.subr.mxu0 0.0
        %465 = vmatpush1.msra.mxu0 0.0
        %466 = vmatprep.subr.mxu0 0.0
        %467 = vmatpush1.msra.mxu0 0.0
        %468 = vmatprep.subr.mxu0 0.0
        %469 = vmatpush1.msra.mxu0 0.0
        %470 = vmatprep.subr.mxu0 0.0
        %471 = vmatpush1.msra.mxu0 0.0
        %472 = vmatprep.subr.mxu0 0.0
        %473 = vmatpush1.msra.mxu0 0.0
        %474 = vmatprep.subr.mxu0 0.0
        %475 = vmatpush1.msra.mxu0 0.0
        %476 = vmatprep.subr.mxu0 0.0
        %477 = vmatpush1.msra.mxu0 0.0
        %478 = vmatprep.subr.mxu0 0.0
        %479 = vmatpush1.msra.mxu0 0.0
        %480 = vmatprep.subr.mxu0 0.0
        %481 = vmatpush1.msra.mxu0 0.0
        %482 = vmatprep.subr.mxu0 0.0
        %483 = vmatpush1.msra.mxu0 0.0
        %484 = vmatprep.subr.mxu0 0.0
        %485 = vmatpush1.msra.mxu0 0.0
        %486 = vmatprep.subr.mxu0 0.0
        %487 = vmatpush1.msra.mxu0 0.0
        %488 = vmatprep.mubr.f32.mxu0 0.0
        %489 = vmatmul.mubr.f32.gmra.mrb[0].mxu0 %v418
        %v490 = vpop.f32.mrb[0].mxu0
        %v491 = vadd.f32 0.0, %v490
        %v492 = vpop.f32.mrb[0].mxu0
        %493 = vdwg.mxu0
        %v495 = vsel %vm420, %v414, 0
        %497 = vmatprep.subr.mxu0 0.0
        %498 = vmatpush1.msra.mxu0 %v495
        %499 = vmatprep.subr.mxu0 0.0
        %500 = vmatpush1.msra.mxu0 0.0
        %501 = vmatprep.subr.mxu0 0.0
        %502 = vmatpush1.msra.mxu0 0.0
        %503 = vmatprep.subr.mxu0 0.0
        %504 = vmatpush1.msra.mxu0 0.0
        %505 = vmatprep.subr.mxu0 0.0
        %506 = vmatpush1.msra.mxu0 0.0
        %507 = vmatprep.subr.mxu0 0.0
        %508 = vmatpush1.msra.mxu0 0.0
        %509 = vmatprep.subr.mxu0 0.0
        %510 = vmatpush1.msra.mxu0 0.0
        %511 = vmatprep.subr.mxu0 0.0
        %512 = vmatpush1.msra.mxu0 0.0
        %513 = vmatprep.subr.mxu0 0.0
        %514 = vmatpush1.msra.mxu0 0.0
        %515 = vmatprep.subr.mxu0 0.0
        %516 = vmatpush1.msra.mxu0 0.0
        %517 = vmatprep.subr.mxu0 0.0
        %518 = vmatpush1.msra.mxu0 0.0
        %519 = vmatprep.subr.mxu0 0.0
        %520 = vmatpush1.msra.mxu0 0.0
        %521 = vmatprep.subr.mxu0 0.0
        %522 = vmatpush1.msra.mxu0 0.0
        %523 = vmatprep.subr.mxu0 0.0
        %524 = vmatpush1.msra.mxu0 0.0
        %525 = vmatprep.subr.mxu0 0.0
        %526 = vmatpush1.msra.mxu0 0.0
        %527 = vmatprep.subr.mxu0 0.0
        %528 = vmatpush1.msra.mxu0 0.0
        %529 = vmatprep.subr.mxu0 0.0
        %530 = vmatpush1.msra.mxu0 0.0
        %531 = vmatprep.subr.mxu0 0.0
        %532 = vmatpush1.msra.mxu0 0.0
        %533 = vmatprep.subr.mxu0 0.0
        %534 = vmatpush1.msra.mxu0 0.0
        %535 = vmatprep.subr.mxu0 0.0
        %536 = vmatpush1.msra.mxu0 0.0
        %537 = vmatprep.subr.mxu0 0.0
        %538 = vmatpush1.msra.mxu0 0.0
        %539 = vmatprep.subr.mxu0 0.0
        %540 = vmatpush1.msra.mxu0 0.0
        %541 = vmatprep.subr.mxu0 0.0
        %542 = vmatpush1.msra.mxu0 0.0
        %543 = vmatprep.subr.mxu0 0.0
        %544 = vmatpush1.msra.mxu0 0.0
        %545 = vmatprep.subr.mxu0 0.0
        %546 = vmatpush1.msra.mxu0 0.0
        %547 = vmatprep.subr.mxu0 0.0
        %548 = vmatpush1.msra.mxu0 0.0
        %549 = vmatprep.subr.mxu0 0.0
        %550 = vmatpush1.msra.mxu0 0.0
        %551 = vmatprep.subr.mxu0 0.0
        %552 = vmatpush1.msra.mxu0 0.0
        %553 = vmatprep.subr.mxu0 0.0
        %554 = vmatpush1.msra.mxu0 0.0
        %555 = vmatprep.subr.mxu0 0.0
        %556 = vmatpush1.msra.mxu0 0.0
        %557 = vmatprep.subr.mxu0 0.0
        %558 = vmatpush1.msra.mxu0 0.0
        %559 = vmatprep.subr.mxu0 0.0
        %560 = vmatpush1.msra.mxu0 0.0
        %561 = vmatprep.mubr.f32.mxu0 0.0
        %562 = vmatmul.mubr.f32.gmra.mrb[0].mxu0 %v418
        %v563 = vpop.f32.mrb[0].mxu0
        %v564 = vadd.f32 0.0, %v563
        %v565 = vpop.f32.mrb[0].mxu0
        %566 = vdwg.mxu0
        %568 = vrot.lane.b32.xlu0 %v491, 127
        %v569 = vpop.permute.xlu0 %568
        %572 = vrot.lane.b32.xlu0 %v564, 15
        %v573 = vpop.permute.xlu0 %572
        %vm575 = vcmask 121856
        %v576 = vsel %vm575, %v569, %v573
        %577 = vrot.lane.b32.xlu0 %v564, 127
        %v578 = vpop.permute.xlu0 %577
        %v580 = vsel %vm575, %v578, %v573
        %581 = vrot.lane.b32.xlu0 %v491, 1
        %v582 = vpop.permute.xlu0 %581
        %vm584 = vcmask 7168
        %v585 = vsel %vm584, %v491, %v582
        %586 = vrot.lane.b32.xlu0 %v491, 113
        %v587 = vpop.permute.xlu0 %586
        %589 = vrot.lane.b32.xlu0 %v564, 1
        %v590 = vpop.permute.xlu0 %589
        %v592 = vsel %vm584, %v587, %v590
        %vm593 = vcmp.lt.s32.totalorder %v298, %v400
        %v594 = vadd.s32 %v298, 16
        %vm595 = vcmp.lt.s32.totalorder %v594, %v400
        %v596 = vsel %vm593, %v491, 0.0
        %v597 = vsub.s32 %v400, 2
        %vm598 = vcmp.ge.s32.totalorder %v298, %v597
        %v599 = vsel %vm598, %v576, 0.0
        %v600 = vadd.f32 %v596, %v599
        %v601 = vsel %vm595, %v564, 0.0
        %vm602 = vcmp.ge.s32.totalorder %v594, %v597
        %v603 = vsel %vm602, %v580, 0.0
        %v604 = vadd.f32 %v601, %v603
        %vm605 = vcmp.lt.s32.totalorder %v298, 15
        %v606 = vsel %vm605, %v604, -1e+30
        %v607 = vsel %vm302, %v600, -inf
        %608 = vmax.xlane.f32.xlu0 %v607
        %v609 = vpop.xlane.xlu0 %608
        %v610 = vsel %vm302, %v606, -inf
        %611 = vmax.xlane.f32.xlu0 %v610
        %v612 = vpop.xlane.xlu0 %611
        %v613 = vmax.f32 %v609, %v612
        %v614 = vsub.f32 %v600, %v613
        %v615 = vmul.f32 %v614, 1.442695
        %v616 = vpow.pop %v615
        %v617 = vsel %vm302, %v616, 0.0
        %618 = vadd.xlane.f32.xlu0 %v617
        %v619 = vpop.xlane.xlu0 %618
        %v620 = vsub.f32 %v606, %v613
        %v621 = vmul.f32 %v620, 1.442695
        %v622 = vpow.pop %v621
        %v623 = vsel %vm302, %v622, 0.0
        %624 = vadd.xlane.f32.xlu0 %v623
        %v625 = vpop.xlane.xlu0 %624
        %v626 = vadd.f32 %v619, %v625
        %v627 = vlog2.pop %v626
        %v628 = vmul.f32 %v627, 0.6931472
        %v629 = vadd.f32 %v613, %v628
        %vm630 = vcmp.le.s32.totalorder %v298, %v400
        %v631 = vsel %vm630, %v585, 0.0
        %v632 = vadd.f32 %v631, %v491
        %vm633 = vcmp.le.s32.totalorder %v594, %v400
        %v634 = vsel %vm633, %v592, 0.0
        %v635 = vadd.f32 %v634, %v564
        %v636 = vsub.s32 %v400, 1
        %vm637 = vcmp.ge.s32.totalorder %v298, %v636
        %vm638 = vcmp.ge.s32.totalorder %v298, 1
        %vm639 = vmand %vm637, %vm638
        %vm640 = vcmp.ge.s32.totalorder %v594, %v636
        %v641 = vsel %vm593, %v402, 0.0
        %v642 = vsel %vm595, %v402, 0.0
        %v643 = vsel %vm639, %v402, 0.0
        %v644 = vsel %vm640, %v402, 0.0
        %v645 = vadd.f32 %v641, %v642
        %v646 = vadd.f32 %v645, %v643
        %v647 = vadd.f32 %v646, %v644
        %v648 = vmul.f32 %v629, %v647
        %v649 = vmul.f32 %v600, %v641
        %v650 = vsub.f32 %v648, %v649
        %v651 = vmul.f32 %v604, %v642
        %v652 = vsub.f32 %v650, %v651
        %v653 = vmul.f32 %v632, %v643
        %v654 = vsub.f32 %v652, %v653
        %v655 = vmul.f32 %v635, %v644
        %v656 = vsub.f32 %v654, %v655
        %v657 = vsel %vm302, %v656, 0.0
        %658 = vadd.xlane.f32.xlu0 %v657
        %v659 = vpop.xlane.xlu0 %658
        %v660 = vrot.slane %v659, 4
        %v661 = vadd.f32 %v659, %v660
        %v662 = vrot.slane %v661, 2
        %v663 = vadd.f32 %v661, %v662
        %v664 = vrot.slane %v663, 1
        %v665 = vadd.f32 %v663, %v664
        %s666 = vtos %v665
        %v667 = vld [vmem:[%s289] sm:$0xff]
        %s668 = sadd.s32 %s294, 16
        %v669 = vstv %s668
        %v670 = vadd.s32 %v296, %v669
        %v672 = vsel %vm416, %v667, 0
        %674 = vmatprep.subr.mxu0 0.0
        %675 = vmatpush1.msra.mxu0 %v422
        %676 = vmatprep.subr.mxu0 0.0
        %677 = vmatpush1.msra.mxu0 0.0
        %678 = vmatprep.subr.mxu0 0.0
        %679 = vmatpush1.msra.mxu0 0.0
        %680 = vmatprep.subr.mxu0 0.0
        %681 = vmatpush1.msra.mxu0 0.0
        %682 = vmatprep.subr.mxu0 0.0
        %683 = vmatpush1.msra.mxu0 0.0
        %684 = vmatprep.subr.mxu0 0.0
        %685 = vmatpush1.msra.mxu0 0.0
        %686 = vmatprep.subr.mxu0 0.0
        %687 = vmatpush1.msra.mxu0 0.0
        %688 = vmatprep.subr.mxu0 0.0
        %689 = vmatpush1.msra.mxu0 0.0
        %690 = vmatprep.subr.mxu0 0.0
        %691 = vmatpush1.msra.mxu0 0.0
        %692 = vmatprep.subr.mxu0 0.0
        %693 = vmatpush1.msra.mxu0 0.0
        %694 = vmatprep.subr.mxu0 0.0
        %695 = vmatpush1.msra.mxu0 0.0
        %696 = vmatprep.subr.mxu0 0.0
        %697 = vmatpush1.msra.mxu0 0.0
        %698 = vmatprep.subr.mxu0 0.0
        %699 = vmatpush1.msra.mxu0 0.0
        %700 = vmatprep.subr.mxu0 0.0
        %701 = vmatpush1.msra.mxu0 0.0
        %702 = vmatprep.subr.mxu0 0.0
        %703 = vmatpush1.msra.mxu0 0.0
        %704 = vmatprep.subr.mxu0 0.0
        %705 = vmatpush1.msra.mxu0 0.0
        %706 = vmatprep.subr.mxu0 0.0
        %707 = vmatpush1.msra.mxu0 0.0
        %708 = vmatprep.subr.mxu0 0.0
        %709 = vmatpush1.msra.mxu0 0.0
        %710 = vmatprep.subr.mxu0 0.0
        %711 = vmatpush1.msra.mxu0 0.0
        %712 = vmatprep.subr.mxu0 0.0
        %713 = vmatpush1.msra.mxu0 0.0
        %714 = vmatprep.subr.mxu0 0.0
        %715 = vmatpush1.msra.mxu0 0.0
        %716 = vmatprep.subr.mxu0 0.0
        %717 = vmatpush1.msra.mxu0 0.0
        %718 = vmatprep.subr.mxu0 0.0
        %719 = vmatpush1.msra.mxu0 0.0
        %720 = vmatprep.subr.mxu0 0.0
        %721 = vmatpush1.msra.mxu0 0.0
        %722 = vmatprep.subr.mxu0 0.0
        %723 = vmatpush1.msra.mxu0 0.0
        %724 = vmatprep.subr.mxu0 0.0
        %725 = vmatpush1.msra.mxu0 0.0
        %726 = vmatprep.subr.mxu0 0.0
        %727 = vmatpush1.msra.mxu0 0.0
        %728 = vmatprep.subr.mxu0 0.0
        %729 = vmatpush1.msra.mxu0 0.0
        %730 = vmatprep.subr.mxu0 0.0
        %731 = vmatpush1.msra.mxu0 0.0
        %732 = vmatprep.subr.mxu0 0.0
        %733 = vmatpush1.msra.mxu0 0.0
        %734 = vmatprep.subr.mxu0 0.0
        %735 = vmatpush1.msra.mxu0 0.0
        %736 = vmatprep.subr.mxu0 0.0
        %737 = vmatpush1.msra.mxu0 0.0
        %738 = vmatprep.mubr.f32.mxu0 0.0
        %739 = vmatmul.mubr.f32.gmra.mrb[0].mxu0 %v672
        %v740 = vpop.f32.mrb[0].mxu0
        %v741 = vadd.f32 0.0, %v740
        %v742 = vpop.f32.mrb[0].mxu0
        %743 = vdwg.mxu0
        %744 = vmatprep.subr.mxu0 0.0
        %745 = vmatpush1.msra.mxu0 %v495
        %746 = vmatprep.subr.mxu0 0.0
        %747 = vmatpush1.msra.mxu0 0.0
        %748 = vmatprep.subr.mxu0 0.0
        %749 = vmatpush1.msra.mxu0 0.0
        %750 = vmatprep.subr.mxu0 0.0
        %751 = vmatpush1.msra.mxu0 0.0
        %752 = vmatprep.subr.mxu0 0.0
        %753 = vmatpush1.msra.mxu0 0.0
        %754 = vmatprep.subr.mxu0 0.0
        %755 = vmatpush1.msra.mxu0 0.0
        %756 = vmatprep.subr.mxu0 0.0
        %757 = vmatpush1.msra.mxu0 0.0
        %758 = vmatprep.subr.mxu0 0.0
        %759 = vmatpush1.msra.mxu0 0.0
        %760 = vmatprep.subr.mxu0 0.0
        %761 = vmatpush1.msra.mxu0 0.0
        %762 = vmatprep.subr.mxu0 0.0
        %763 = vmatpush1.msra.mxu0 0.0
        %764 = vmatprep.subr.mxu0 0.0
        %765 = vmatpush1.msra.mxu0 0.0
        %766 = vmatprep.subr.mxu0 0.0
        %767 = vmatpush1.msra.mxu0 0.0
        %768 = vmatprep.subr.mxu0 0.0
        %769 = vmatpush1.msra.mxu0 0.0
        %770 = vmatprep.subr.mxu0 0.0
        %771 = vmatpush1.msra.mxu0 0.0
        %772 = vmatprep.subr.mxu0 0.0
        %773 = vmatpush1.msra.mxu0 0.0
        %774 = vmatprep.subr.mxu0 0.0
        %775 = vmatpush1.msra.mxu0 0.0
        %776 = vmatprep.subr.mxu0 0.0
        %777 = vmatpush1.msra.mxu0 0.0
        %778 = vmatprep.subr.mxu0 0.0
        %779 = vmatpush1.msra.mxu0 0.0
        %780 = vmatprep.subr.mxu0 0.0
        %781 = vmatpush1.msra.mxu0 0.0
        %782 = vmatprep.subr.mxu0 0.0
        %783 = vmatpush1.msra.mxu0 0.0
        %784 = vmatprep.subr.mxu0 0.0
        %785 = vmatpush1.msra.mxu0 0.0
        %786 = vmatprep.subr.mxu0 0.0
        %787 = vmatpush1.msra.mxu0 0.0
        %788 = vmatprep.subr.mxu0 0.0
        %789 = vmatpush1.msra.mxu0 0.0
        %790 = vmatprep.subr.mxu0 0.0
        %791 = vmatpush1.msra.mxu0 0.0
        %792 = vmatprep.subr.mxu0 0.0
        %793 = vmatpush1.msra.mxu0 0.0
        %794 = vmatprep.subr.mxu0 0.0
        %795 = vmatpush1.msra.mxu0 0.0
        %796 = vmatprep.subr.mxu0 0.0
        %797 = vmatpush1.msra.mxu0 0.0
        %798 = vmatprep.subr.mxu0 0.0
        %799 = vmatpush1.msra.mxu0 0.0
        %800 = vmatprep.subr.mxu0 0.0
        %801 = vmatpush1.msra.mxu0 0.0
        %802 = vmatprep.subr.mxu0 0.0
        %803 = vmatpush1.msra.mxu0 0.0
        %804 = vmatprep.subr.mxu0 0.0
        %805 = vmatpush1.msra.mxu0 0.0
        %806 = vmatprep.subr.mxu0 0.0
        %807 = vmatpush1.msra.mxu0 0.0
        %808 = vmatprep.mubr.f32.mxu0 0.0
        %809 = vmatmul.mubr.f32.gmra.mrb[0].mxu0 %v672
        %v810 = vpop.f32.mrb[0].mxu0
        %v811 = vadd.f32 0.0, %v810
        %v812 = vpop.f32.mrb[0].mxu0
        %813 = vdwg.mxu0
        %815 = vrot.lane.b32.xlu0 %v741, 127
        %v816 = vpop.permute.xlu0 %815
        %819 = vrot.lane.b32.xlu0 %v811, 15
        %v820 = vpop.permute.xlu0 %819
        %v822 = vsel %vm575, %v816, %v820
        %823 = vrot.lane.b32.xlu0 %v811, 127
        %v824 = vpop.permute.xlu0 %823
        %v826 = vsel %vm575, %v824, %v820
        %827 = vrot.lane.b32.xlu0 %v741, 1
        %v828 = vpop.permute.xlu0 %827
        %v830 = vsel %vm584, %v741, %v828
        %831 = vrot.lane.b32.xlu0 %v741, 113
        %v832 = vpop.permute.xlu0 %831
        %834 = vrot.lane.b32.xlu0 %v811, 1
        %v835 = vpop.permute.xlu0 %834
        %v837 = vsel %vm584, %v832, %v835
        %vm838 = vcmp.lt.s32.totalorder %v298, %v670
        %vm839 = vcmp.lt.s32.totalorder %v594, %v670
        %v840 = vsel %vm838, %v741, 0.0
        %v841 = vsub.s32 %v670, 2
        %vm842 = vcmp.ge.s32.totalorder %v298, %v841
        %v843 = vsel %vm842, %v822, 0.0
        %v844 = vadd.f32 %v840, %v843
        %v845 = vsel %vm839, %v811, 0.0
        %vm846 = vcmp.ge.s32.totalorder %v594, %v841
        %v847 = vsel %vm846, %v826, 0.0
        %v848 = vadd.f32 %v845, %v847
        %v849 = vsel %vm605, %v848, -1e+30
        %v850 = vsel %vm302, %v844, -inf
        %851 = vmax.xlane.f32.xlu0 %v850
        %v852 = vpop.xlane.xlu0 %851
        %v853 = vsel %vm302, %v849, -inf
        %854 = vmax.xlane.f32.xlu0 %v853
        %v855 = vpop.xlane.xlu0 %854
        %v856 = vmax.f32 %v852, %v855
        %v857 = vsub.f32 %v844, %v856
        %v858 = vmul.f32 %v857, 1.442695
        %v859 = vpow.pop %v858
        %v860 = vsel %vm302, %v859, 0.0
        %861 = vadd.xlane.f32.xlu0 %v860
        %v862 = vpop.xlane.xlu0 %861
        %v863 = vsub.f32 %v849, %v856
        %v864 = vmul.f32 %v863, 1.442695
        %v865 = vpow.pop %v864
        %v866 = vsel %vm302, %v865, 0.0
        %867 = vadd.xlane.f32.xlu0 %v866
        %v868 = vpop.xlane.xlu0 %867
        %v869 = vadd.f32 %v862, %v868
        %v870 = vlog2.pop %v869
        %v871 = vmul.f32 %v870, 0.6931472
        %v872 = vadd.f32 %v856, %v871
        %vm873 = vcmp.le.s32.totalorder %v298, %v670
        %v874 = vsel %vm873, %v830, 0.0
        %v875 = vadd.f32 %v874, %v741
        %vm876 = vcmp.le.s32.totalorder %v594, %v670
        %v877 = vsel %vm876, %v837, 0.0
        %v878 = vadd.f32 %v877, %v811
        %v879 = vsub.s32 %v670, 1
        %vm880 = vcmp.ge.s32.totalorder %v298, %v879
        %vm881 = vmand %vm880, %vm638
        %vm882 = vcmp.ge.s32.totalorder %v594, %v879
        %v883 = vsel %vm838, %v402, 0.0
        %v884 = vsel %vm839, %v402, 0.0
        %v885 = vsel %vm881, %v402, 0.0
        %v886 = vsel %vm882, %v402, 0.0
        %v887 = vadd.f32 %v883, %v884
        %v888 = vadd.f32 %v887, %v885
        %v889 = vadd.f32 %v888, %v886
        %v890 = vmul.f32 %v872, %v889
        %v891 = vmul.f32 %v844, %v883
        %v892 = vsub.f32 %v890, %v891
        %v893 = vmul.f32 %v848, %v884
        %v894 = vsub.f32 %v892, %v893
        %v895 = vmul.f32 %v875, %v885
        %v896 = vsub.f32 %v894, %v895
        %v897 = vmul.f32 %v878, %v886
        %v898 = vsub.f32 %v896, %v897
        %v899 = vsel %vm302, %v898, 0.0
        %900 = vadd.xlane.f32.xlu0 %v899
        %v901 = vpop.xlane.xlu0 %900
        %v902 = vrot.slane %v901, 4
        %v903 = vadd.f32 %v901, %v902
        %v904 = vrot.slane %v903, 2
        %v905 = vadd.f32 %v903, %v904
        %v906 = vrot.slane %v905, 1
        %v907 = vadd.f32 %v905, %v906
        %s908 = vtos %v907
        %s909 = sadd.f32 %s666, %s908
        %vm910 = vcmp.eq.s32.totalorder %v296, 0
        %vm911 = vcmp.eq.s32.totalorder %v298, 0
        %vm912 = vmand %vm910, %vm911
        %vm913 = vcmp.eq.s32.totalorder %v298, 1
        %vm914 = vmand %vm910, %vm913
        %v915 = vstv %s412
        %v916 = vsel %vm914, %v915, 0.0
        %v917 = vstv %s909
        %v918 = vsel %vm912, %v917, %v916
        %919 = vst [vmem:[%s281] sm:$0xff] %v918
        %s920 = sand.u32 %s170, 1
        %s921 = scalar_lea.sflag [#allocation4], %s920
        %s922 = sand.u32 %s170, 1
        %s923 = smul.addr %s922, 8
        %s924 = scalar_lea.vmem [#allocation5], %s923
        // Predicated region
        $region49: #{tpu_custom_call.1} parent=43 // pred_check
          %p925 = pneg %p180
        $region50: #{tpu_custom_call.1} parent=43 // pred_check_branch
          %927 = sbr.rel (%p925) target = $region52
        $region51: #{tpu_custom_call.1} parent=43 // pred_region
          %s929 = ssub.s32 128, 128
          %930 = vsyncadd %s921, %s929
          %s931 = smul.addr %s21, 128
          %s932 = scalar_lea.hbm %s6, %s931
          %s934 = sshll.u32 %s924, 4
          %s935 = int_to_ptr.vmem [resolvable:$true] %s934
          %937 = dma.vmem_to_hbm [thread:$0]  %s935, 128, %s932, %s921
        $region52: #{tpu_custom_call.1} parent=43 // pred_fallthru
          _
      $region44: #{tpu_custom_call.1} parent=5 // pred_fallthru
        _
      %p938 = scmp.le.s32.totalorder 2, %s16
      // Predicated region
      $region53: #{tpu_custom_call.1} parent=5 // pred_check
        %p939 = pneg %p938
      $region54: #{tpu_custom_call.1} parent=5 // pred_check_branch
        %941 = sbr.rel (%p939) target = $region56
      $region55: #{tpu_custom_call.1} parent=5 // pred_region
        %s942 = ssub.s32 %s16, 2
        // Predicated region
        $region57: #{tpu_custom_call.1} parent=55 // pred_check
          %p943 = pneg %p186
        $region58: #{tpu_custom_call.1} parent=55 // pred_check_branch
          %945 = sbr.rel (%p943) target = $region60
        $region59: #{tpu_custom_call.1} parent=55 // pred_region
          %s946 = sand.u32 %s171, 1
          %s947 = scalar_lea.sflag [#allocation4], %s946
          %s948 = sand.u32 %s171, 1
          %s949 = smul.addr %s948, 8
          %s950 = scalar_lea.vmem [#allocation5], %s949
          %951 = dma.done %s947, 128
        $region60: #{tpu_custom_call.1} parent=55 // pred_fallthru
          _
      $region56: #{tpu_custom_call.1} parent=5 // pred_fallthru
        _
    $region6: #{tpu_custom_call.1} parent=1 // loop_footer
      %s20 = sadd.s32 1, %s16
    $region7: #{tpu_custom_call.1} parent=1 // loop_footer_branch
      %15 = sbr.rel target = $region3
    $region8: #{tpu_custom_call.1} parent=1 // loop_exit
      _
    %952 = vsyncpa [#allocation3], 1
    %s953 = scalar_lea.sflag [#allocation3], 1
    %954 = vsyncpa %s953, 1
    %955 = vsyncpa [#allocation4], 1
    %s956 = scalar_lea.sflag [#allocation4], 1
    %957 = vsyncpa %s956, 1

// kernel: tpu_custom_call.1
$region0: #{tpu_custom_call.1}
  #allocation0 [shape = 'u32[]', space=smem, size = 0x4, offset = 0x4, fixed_abs, tag = 'smem constant byte address 0x4 - core index']
  #allocation1 [shape = 'u32[144,128]{1,0:T(1,128)}', space=vmem, size = 0x12000, scoped, tag = 'internal scratch']
  %s0 = inlined_call_operand.vmem [shape: f32[4,16], index: 0, kind: input, shape index: {}]
  %s1 = inlined_call_operand.hbm [shape: f32[4,16], index: 1, kind: input, shape index: {}]
  %s2 = inlined_call_operand.vmem [shape: f32[16,16], index: 2, kind: input, shape index: {}]
  %s3 = inlined_call_operand.vmem [shape: f32[16,4], index: 3, kind: input, shape index: {}]
  %s4 = inlined_call_operand.vmem [shape: f32[16,4], index: 4, kind: input, shape index: {}]
  %s5 = inlined_call_operand.vmem [shape: f32[16,16], index: 5, kind: input, shape index: {}]
  %s6 = inlined_call_operand.hbm [shape: f32[2,8,128], index: 6, kind: output, shape index: {}]
  %s7 = sld [smem:[#allocation0]]
  $region61: #{tpu_custom_call.1} parent=0
    _
  %s9 = ssub.s32 1, %s7
  %s10 = scalar_select 0, %s9, %s7
  $region1: #{tpu_custom_call.1} parent=0
    #allocation2 [shape = 'u8[2048]{0}', space=vmem, size = 0x800, scoped, tag = 'input window, operand 1, single buffered']
    #allocation3 [shape = 's32[2]{0}', space=sflag, size = 0x8, scoped, tag = 'scoped memory for tpu_custom_call.1']
    #allocation4 [shape = 's32[2]{0}', space=sflag, size = 0x8, scoped, tag = 'scoped memory for tpu_custom_call.1']
    #allocation5 [shape = 'u8[8192]{0}', space=vmem, size = 0x2000, scoped, tag = 'output window, operand 0']
    %11 = vsyncpa [#allocation3], 0
    %12 = vsyncpa [#allocation4], 0
    %s13 = scalar_lea.sflag [#allocation4], 1
    %14 = vsyncpa %s13, 0
    loop: start=0, step=1, limit=4
    $region2: #{tpu_custom_call.1} parent=1 // loop_pre_header
      _
    $region3: #{tpu_custom_call.1} parent=1 // loop_header
      %s16 = sphi 0, %s20
      %p17 = scmp.ge.s32.totalorder %s16, 4
      %s24 = sphi 0, %s24
      %s26 = sphi 0, %s24
      %s27 = sphi 0, %s26
      %s41 = sphi 0, %s27
      %s45 = sphi 0, %s45
      %s47 = sphi 0, %s45
      %s48 = sphi 0, %s47
      %s62 = sphi 0, %s48
      %s66 = sphi 0, %s66
      %s68 = sphi 0, %s66
      %s69 = sphi 0, %s68
      %s83 = sphi 0, %s69
      %s89 = sphi 0, %s91
      %s92 = sphi 0, %s89
      %s93 = sphi 0, %s92
      %s109 = sphi 0, %s93
      %s115 = sphi 0, %s117
      %s118 = sphi 0, %s115
      %s119 = sphi 0, %s118
      %s135 = sphi 0, %s119
      %s141 = sphi 0, %s143
      %s144 = sphi 0, %s141
      %s145 = sphi 0, %s144
      %s161 = sphi 0, %s145
      %s167 = sphi 0, %s169
      %s170 = sphi 0, %s167
      %s171 = sphi 0, %s170
      %s187 = sphi 0, %s171
    $region4: #{tpu_custom_call.1} parent=1 // loop_header_branch
      %19 = sbr.rel (%p17) target = $region8
    $region5: #{tpu_custom_call.1} parent=1 // loop_body
      %s21 = ssub.s32 %s16, 1
      %s22 = ssub.s32 %s16, 2
      %s23 = sadd.s32 %s16, 1
      %s25 = sadd.s32 %s24, 1
      %p28 = scmp.eq.s32.totalorder %s16, 1
      %p29 = scmp.ne.s32.totalorder %s24, %s26
      %p30 = scmp.eq.s32.totalorder %s16, 0
      %p31 = por %p29, %p30
      %p32 = scmp.ne.s32.totalorder %s24, %s26
      %p33 = scmp.eq.s32.totalorder %s21, 1
      %p34 = por %p32, %p33
      %p35 = scmp.ne.s32.totalorder %s26, %s27
      %p36 = scmp.eq.s32.totalorder %s21, 0
      %p37 = por %p35, %p36
      %p38 = scmp.ne.s32.totalorder %s26, %s27
      %p39 = scmp.eq.s32.totalorder %s22, 1
      %p40 = por %p38, %p39
      %p42 = scmp.ne.s32.totalorder %s27, %s41
      %p43 = scmp.eq.s32.totalorder %s22, 0
      %p44 = por %p42, %p43
      %s46 = sadd.s32 %s45, 1
      %p49 = scmp.eq.s32.totalorder %s16, 1
      %p50 = scmp.ne.s32.totalorder %s45, %s47
      %p51 = scmp.eq.s32.totalorder %s16, 0
      %p52 = por %p50, %p51
      %p53 = scmp.ne.s32.totalorder %s45, %s47
      %p54 = scmp.eq.s32.totalorder %s21, 1
      %p55 = por %p53, %p54
      %p56 = scmp.ne.s32.totalorder %s47, %s48
      %p57 = scmp.eq.s32.totalorder %s21, 0
      %p58 = por %p56, %p57
      %p59 = scmp.ne.s32.totalorder %s47, %s48
      %p60 = scmp.eq.s32.totalorder %s22, 1
      %p61 = por %p59, %p60
      %p63 = scmp.ne.s32.totalorder %s48, %s62
      %p64 = scmp.eq.s32.totalorder %s22, 0
      %p65 = por %p63, %p64
      %s67 = sadd.s32 %s66, 1
      %p70 = scmp.eq.s32.totalorder %s16, 1
      %p71 = scmp.ne.s32.totalorder %s66, %s68
      %p72 = scmp.eq.s32.totalorder %s16, 0
      %p73 = por %p71, %p72
      %p74 = scmp.ne.s32.totalorder %s66, %s68
      %p75 = scmp.eq.s32.totalorder %s21, 1
      %p76 = por %p74, %p75
      %p77 = scmp.ne.s32.totalorder %s68, %s69
      %p78 = scmp.eq.s32.totalorder %s21, 0
      %p79 = por %p77, %p78
      %p80 = scmp.ne.s32.totalorder %s68, %s69
      %p81 = scmp.eq.s32.totalorder %s22, 1
      %p82 = por %p80, %p81
      %p84 = scmp.ne.s32.totalorder %s69, %s83
      %p85 = scmp.eq.s32.totalorder %s22, 0
      %p86 = por %p84, %p85
      %s87 = ssub.s32 %s16, %s23
      %p88 = scmp.eq.s32.totalorder %s87, 0
      %s90 = sadd.s32 %s89, 1
      %s91 = scalar_select %p88, %s89, %s90
      %p94 = pneg %p88
      %p95 = scmp.eq.s32.totalorder %s16, 1
      %p96 = por %p94, %p95
      %p97 = scmp.ne.s32.totalorder %s89, %s92
      %p98 = scmp.eq.s32.totalorder %s16, 0
      %p99 = por %p97, %p98
      %p100 = scmp.ne.s32.totalorder %s89, %s92
      %p101 = scmp.eq.s32.totalorder %s21, 1
      %p102 = por %p100, %p101
      %p103 = scmp.ne.s32.totalorder %s92, %s93
      %p104 = scmp.eq.s32.totalorder %s21, 0
      %p105 = por %p103, %p104
      %p106 = scmp.ne.s32.totalorder %s92, %s93
      %p107 = scmp.eq.s32.totalorder %s22, 1
      %p108 = por %p106, %p107
      %p110 = scmp.ne.s32.totalorder %s93, %s109
      %p111 = scmp.eq.s32.totalorder %s22, 0
      %p112 = por %p110, %p111
      %s113 = ssub.s32 %s16, %s23
      %p114 = scmp.eq.s32.totalorder %s113, 0
      %s116 = sadd.s32 %s115, 1
      %s117 = scalar_select %p114, %s115, %s116
      %p120 = pneg %p114
      %p121 = scmp.eq.s32.totalorder %s16, 1
      %p122 = por %p120, %p121
      %p123 = scmp.ne.s32.totalorder %s115, %s118
      %p124 = scmp.eq.s32.totalorder %s16, 0
      %p125 = por %p123, %p124
      %p126 = scmp.ne.s32.totalorder %s115, %s118
      %p127 = scmp.eq.s32.totalorder %s21, 1
      %p128 = por %p126, %p127
      %p129 = scmp.ne.s32.totalorder %s118, %s119
      %p130 = scmp.eq.s32.totalorder %s21, 0
      %p131 = por %p129, %p130
      %p132 = scmp.ne.s32.totalorder %s118, %s119
      %p133 = scmp.eq.s32.totalorder %s22, 1
      %p134 = por %p132, %p133
      %p136 = scmp.ne.s32.totalorder %s119, %s135
      %p137 = scmp.eq.s32.totalorder %s22, 0
      %p138 = por %p136, %p137
      %s139 = ssub.s32 %s16, %s23
      %p140 = scmp.eq.s32.totalorder %s139, 0
      %s142 = sadd.s32 %s141, 1
      %s143 = scalar_select %p140, %s141, %s142
      %p146 = pneg %p140
      %p147 = scmp.eq.s32.totalorder %s16, 1
      %p148 = por %p146, %p147
      %p149 = scmp.ne.s32.totalorder %s141, %s144
      %p150 = scmp.eq.s32.totalorder %s16, 0
      %p151 = por %p149, %p150
      %p152 = scmp.ne.s32.totalorder %s141, %s144
      %p153 = scmp.eq.s32.totalorder %s21, 1
      %p154 = por %p152, %p153
      %p155 = scmp.ne.s32.totalorder %s144, %s145
      %p156 = scmp.eq.s32.totalorder %s21, 0
      %p157 = por %p155, %p156
      %p158 = scmp.ne.s32.totalorder %s144, %s145
      %p159 = scmp.eq.s32.totalorder %s22, 1
      %p160 = por %p158, %p159
      %p162 = scmp.ne.s32.totalorder %s145, %s161
      %p163 = scmp.eq.s32.totalorder %s22, 0
      %p164 = por %p162, %p163
      %s165 = ssub.s32 %s16, %s23
      %p166 = scmp.eq.s32.totalorder %s165, 0
      %s168 = sadd.s32 %s167, 1
      %s169 = scalar_select %p166, %s167, %s168
      %p172 = pneg %p166
      %p173 = scmp.eq.s32.totalorder %s16, 1
      %p174 = por %p172, %p173
      %p175 = scmp.ne.s32.totalorder %s167, %s170
      %p176 = scmp.eq.s32.totalorder %s16, 0
      %p177 = por %p175, %p176
      %p178 = scmp.ne.s32.totalorder %s167, %s170
      %p179 = scmp.eq.s32.totalorder %s21, 1
      %p180 = por %p178, %p179
      %p181 = scmp.ne.s32.totalorder %s170, %s171
      %p182 = scmp.eq.s32.totalorder %s21, 0
      %p183 = por %p181, %p182
      %p184 = scmp.ne.s32.totalorder %s170, %s171
      %p185 = scmp.eq.s32.totalorder %s22, 1
      %p186 = por %p184, %p185
      %p188 = scmp.ne.s32.totalorder %s171, %s187
      %p189 = scmp.eq.s32.totalorder %s22, 0
      %p190 = por %p188, %p189
      %p191 = scmp.le.s32.totalorder 1, %s16
      %p192 = scmp.lt.s32.totalorder %s16, 3
      %p193 = pnand %p191, %p192
      %p194 = pneg %p193
      // Predicated region
      $region9: #{tpu_custom_call.1} parent=5 // pred_check
        _
      $region10: #{tpu_custom_call.1} parent=5 // pred_check_branch
        %196 = sbr.rel (%p193) target = $region12
      $region11: #{tpu_custom_call.1} parent=5 // pred_region
        %s197 = ssub.s32 %s16, 1
        // Predicated region
        $region13: #{tpu_custom_call.1} parent=11 // pred_check
          %p198 = pneg %p37
        $region14: #{tpu_custom_call.1} parent=11 // pred_check_branch
          %200 = sbr.rel (%p198) target = $region16
        $region15: #{tpu_custom_call.1} parent=11 // pred_region
          _
        $region16: #{tpu_custom_call.1} parent=11 // pred_fallthru
          _
        // Predicated region
        $region17: #{tpu_custom_call.1} parent=11 // pred_check
          %p201 = pneg %p58
        $region18: #{tpu_custom_call.1} parent=11 // pred_check_branch
          %203 = sbr.rel (%p201) target = $region20
        $region19: #{tpu_custom_call.1} parent=11 // pred_region
          %s205 = ssub.s32 64, 64
          %206 = vsyncadd [#allocation3], %s205
          %s208 = sshll.u32 [#allocation2], 4
          %s209 = int_to_ptr.vmem [resolvable:$true] %s208
          %211 = dma.hbm_to_vmem [thread:$0]  %s1, 64, %s209, [#allocation3]
        $region20: #{tpu_custom_call.1} parent=11 // pred_fallthru
          _
        // Predicated region
        $region21: #{tpu_custom_call.1} parent=11 // pred_check
          %p212 = pneg %p79
        $region22: #{tpu_custom_call.1} parent=11 // pred_check_branch
          %214 = sbr.rel (%p212) target = $region24
        $region23: #{tpu_custom_call.1} parent=11 // pred_region
          _
        $region24: #{tpu_custom_call.1} parent=11 // pred_fallthru
          _
      $region12: #{tpu_custom_call.1} parent=5 // pred_fallthru
        _
      %p215 = scmp.lt.s32.totalorder %s16, 2
      // Predicated region
      $region25: #{tpu_custom_call.1} parent=5 // pred_check
        %p216 = pneg %p215
      $region26: #{tpu_custom_call.1} parent=5 // pred_check_branch
        %218 = sbr.rel (%p216) target = $region28
      $region27: #{tpu_custom_call.1} parent=5 // pred_region
        // Predicated region
        $region29: #{tpu_custom_call.1} parent=27 // pred_check
          %p219 = pneg %p99
        $region30: #{tpu_custom_call.1} parent=27 // pred_check_branch
          %221 = sbr.rel (%p219) target = $region32
        $region31: #{tpu_custom_call.1} parent=27 // pred_region
          %p222 = scmp.lt.s32.totalorder %s16, 1
          %s223 = scalar_select %p222, %s16, 1
          %s224 = smul.addr %s223, 8
          %s225 = scalar_lea.vmem %s3, %s224
        $region32: #{tpu_custom_call.1} parent=27 // pred_fallthru
          _
        // Predicated region
        $region33: #{tpu_custom_call.1} parent=27 // pred_check
          %p226 = pneg %p125
        $region34: #{tpu_custom_call.1} parent=27 // pred_check_branch
          %228 = sbr.rel (%p226) target = $region36
        $region35: #{tpu_custom_call.1} parent=27 // pred_region
          %p229 = scmp.lt.s32.totalorder %s16, 1
          %s230 = scalar_select %p229, %s16, 1
          %s231 = smul.addr %s230, 8
          %s232 = scalar_lea.vmem %s4, %s231
        $region36: #{tpu_custom_call.1} parent=27 // pred_fallthru
          _
        // Predicated region
        $region37: #{tpu_custom_call.1} parent=27 // pred_check
          %p233 = pneg %p151
        $region38: #{tpu_custom_call.1} parent=27 // pred_check_branch
          %235 = sbr.rel (%p233) target = $region40
        $region39: #{tpu_custom_call.1} parent=27 // pred_region
          %p236 = scmp.lt.s32.totalorder %s16, 1
          %s237 = scalar_select %p236, %s16, 1
          %s238 = smul.addr %s237, 8
          %s239 = scalar_lea.vmem %s5, %s238
        $region40: #{tpu_custom_call.1} parent=27 // pred_fallthru
          _
      $region28: #{tpu_custom_call.1} parent=5 // pred_fallthru
        _
      %p240 = scmp.le.s32.totalorder 1, %s16
      %p241 = scmp.lt.s32.totalorder %s16, 3
      %p242 = pnand %p240, %p241
      %p243 = pneg %p242
      // Predicated region
      $region41: #{tpu_custom_call.1} parent=5 // pred_check
        _
      $region42: #{tpu_custom_call.1} parent=5 // pred_check_branch
        %245 = sbr.rel (%p242) target = $region44
      $region43: #{tpu_custom_call.1} parent=5 // pred_region
        %s246 = ssub.s32 %s16, 1
        // Predicated region
        $region45: #{tpu_custom_call.1} parent=43 // pred_check
          %p247 = pneg %p58
        $region46: #{tpu_custom_call.1} parent=43 // pred_check_branch
          %249 = sbr.rel (%p247) target = $region48
        $region47: #{tpu_custom_call.1} parent=43 // pred_region
          %250 = dma.done [#allocation3], 64
        $region48: #{tpu_custom_call.1} parent=43 // pred_fallthru
          _
        %p251 = pneg %p37
        %p252 = pneg %p34
        %p253 = pneg %p58
        %p254 = pneg %p55
        %p255 = pneg %p79
        %p256 = pneg %p76
        %p257 = scmp.lt.s32.totalorder %s21, 1
        %s258 = scalar_select %p257, %s21, 1
        %s259 = smul.addr %s258, 8
        %s260 = scalar_lea.vmem %s3, %s259
        %p261 = pneg %p105
        %p262 = pneg %p102
        %p263 = scmp.lt.s32.totalorder %s21, 1
        %s264 = scalar_select %p263, %s21, 1
        %s265 = smul.addr %s264, 8
        %s266 = scalar_lea.vmem %s4, %s265
        %p267 = pneg %p131
        %p268 = pneg %p128
        %p269 = scmp.lt.s32.totalorder %s21, 1
        %s270 = scalar_select %p269, %s21, 1
        %s271 = smul.addr %s270, 8
        %s272 = scalar_lea.vmem %s5, %s271
        %p273 = pneg %p157
        %p274 = pneg %p154
        %p275 = pneg %p183
        %p276 = pneg %p180
        %s277 = sand.u32 %s170, 1
        %s278 = scalar_lea.sflag [#allocation4], %s277
        %s279 = sand.u32 %s170, 1
        %s280 = smul.addr %s279, 8
        %s281 = scalar_lea.vmem [#allocation5], %s280
        %p282 = scmp.lt.s32.totalorder %s21, 1
        %s283 = scalar_select %p282, %s21, 1
        %s284 = smul.addr %s283, 8
        %s285 = scalar_lea.vmem %s3, %s284
        %p286 = scmp.lt.s32.totalorder %s21, 1
        %s287 = scalar_select %p286, %s21, 1
        %s288 = smul.addr %s287, 8
        %s289 = scalar_lea.vmem %s4, %s288
        %p290 = scmp.lt.s32.totalorder %s21, 1
        %s291 = scalar_select %p290, %s21, 1
        %s292 = smul.addr %s291, 8
        %s293 = scalar_lea.vmem %s5, %s292
        %s294 = smul.u32 %s21, 8
        %v295 = vlaneseq
        %v296 = vshrl.u32 %v295, 7
        %v297 = vlaneseq
        %v298 = vand.u32 %v297, 127
        %v299 = vld [vmem:[%s2] sm:$0xff]
        %v300 = vld [vmem:[%s2 + $0x8] sm:$0xff]
        %v301 = vld [vmem:[%s293] sm:$0xff]
        %vm302 = vcmask 130048
        %v304 = vsel %vm302, %v301, 0
        %306 = vmatprep.subr.mxu0 0.0
        %307 = vmatpush1.msra.mxu0 %v299
        %308 = vmatprep.subr.mxu0 0.0
        %309 = vmatpush1.msra.mxu0 %v300
        %310 = vmatprep.subr.mxu0 0.0
        %311 = vmatpush1.msra.mxu0 0.0
        %312 = vmatprep.subr.mxu0 0.0
        %313 = vmatpush1.msra.mxu0 0.0
        %314 = vmatprep.subr.mxu0 0.0
        %315 = vmatpush1.msra.mxu0 0.0
        %316 = vmatprep.subr.mxu0 0.0
        %317 = vmatpush1.msra.mxu0 0.0
        %318 = vmatprep.subr.mxu0 0.0
        %319 = vmatpush1.msra.mxu0 0.0
        %320 = vmatprep.subr.mxu0 0.0
        %321 = vmatpush1.msra.mxu0 0.0
        %322 = vmatprep.subr.mxu0 0.0
        %323 = vmatpush1.msra.mxu0 0.0
        %324 = vmatprep.subr.mxu0 0.0
        %325 = vmatpush1.msra.mxu0 0.0
        %326 = vmatprep.subr.mxu0 0.0
        %327 = vmatpush1.msra.mxu0 0.0
        %328 = vmatprep.subr.mxu0 0.0
        %329 = vmatpush1.msra.mxu0 0.0
        %330 = vmatprep.subr.mxu0 0.0
        %331 = vmatpush1.msra.mxu0 0.0
        %332 = vmatprep.subr.mxu0 0.0
        %333 = vmatpush1.msra.mxu0 0.0
        %334 = vmatprep.subr.mxu0 0.0
        %335 = vmatpush1.msra.mxu0 0.0
        %336 = vmatprep.subr.mxu0 0.0
        %337 = vmatpush1.msra.mxu0 0.0
        %338 = vmatprep.subr.mxu0 0.0
        %339 = vmatpush1.msra.mxu0 0.0
        %340 = vmatprep.subr.mxu0 0.0
        %341 = vmatpush1.msra.mxu0 0.0
        %342 = vmatprep.subr.mxu0 0.0
        %343 = vmatpush1.msra.mxu0 0.0
        %344 = vmatprep.subr.mxu0 0.0
        %345 = vmatpush1.msra.mxu0 0.0
        %346 = vmatprep.subr.mxu0 0.0
        %347 = vmatpush1.msra.mxu0 0.0
        %348 = vmatprep.subr.mxu0 0.0
        %349 = vmatpush1.msra.mxu0 0.0
        %350 = vmatprep.subr.mxu0 0.0
        %351 = vmatpush1.msra.mxu0 0.0
        %352 = vmatprep.subr.mxu0 0.0
        %353 = vmatpush1.msra.mxu0 0.0
        %354 = vmatprep.subr.mxu0 0.0
        %355 = vmatpush1.msra.mxu0 0.0
        %356 = vmatprep.subr.mxu0 0.0
        %357 = vmatpush1.msra.mxu0 0.0
        %358 = vmatprep.subr.mxu0 0.0
        %359 = vmatpush1.msra.mxu0 0.0
        %360 = vmatprep.subr.mxu0 0.0
        %361 = vmatpush1.msra.mxu0 0.0
        %362 = vmatprep.subr.mxu0 0.0
        %363 = vmatpush1.msra.mxu0 0.0
        %364 = vmatprep.subr.mxu0 0.0
        %365 = vmatpush1.msra.mxu0 0.0
        %366 = vmatprep.subr.mxu0 0.0
        %367 = vmatpush1.msra.mxu0 0.0
        %368 = vmatprep.subr.mxu0 0.0
        %369 = vmatpush1.msra.mxu0 0.0
        %370 = vmatprep.mubr.f32.mxu0 0.0
        %371 = vmatmul.mubr.f32.gmra.mrb[0].mxu0 %v304
        %v372 = vpop.f32.mrb[0].mxu0
        %v373 = vadd.f32 0.0, %v372
        %v374 = vpop.f32.mrb[0].mxu0
        %375 = vdwg.mxu0
        %v376 = vmul.f32 %v299, %v299
        %v377 = vmul.f32 %v300, %v300
        %v378 = vsel %vm302, %v376, 0.0
        %v379 = vsel %vm302, %v377, 0.0
        %v380 = vadd.f32 %v378, %v379
        %v381 = vrot.slane %v380, 4
        %v382 = vadd.f32 %v380, %v381
        %v383 = vrot.slane %v382, 2
        %v384 = vadd.f32 %v382, %v383
        %v385 = vrot.slane %v384, 1
        %v386 = vadd.f32 %v384, %v385
        %v387 = vmul.f32 %v301, %v301
        %v388 = vsel %vm302, %v387, 0.0
        %389 = vadd.xlane.f32.xlu0 %v388
        %v390 = vpop.xlane.xlu0 %389
        %v391 = vadd.f32 %v390, %v386
        %v392 = vmul.f32 %v373, 2.0
        %v393 = vsub.f32 %v391, %v392
        %v394 = vmul.f32 %v393, 0.05
        %v395 = vmul.f32 %v394, 1.442695
        %v396 = vpow.pop %v395
        %v397 = vadd.f32 %v396, 1.0
        %v398 = vrcp.pop %v397
        %v399 = vstv %s294
        %v400 = vadd.s32 %v296, %v399
        %vm401 = vcmp.lt.s32.totalorder %v400, 16
        %v402 = vsel %vm401, %v398, 0.0
        %v403 = vsel %vm302, %v402, 0.0
        %404 = vadd.xlane.f32.xlu0 %v403
        %v405 = vpop.xlane.xlu0 %404
        %v406 = vrot.slane %v405, 4
        %v407 = vadd.f32 %v405, %v406
        %v408 = vrot.slane %v407, 2
        %v409 = vadd.f32 %v407, %v408
        %v410 = vrot.slane %v409, 1
        %v411 = vadd.f32 %v409, %v410
        %s412 = vtos %v411
        %v413 = vld [vmem:[%s0] sm:$0xf]
        %v414 = vld [vmem:[#allocation2] sm:$0xf]
        %v415 = vld [vmem:[%s285] sm:$0xff]
        %vm416 = vcmask 31744
        %v418 = vsel %vm416, %v415, 0
        %vm420 = vcmask 1043456
        %v422 = vsel %vm420, %v413, 0
        %424 = vmatprep.subr.mxu0 0.0
        %425 = vmatpush1.msra.mxu0 %v422
        %426 = vmatprep.subr.mxu0 0.0
        %427 = vmatpush1.msra.mxu0 0.0
        %428 = vmatprep.subr.mxu0 0.0
        %429 = vmatpush1.msra.mxu0 0.0
        %430 = vmatprep.subr.mxu0 0.0
        %431 = vmatpush1.msra.mxu0 0.0
        %432 = vmatprep.subr.mxu0 0.0
        %433 = vmatpush1.msra.mxu0 0.0
        %434 = vmatprep.subr.mxu0 0.0
        %435 = vmatpush1.msra.mxu0 0.0
        %436 = vmatprep.subr.mxu0 0.0
        %437 = vmatpush1.msra.mxu0 0.0
        %438 = vmatprep.subr.mxu0 0.0
        %439 = vmatpush1.msra.mxu0 0.0
        %440 = vmatprep.subr.mxu0 0.0
        %441 = vmatpush1.msra.mxu0 0.0
        %442 = vmatprep.subr.mxu0 0.0
        %443 = vmatpush1.msra.mxu0 0.0
        %444 = vmatprep.subr.mxu0 0.0
        %445 = vmatpush1.msra.mxu0 0.0
        %446 = vmatprep.subr.mxu0 0.0
        %447 = vmatpush1.msra.mxu0 0.0
        %448 = vmatprep.subr.mxu0 0.0
        %449 = vmatpush1.msra.mxu0 0.0
        %450 = vmatprep.subr.mxu0 0.0
        %451 = vmatpush1.msra.mxu0 0.0
        %452 = vmatprep.subr.mxu0 0.0
        %453 = vmatpush1.msra.mxu0 0.0
        %454 = vmatprep.subr.mxu0 0.0
        %455 = vmatpush1.msra.mxu0 0.0
        %456 = vmatprep.subr.mxu0 0.0
        %457 = vmatpush1.msra.mxu0 0.0
        %458 = vmatprep.subr.mxu0 0.0
        %459 = vmatpush1.msra.mxu0 0.0
        %460 = vmatprep.subr.mxu0 0.0
        %461 = vmatpush1.msra.mxu0 0.0
        %462 = vmatprep.subr.mxu0 0.0
        %463 = vmatpush1.msra.mxu0 0.0
        %464 = vmatprep.subr.mxu0 0.0
        %465 = vmatpush1.msra.mxu0 0.0
        %466 = vmatprep.subr.mxu0 0.0
        %467 = vmatpush1.msra.mxu0 0.0
        %468 = vmatprep.subr.mxu0 0.0
        %469 = vmatpush1.msra.mxu0 0.0
        %470 = vmatprep.subr.mxu0 0.0
        %471 = vmatpush1.msra.mxu0 0.0
        %472 = vmatprep.subr.mxu0 0.0
        %473 = vmatpush1.msra.mxu0 0.0
        %474 = vmatprep.subr.mxu0 0.0
        %475 = vmatpush1.msra.mxu0 0.0
        %476 = vmatprep.subr.mxu0 0.0
        %477 = vmatpush1.msra.mxu0 0.0
        %478 = vmatprep.subr.mxu0 0.0
        %479 = vmatpush1.msra.mxu0 0.0
        %480 = vmatprep.subr.mxu0 0.0
        %481 = vmatpush1.msra.mxu0 0.0
        %482 = vmatprep.subr.mxu0 0.0
        %483 = vmatpush1.msra.mxu0 0.0
        %484 = vmatprep.subr.mxu0 0.0
        %485 = vmatpush1.msra.mxu0 0.0
        %486 = vmatprep.subr.mxu0 0.0
        %487 = vmatpush1.msra.mxu0 0.0
        %488 = vmatprep.mubr.f32.mxu0 0.0
        %489 = vmatmul.mubr.f32.gmra.mrb[0].mxu0 %v418
        %v490 = vpop.f32.mrb[0].mxu0
        %v491 = vadd.f32 0.0, %v490
        %v492 = vpop.f32.mrb[0].mxu0
        %493 = vdwg.mxu0
        %v495 = vsel %vm420, %v414, 0
        %497 = vmatprep.subr.mxu0 0.0
        %498 = vmatpush1.msra.mxu0 %v495
        %499 = vmatprep.subr.mxu0 0.0
        %500 = vmatpush1.msra.mxu0 0.0
        %501 = vmatprep.subr.mxu0 0.0
        %502 = vmatpush1.msra.mxu0 0.0
        %503 = vmatprep.subr.mxu0 0.0
        %504 = vmatpush1.msra.mxu0 0.0
        %505 = vmatprep.subr.mxu0 0.0
        %506 = vmatpush1.msra.mxu0 0.0
        %507 = vmatprep.subr.mxu0 0.0
        %508 = vmatpush1.msra.mxu0 0.0
        %509 = vmatprep.subr.mxu0 0.0
        %510 = vmatpush1.msra.mxu0 0.0
        %511 = vmatprep.subr.mxu0 0.0
        %512 = vmatpush1.msra.mxu0 0.0
        %513 = vmatprep.subr.mxu0 0.0
        %514 = vmatpush1.msra.mxu0 0.0
        %515 = vmatprep.subr.mxu0 0.0
        %516 = vmatpush1.msra.mxu0 0.0
        %517 = vmatprep.subr.mxu0 0.0
        %518 = vmatpush1.msra.mxu0 0.0
        %519 = vmatprep.subr.mxu0 0.0
        %520 = vmatpush1.msra.mxu0 0.0
        %521 = vmatprep.subr.mxu0 0.0
        %522 = vmatpush1.msra.mxu0 0.0
        %523 = vmatprep.subr.mxu0 0.0
        %524 = vmatpush1.msra.mxu0 0.0
        %525 = vmatprep.subr.mxu0 0.0
        %526 = vmatpush1.msra.mxu0 0.0
        %527 = vmatprep.subr.mxu0 0.0
        %528 = vmatpush1.msra.mxu0 0.0
        %529 = vmatprep.subr.mxu0 0.0
        %530 = vmatpush1.msra.mxu0 0.0
        %531 = vmatprep.subr.mxu0 0.0
        %532 = vmatpush1.msra.mxu0 0.0
        %533 = vmatprep.subr.mxu0 0.0
        %534 = vmatpush1.msra.mxu0 0.0
        %535 = vmatprep.subr.mxu0 0.0
        %536 = vmatpush1.msra.mxu0 0.0
        %537 = vmatprep.subr.mxu0 0.0
        %538 = vmatpush1.msra.mxu0 0.0
        %539 = vmatprep.subr.mxu0 0.0
        %540 = vmatpush1.msra.mxu0 0.0
        %541 = vmatprep.subr.mxu0 0.0
        %542 = vmatpush1.msra.mxu0 0.0
        %543 = vmatprep.subr.mxu0 0.0
        %544 = vmatpush1.msra.mxu0 0.0
        %545 = vmatprep.subr.mxu0 0.0
        %546 = vmatpush1.msra.mxu0 0.0
        %547 = vmatprep.subr.mxu0 0.0
        %548 = vmatpush1.msra.mxu0 0.0
        %549 = vmatprep.subr.mxu0 0.0
        %550 = vmatpush1.msra.mxu0 0.0
        %551 = vmatprep.subr.mxu0 0.0
        %552 = vmatpush1.msra.mxu0 0.0
        %553 = vmatprep.subr.mxu0 0.0
        %554 = vmatpush1.msra.mxu0 0.0
        %555 = vmatprep.subr.mxu0 0.0
        %556 = vmatpush1.msra.mxu0 0.0
        %557 = vmatprep.subr.mxu0 0.0
        %558 = vmatpush1.msra.mxu0 0.0
        %559 = vmatprep.subr.mxu0 0.0
        %560 = vmatpush1.msra.mxu0 0.0
        %561 = vmatprep.mubr.f32.mxu0 0.0
        %562 = vmatmul.mubr.f32.gmra.mrb[0].mxu0 %v418
        %v563 = vpop.f32.mrb[0].mxu0
        %v564 = vadd.f32 0.0, %v563
        %v565 = vpop.f32.mrb[0].mxu0
        %566 = vdwg.mxu0
        %568 = vrot.lane.b32.xlu0 %v491, 127
        %v569 = vpop.permute.xlu0 %568
        %572 = vrot.lane.b32.xlu0 %v564, 15
        %v573 = vpop.permute.xlu0 %572
        %vm575 = vcmask 121856
        %v576 = vsel %vm575, %v569, %v573
        %577 = vrot.lane.b32.xlu0 %v564, 127
        %v578 = vpop.permute.xlu0 %577
        %v580 = vsel %vm575, %v578, %v573
        %581 = vrot.lane.b32.xlu0 %v491, 1
        %v582 = vpop.permute.xlu0 %581
        %vm584 = vcmask 7168
        %v585 = vsel %vm584, %v491, %v582
        %586 = vrot.lane.b32.xlu0 %v491, 113
        %v587 = vpop.permute.xlu0 %586
        %589 = vrot.lane.b32.xlu0 %v564, 1
        %v590 = vpop.permute.xlu0 %589
        %v592 = vsel %vm584, %v587, %v590
        %vm593 = vcmp.lt.s32.totalorder %v298, %v400
        %v594 = vadd.s32 %v298, 16
        %vm595 = vcmp.lt.s32.totalorder %v594, %v400
        %v596 = vsel %vm593, %v491, 0.0
        %v597 = vsub.s32 %v400, 2
        %vm598 = vcmp.ge.s32.totalorder %v298, %v597
        %v599 = vsel %vm598, %v576, 0.0
        %v600 = vadd.f32 %v596, %v599
        %v601 = vsel %vm595, %v564, 0.0
        %vm602 = vcmp.ge.s32.totalorder %v594, %v597
        %v603 = vsel %vm602, %v580, 0.0
        %v604 = vadd.f32 %v601, %v603
        %vm605 = vcmp.lt.s32.totalorder %v298, 15
        %v606 = vsel %vm605, %v604, -1e+30
        %v607 = vsel %vm302, %v600, -inf
        %608 = vmax.xlane.f32.xlu0 %v607
        %v609 = vpop.xlane.xlu0 %608
        %v610 = vsel %vm302, %v606, -inf
        %611 = vmax.xlane.f32.xlu0 %v610
        %v612 = vpop.xlane.xlu0 %611
        %v613 = vmax.f32 %v609, %v612
        %v614 = vsub.f32 %v600, %v613
        %v615 = vmul.f32 %v614, 1.442695
        %v616 = vpow.pop %v615
        %v617 = vsel %vm302, %v616, 0.0
        %618 = vadd.xlane.f32.xlu0 %v617
        %v619 = vpop.xlane.xlu0 %618
        %v620 = vsub.f32 %v606, %v613
        %v621 = vmul.f32 %v620, 1.442695
        %v622 = vpow.pop %v621
        %v623 = vsel %vm302, %v622, 0.0
        %624 = vadd.xlane.f32.xlu0 %v623
        %v625 = vpop.xlane.xlu0 %624
        %v626 = vadd.f32 %v619, %v625
        %v627 = vlog2.pop %v626
        %v628 = vmul.f32 %v627, 0.6931472
        %v629 = vadd.f32 %v613, %v628
        %vm630 = vcmp.le.s32.totalorder %v298, %v400
        %v631 = vsel %vm630, %v585, 0.0
        %v632 = vadd.f32 %v631, %v491
        %vm633 = vcmp.le.s32.totalorder %v594, %v400
        %v634 = vsel %vm633, %v592, 0.0
        %v635 = vadd.f32 %v634, %v564
        %v636 = vsub.s32 %v400, 1
        %vm637 = vcmp.ge.s32.totalorder %v298, %v636
        %vm638 = vcmp.ge.s32.totalorder %v298, 1
        %vm639 = vmand %vm637, %vm638
        %vm640 = vcmp.ge.s32.totalorder %v594, %v636
        %v641 = vsel %vm593, %v402, 0.0
        %v642 = vsel %vm595, %v402, 0.0
        %v643 = vsel %vm639, %v402, 0.0
        %v644 = vsel %vm640, %v402, 0.0
        %v645 = vadd.f32 %v641, %v642
        %v646 = vadd.f32 %v645, %v643
        %v647 = vadd.f32 %v646, %v644
        %v648 = vmul.f32 %v629, %v647
        %v649 = vmul.f32 %v600, %v641
        %v650 = vsub.f32 %v648, %v649
        %v651 = vmul.f32 %v604, %v642
        %v652 = vsub.f32 %v650, %v651
        %v653 = vmul.f32 %v632, %v643
        %v654 = vsub.f32 %v652, %v653
        %v655 = vmul.f32 %v635, %v644
        %v656 = vsub.f32 %v654, %v655
        %v657 = vsel %vm302, %v656, 0.0
        %658 = vadd.xlane.f32.xlu0 %v657
        %v659 = vpop.xlane.xlu0 %658
        %v660 = vrot.slane %v659, 4
        %v661 = vadd.f32 %v659, %v660
        %v662 = vrot.slane %v661, 2
        %v663 = vadd.f32 %v661, %v662
        %v664 = vrot.slane %v663, 1
        %v665 = vadd.f32 %v663, %v664
        %s666 = vtos %v665
        %v667 = vld [vmem:[%s289] sm:$0xff]
        %s668 = sadd.s32 %s294, 16
        %v669 = vstv %s668
        %v670 = vadd.s32 %v296, %v669
        %v672 = vsel %vm416, %v667, 0
        %674 = vmatprep.subr.mxu0 0.0
        %675 = vmatpush1.msra.mxu0 %v422
        %676 = vmatprep.subr.mxu0 0.0
        %677 = vmatpush1.msra.mxu0 0.0
        %678 = vmatprep.subr.mxu0 0.0
        %679 = vmatpush1.msra.mxu0 0.0
        %680 = vmatprep.subr.mxu0 0.0
        %681 = vmatpush1.msra.mxu0 0.0
        %682 = vmatprep.subr.mxu0 0.0
        %683 = vmatpush1.msra.mxu0 0.0
        %684 = vmatprep.subr.mxu0 0.0
        %685 = vmatpush1.msra.mxu0 0.0
        %686 = vmatprep.subr.mxu0 0.0
        %687 = vmatpush1.msra.mxu0 0.0
        %688 = vmatprep.subr.mxu0 0.0
        %689 = vmatpush1.msra.mxu0 0.0
        %690 = vmatprep.subr.mxu0 0.0
        %691 = vmatpush1.msra.mxu0 0.0
        %692 = vmatprep.subr.mxu0 0.0
        %693 = vmatpush1.msra.mxu0 0.0
        %694 = vmatprep.subr.mxu0 0.0
        %695 = vmatpush1.msra.mxu0 0.0
        %696 = vmatprep.subr.mxu0 0.0
        %697 = vmatpush1.msra.mxu0 0.0
        %698 = vmatprep.subr.mxu0 0.0
        %699 = vmatpush1.msra.mxu0 0.0
        %700 = vmatprep.subr.mxu0 0.0
        %701 = vmatpush1.msra.mxu0 0.0
        %702 = vmatprep.subr.mxu0 0.0
        %703 = vmatpush1.msra.mxu0 0.0
        %704 = vmatprep.subr.mxu0 0.0
        %705 = vmatpush1.msra.mxu0 0.0
        %706 = vmatprep.subr.mxu0 0.0
        %707 = vmatpush1.msra.mxu0 0.0
        %708 = vmatprep.subr.mxu0 0.0
        %709 = vmatpush1.msra.mxu0 0.0
        %710 = vmatprep.subr.mxu0 0.0
        %711 = vmatpush1.msra.mxu0 0.0
        %712 = vmatprep.subr.mxu0 0.0
        %713 = vmatpush1.msra.mxu0 0.0
        %714 = vmatprep.subr.mxu0 0.0
        %715 = vmatpush1.msra.mxu0 0.0
        %716 = vmatprep.subr.mxu0 0.0
        %717 = vmatpush1.msra.mxu0 0.0
        %718 = vmatprep.subr.mxu0 0.0
        %719 = vmatpush1.msra.mxu0 0.0
        %720 = vmatprep.subr.mxu0 0.0
        %721 = vmatpush1.msra.mxu0 0.0
        %722 = vmatprep.subr.mxu0 0.0
        %723 = vmatpush1.msra.mxu0 0.0
        %724 = vmatprep.subr.mxu0 0.0
        %725 = vmatpush1.msra.mxu0 0.0
        %726 = vmatprep.subr.mxu0 0.0
        %727 = vmatpush1.msra.mxu0 0.0
        %728 = vmatprep.subr.mxu0 0.0
        %729 = vmatpush1.msra.mxu0 0.0
        %730 = vmatprep.subr.mxu0 0.0
        %731 = vmatpush1.msra.mxu0 0.0
        %732 = vmatprep.subr.mxu0 0.0
        %733 = vmatpush1.msra.mxu0 0.0
        %734 = vmatprep.subr.mxu0 0.0
        %735 = vmatpush1.msra.mxu0 0.0
        %736 = vmatprep.subr.mxu0 0.0
        %737 = vmatpush1.msra.mxu0 0.0
        %738 = vmatprep.mubr.f32.mxu0 0.0
        %739 = vmatmul.mubr.f32.gmra.mrb[0].mxu0 %v672
        %v740 = vpop.f32.mrb[0].mxu0
        %v741 = vadd.f32 0.0, %v740
        %v742 = vpop.f32.mrb[0].mxu0
        %743 = vdwg.mxu0
        %744 = vmatprep.subr.mxu0 0.0
        %745 = vmatpush1.msra.mxu0 %v495
        %746 = vmatprep.subr.mxu0 0.0
        %747 = vmatpush1.msra.mxu0 0.0
        %748 = vmatprep.subr.mxu0 0.0
        %749 = vmatpush1.msra.mxu0 0.0
        %750 = vmatprep.subr.mxu0 0.0
        %751 = vmatpush1.msra.mxu0 0.0
        %752 = vmatprep.subr.mxu0 0.0
        %753 = vmatpush1.msra.mxu0 0.0
        %754 = vmatprep.subr.mxu0 0.0
        %755 = vmatpush1.msra.mxu0 0.0
        %756 = vmatprep.subr.mxu0 0.0
        %757 = vmatpush1.msra.mxu0 0.0
        %758 = vmatprep.subr.mxu0 0.0
        %759 = vmatpush1.msra.mxu0 0.0
        %760 = vmatprep.subr.mxu0 0.0
        %761 = vmatpush1.msra.mxu0 0.0
        %762 = vmatprep.subr.mxu0 0.0
        %763 = vmatpush1.msra.mxu0 0.0
        %764 = vmatprep.subr.mxu0 0.0
        %765 = vmatpush1.msra.mxu0 0.0
        %766 = vmatprep.subr.mxu0 0.0
        %767 = vmatpush1.msra.mxu0 0.0
        %768 = vmatprep.subr.mxu0 0.0
        %769 = vmatpush1.msra.mxu0 0.0
        %770 = vmatprep.subr.mxu0 0.0
        %771 = vmatpush1.msra.mxu0 0.0
        %772 = vmatprep.subr.mxu0 0.0
        %773 = vmatpush1.msra.mxu0 0.0
        %774 = vmatprep.subr.mxu0 0.0
        %775 = vmatpush1.msra.mxu0 0.0
        %776 = vmatprep.subr.mxu0 0.0
        %777 = vmatpush1.msra.mxu0 0.0
        %778 = vmatprep.subr.mxu0 0.0
        %779 = vmatpush1.msra.mxu0 0.0
        %780 = vmatprep.subr.mxu0 0.0
        %781 = vmatpush1.msra.mxu0 0.0
        %782 = vmatprep.subr.mxu0 0.0
        %783 = vmatpush1.msra.mxu0 0.0
        %784 = vmatprep.subr.mxu0 0.0
        %785 = vmatpush1.msra.mxu0 0.0
        %786 = vmatprep.subr.mxu0 0.0
        %787 = vmatpush1.msra.mxu0 0.0
        %788 = vmatprep.subr.mxu0 0.0
        %789 = vmatpush1.msra.mxu0 0.0
        %790 = vmatprep.subr.mxu0 0.0
        %791 = vmatpush1.msra.mxu0 0.0
        %792 = vmatprep.subr.mxu0 0.0
        %793 = vmatpush1.msra.mxu0 0.0
        %794 = vmatprep.subr.mxu0 0.0
        %795 = vmatpush1.msra.mxu0 0.0
        %796 = vmatprep.subr.mxu0 0.0
        %797 = vmatpush1.msra.mxu0 0.0
        %798 = vmatprep.subr.mxu0 0.0
        %799 = vmatpush1.msra.mxu0 0.0
        %800 = vmatprep.subr.mxu0 0.0
        %801 = vmatpush1.msra.mxu0 0.0
        %802 = vmatprep.subr.mxu0 0.0
        %803 = vmatpush1.msra.mxu0 0.0
        %804 = vmatprep.subr.mxu0 0.0
        %805 = vmatpush1.msra.mxu0 0.0
        %806 = vmatprep.subr.mxu0 0.0
        %807 = vmatpush1.msra.mxu0 0.0
        %808 = vmatprep.mubr.f32.mxu0 0.0
        %809 = vmatmul.mubr.f32.gmra.mrb[0].mxu0 %v672
        %v810 = vpop.f32.mrb[0].mxu0
        %v811 = vadd.f32 0.0, %v810
        %v812 = vpop.f32.mrb[0].mxu0
        %813 = vdwg.mxu0
        %815 = vrot.lane.b32.xlu0 %v741, 127
        %v816 = vpop.permute.xlu0 %815
        %819 = vrot.lane.b32.xlu0 %v811, 15
        %v820 = vpop.permute.xlu0 %819
        %v822 = vsel %vm575, %v816, %v820
        %823 = vrot.lane.b32.xlu0 %v811, 127
        %v824 = vpop.permute.xlu0 %823
        %v826 = vsel %vm575, %v824, %v820
        %827 = vrot.lane.b32.xlu0 %v741, 1
        %v828 = vpop.permute.xlu0 %827
        %v830 = vsel %vm584, %v741, %v828
        %831 = vrot.lane.b32.xlu0 %v741, 113
        %v832 = vpop.permute.xlu0 %831
        %834 = vrot.lane.b32.xlu0 %v811, 1
        %v835 = vpop.permute.xlu0 %834
        %v837 = vsel %vm584, %v832, %v835
        %vm838 = vcmp.lt.s32.totalorder %v298, %v670
        %vm839 = vcmp.lt.s32.totalorder %v594, %v670
        %v840 = vsel %vm838, %v741, 0.0
        %v841 = vsub.s32 %v670, 2
        %vm842 = vcmp.ge.s32.totalorder %v298, %v841
        %v843 = vsel %vm842, %v822, 0.0
        %v844 = vadd.f32 %v840, %v843
        %v845 = vsel %vm839, %v811, 0.0
        %vm846 = vcmp.ge.s32.totalorder %v594, %v841
        %v847 = vsel %vm846, %v826, 0.0
        %v848 = vadd.f32 %v845, %v847
        %v849 = vsel %vm605, %v848, -1e+30
        %v850 = vsel %vm302, %v844, -inf
        %851 = vmax.xlane.f32.xlu0 %v850
        %v852 = vpop.xlane.xlu0 %851
        %v853 = vsel %vm302, %v849, -inf
        %854 = vmax.xlane.f32.xlu0 %v853
        %v855 = vpop.xlane.xlu0 %854
        %v856 = vmax.f32 %v852, %v855
        %v857 = vsub.f32 %v844, %v856
        %v858 = vmul.f32 %v857, 1.442695
        %v859 = vpow.pop %v858
        %v860 = vsel %vm302, %v859, 0.0
        %861 = vadd.xlane.f32.xlu0 %v860
        %v862 = vpop.xlane.xlu0 %861
        %v863 = vsub.f32 %v849, %v856
        %v864 = vmul.f32 %v863, 1.442695
        %v865 = vpow.pop %v864
        %v866 = vsel %vm302, %v865, 0.0
        %867 = vadd.xlane.f32.xlu0 %v866
        %v868 = vpop.xlane.xlu0 %867
        %v869 = vadd.f32 %v862, %v868
        %v870 = vlog2.pop %v869
        %v871 = vmul.f32 %v870, 0.6931472
        %v872 = vadd.f32 %v856, %v871
        %vm873 = vcmp.le.s32.totalorder %v298, %v670
        %v874 = vsel %vm873, %v830, 0.0
        %v875 = vadd.f32 %v874, %v741
        %vm876 = vcmp.le.s32.totalorder %v594, %v670
        %v877 = vsel %vm876, %v837, 0.0
        %v878 = vadd.f32 %v877, %v811
        %v879 = vsub.s32 %v670, 1
        %vm880 = vcmp.ge.s32.totalorder %v298, %v879
        %vm881 = vmand %vm880, %vm638
        %vm882 = vcmp.ge.s32.totalorder %v594, %v879
        %v883 = vsel %vm838, %v402, 0.0
        %v884 = vsel %vm839, %v402, 0.0
        %v885 = vsel %vm881, %v402, 0.0
        %v886 = vsel %vm882, %v402, 0.0
        %v887 = vadd.f32 %v883, %v884
        %v888 = vadd.f32 %v887, %v885
        %v889 = vadd.f32 %v888, %v886
        %v890 = vmul.f32 %v872, %v889
        %v891 = vmul.f32 %v844, %v883
        %v892 = vsub.f32 %v890, %v891
        %v893 = vmul.f32 %v848, %v884
        %v894 = vsub.f32 %v892, %v893
        %v895 = vmul.f32 %v875, %v885
        %v896 = vsub.f32 %v894, %v895
        %v897 = vmul.f32 %v878, %v886
        %v898 = vsub.f32 %v896, %v897
        %v899 = vsel %vm302, %v898, 0.0
        %900 = vadd.xlane.f32.xlu0 %v899
        %v901 = vpop.xlane.xlu0 %900
        %v902 = vrot.slane %v901, 4
        %v903 = vadd.f32 %v901, %v902
        %v904 = vrot.slane %v903, 2
        %v905 = vadd.f32 %v903, %v904
        %v906 = vrot.slane %v905, 1
        %v907 = vadd.f32 %v905, %v906
        %s908 = vtos %v907
        %s909 = sadd.f32 %s666, %s908
        %vm910 = vcmp.eq.s32.totalorder %v296, 0
        %vm911 = vcmp.eq.s32.totalorder %v298, 0
        %vm912 = vmand %vm910, %vm911
        %vm913 = vcmp.eq.s32.totalorder %v298, 1
        %vm914 = vmand %vm910, %vm913
        %v915 = vstv %s412
        %v916 = vsel %vm914, %v915, 0.0
        %v917 = vstv %s909
        %v918 = vsel %vm912, %v917, %v916
        %919 = vst [vmem:[%s281] sm:$0xff] %v918
        %s920 = sand.u32 %s170, 1
        %s921 = scalar_lea.sflag [#allocation4], %s920
        %s922 = sand.u32 %s170, 1
        %s923 = smul.addr %s922, 8
        %s924 = scalar_lea.vmem [#allocation5], %s923
        // Predicated region
        $region49: #{tpu_custom_call.1} parent=43 // pred_check
          %p925 = pneg %p180
        $region50: #{tpu_custom_call.1} parent=43 // pred_check_branch
          %927 = sbr.rel (%p925) target = $region52
        $region51: #{tpu_custom_call.1} parent=43 // pred_region
          %s929 = ssub.s32 128, 128
          %930 = vsyncadd %s921, %s929
          %s931 = smul.addr %s21, 128
          %s932 = scalar_lea.hbm %s6, %s931
          %s934 = sshll.u32 %s924, 4
          %s935 = int_to_ptr.vmem [resolvable:$true] %s934
          %937 = dma.vmem_to_hbm [thread:$0]  %s935, 128, %s932, %s921
        $region52: #{tpu_custom_call.1} parent=43 // pred_fallthru
          _
      $region44: #{tpu_custom_call.1} parent=5 // pred_fallthru
        _
      %p938 = scmp.le.s32.totalorder 2, %s16
      // Predicated region
      $region53: #{tpu_custom_call.1} parent=5 // pred_check
        %p939 = pneg %p938
      $region54: #{tpu_custom_call.1} parent=5 // pred_check_branch
        %941 = sbr.rel (%p939) target = $region56
      $region55: #{tpu_custom_call.1} parent=5 // pred_region
        %s942 = ssub.s32 %s16, 2
        // Predicated region
        $region57: #{tpu_custom_call.1} parent=55 // pred_check
          %p943 = pneg %p186
        $region58: #{tpu_custom_call.1} parent=55 // pred_check_branch
          %945 = sbr.rel (%p943) target = $region60
        $region59: #{tpu_custom_call.1} parent=55 // pred_region
          %s946 = sand.u32 %s171, 1
          %s947 = scalar_lea.sflag [#allocation4], %s946
          %s948 = sand.u32 %s171, 1
          %s949 = smul.addr %s948, 8
          %s950 = scalar_lea.vmem [#allocation5], %s949
          %951 = dma.done %s947, 128
        $region60: #{tpu_custom_call.1} parent=55 // pred_fallthru
          _
      $region56: #{tpu_custom_call.1} parent=5 // pred_fallthru
        _
    $region6: #{tpu_custom_call.1} parent=1 // loop_footer
      %s20 = sadd.s32 1, %s16
    $region7: #{tpu_custom_call.1} parent=1 // loop_footer_branch
      %15 = sbr.rel target = $region3
    $region8: #{tpu_custom_call.1} parent=1 // loop_exit
      _
    %952 = vsyncpa [#allocation3], 1
    %s953 = scalar_lea.sflag [#allocation3], 1
    %954 = vsyncpa %s953, 1
    %955 = vsyncpa [#allocation4], 1
    %s956 = scalar_lea.sflag [#allocation4], 1
    %957 = vsyncpa %s956, 1

// kernel: tpu_custom_call.1
$region0: #{tpu_custom_call.1}
  #allocation0 [shape = 'u32[]', space=smem, size = 0x4, offset = 0x4, fixed_abs, tag = 'smem constant byte address 0x4 - core index']
  #allocation1 [shape = 'u32[144,128]{1,0:T(1,128)}', space=vmem, size = 0x12000, scoped, tag = 'internal scratch']
  %s0 = inlined_call_operand.vmem [shape: f32[4,16], index: 0, kind: input, shape index: {}]
  %s1 = inlined_call_operand.hbm [shape: f32[4,16], index: 1, kind: input, shape index: {}]
  %s2 = inlined_call_operand.vmem [shape: f32[16,16], index: 2, kind: input, shape index: {}]
  %s3 = inlined_call_operand.vmem [shape: f32[16,4], index: 3, kind: input, shape index: {}]
  %s4 = inlined_call_operand.vmem [shape: f32[16,4], index: 4, kind: input, shape index: {}]
  %s5 = inlined_call_operand.vmem [shape: f32[16,16], index: 5, kind: input, shape index: {}]
  %s6 = inlined_call_operand.hbm [shape: f32[2,8,128], index: 6, kind: output, shape index: {}]
  %s7 = sld [smem:[#allocation0]]
  $region61: #{tpu_custom_call.1} parent=0
    _
  %s9 = ssub.s32 1, %s7
  %s10 = scalar_select 0, %s9, %s7
  $region1: #{tpu_custom_call.1} parent=0
    #allocation2 [shape = 'u8[2048]{0}', space=vmem, size = 0x800, scoped, tag = 'input window, operand 1, single buffered']
    #allocation3 [shape = 's32[2]{0}', space=sflag, size = 0x8, scoped, tag = 'scoped memory for tpu_custom_call.1']
    #allocation4 [shape = 's32[2]{0}', space=sflag, size = 0x8, scoped, tag = 'scoped memory for tpu_custom_call.1']
    #allocation5 [shape = 'u8[8192]{0}', space=vmem, size = 0x2000, scoped, tag = 'output window, operand 0']
    %11 = vsyncpa [#allocation3], 0
    %12 = vsyncpa [#allocation4], 0
    %s13 = scalar_lea.sflag [#allocation4], 1
    %14 = vsyncpa %s13, 0
    loop: start=0, step=1, limit=4
    $region2: #{tpu_custom_call.1} parent=1 // loop_pre_header
      _
    $region3: #{tpu_custom_call.1} parent=1 // loop_header
      %s16 = sphi 0, %s20
      %p17 = scmp.ge.s32.totalorder %s16, 4
      %s24 = sphi 0, %s24
      %s26 = sphi 0, %s24
      %s27 = sphi 0, %s26
      %s41 = sphi 0, %s27
      %s45 = sphi 0, %s45
      %s47 = sphi 0, %s45
      %s48 = sphi 0, %s47
      %s62 = sphi 0, %s48
      %s66 = sphi 0, %s66
      %s68 = sphi 0, %s66
      %s69 = sphi 0, %s68
      %s83 = sphi 0, %s69
      %s89 = sphi 0, %s91
      %s92 = sphi 0, %s89
      %s93 = sphi 0, %s92
      %s109 = sphi 0, %s93
      %s115 = sphi 0, %s117
      %s118 = sphi 0, %s115
      %s119 = sphi 0, %s118
      %s135 = sphi 0, %s119
      %s141 = sphi 0, %s143
      %s144 = sphi 0, %s141
      %s145 = sphi 0, %s144
      %s161 = sphi 0, %s145
      %s167 = sphi 0, %s169
      %s170 = sphi 0, %s167
      %s171 = sphi 0, %s170
      %s187 = sphi 0, %s171
    $region4: #{tpu_custom_call.1} parent=1 // loop_header_branch
      %19 = sbr.rel (%p17) target = $region8
    $region5: #{tpu_custom_call.1} parent=1 // loop_body
      %s21 = ssub.s32 %s16, 1
      %s22 = ssub.s32 %s16, 2
      %s23 = sadd.s32 %s16, 1
      %s25 = sadd.s32 %s24, 1
      %p28 = scmp.eq.s32.totalorder %s16, 1
      %p29 = scmp.ne.s32.totalorder %s24, %s26
      %p30 = scmp.eq.s32.totalorder %s16, 0
      %p31 = por %p29, %p30
      %p32 = scmp.ne.s32.totalorder %s24, %s26
      %p33 = scmp.eq.s32.totalorder %s21, 1
      %p34 = por %p32, %p33
      %p35 = scmp.ne.s32.totalorder %s26, %s27
      %p36 = scmp.eq.s32.totalorder %s21, 0
      %p37 = por %p35, %p36
      %p38 = scmp.ne.s32.totalorder %s26, %s27
      %p39 = scmp.eq.s32.totalorder %s22, 1
      %p40 = por %p38, %p39
      %p42 = scmp.ne.s32.totalorder %s27, %s41
      %p43 = scmp.eq.s32.totalorder %s22, 0
      %p44 = por %p42, %p43
      %s46 = sadd.s32 %s45, 1
      %p49 = scmp.eq.s32.totalorder %s16, 1
      %p50 = scmp.ne.s32.totalorder %s45, %s47
      %p51 = scmp.eq.s32.totalorder %s16, 0
      %p52 = por %p50, %p51
      %p53 = scmp.ne.s32.totalorder %s45, %s47
      %p54 = scmp.eq.s32.totalorder %s21, 1
      %p55 = por %p53, %p54
      %p56 = scmp.ne.s32.totalorder %s47, %s48
      %p57 = scmp.eq.s32.totalorder %s21, 0
      %p58 = por %p56, %p57
      %p59 = scmp.ne.s32.totalorder %s47, %s48
      %p60 = scmp.eq.s32.totalorder %s22, 1
      %p61 = por %p59, %p60
      %p63 = scmp.ne.s32.totalorder %s48, %s62
      %p64 = scmp.eq.s32.totalorder %s22, 0
      %p65 = por %p63, %p64
      %s67 = sadd.s32 %s66, 1
      %p70 = scmp.eq.s32.totalorder %s16, 1
      %p71 = scmp.ne.s32.totalorder %s66, %s68
      %p72 = scmp.eq.s32.totalorder %s16, 0
      %p73 = por %p71, %p72
      %p74 = scmp.ne.s32.totalorder %s66, %s68
      %p75 = scmp.eq.s32.totalorder %s21, 1
      %p76 = por %p74, %p75
      %p77 = scmp.ne.s32.totalorder %s68, %s69
      %p78 = scmp.eq.s32.totalorder %s21, 0
      %p79 = por %p77, %p78
      %p80 = scmp.ne.s32.totalorder %s68, %s69
      %p81 = scmp.eq.s32.totalorder %s22, 1
      %p82 = por %p80, %p81
      %p84 = scmp.ne.s32.totalorder %s69, %s83
      %p85 = scmp.eq.s32.totalorder %s22, 0
      %p86 = por %p84, %p85
      %s87 = ssub.s32 %s16, %s23
      %p88 = scmp.eq.s32.totalorder %s87, 0
      %s90 = sadd.s32 %s89, 1
      %s91 = scalar_select %p88, %s89, %s90
      %p94 = pneg %p88
      %p95 = scmp.eq.s32.totalorder %s16, 1
      %p96 = por %p94, %p95
      %p97 = scmp.ne.s32.totalorder %s89, %s92
      %p98 = scmp.eq.s32.totalorder %s16, 0
      %p99 = por %p97, %p98
      %p100 = scmp.ne.s32.totalorder %s89, %s92
      %p101 = scmp.eq.s32.totalorder %s21, 1
      %p102 = por %p100, %p101
      %p103 = scmp.ne.s32.totalorder %s92, %s93
      %p104 = scmp.eq.s32.totalorder %s21, 0
      %p105 = por %p103, %p104
      %p106 = scmp.ne.s32.totalorder %s92, %s93
      %p107 = scmp.eq.s32.totalorder %s22, 1
      %p108 = por %p106, %p107
      %p110 = scmp.ne.s32.totalorder %s93, %s109
      %p111 = scmp.eq.s32.totalorder %s22, 0
      %p112 = por %p110, %p111
      %s113 = ssub.s32 %s16, %s23
      %p114 = scmp.eq.s32.totalorder %s113, 0
      %s116 = sadd.s32 %s115, 1
      %s117 = scalar_select %p114, %s115, %s116
      %p120 = pneg %p114
      %p121 = scmp.eq.s32.totalorder %s16, 1
      %p122 = por %p120, %p121
      %p123 = scmp.ne.s32.totalorder %s115, %s118
      %p124 = scmp.eq.s32.totalorder %s16, 0
      %p125 = por %p123, %p124
      %p126 = scmp.ne.s32.totalorder %s115, %s118
      %p127 = scmp.eq.s32.totalorder %s21, 1
      %p128 = por %p126, %p127
      %p129 = scmp.ne.s32.totalorder %s118, %s119
      %p130 = scmp.eq.s32.totalorder %s21, 0
      %p131 = por %p129, %p130
      %p132 = scmp.ne.s32.totalorder %s118, %s119
      %p133 = scmp.eq.s32.totalorder %s22, 1
      %p134 = por %p132, %p133
      %p136 = scmp.ne.s32.totalorder %s119, %s135
      %p137 = scmp.eq.s32.totalorder %s22, 0
      %p138 = por %p136, %p137
      %s139 = ssub.s32 %s16, %s23
      %p140 = scmp.eq.s32.totalorder %s139, 0
      %s142 = sadd.s32 %s141, 1
      %s143 = scalar_select %p140, %s141, %s142
      %p146 = pneg %p140
      %p147 = scmp.eq.s32.totalorder %s16, 1
      %p148 = por %p146, %p147
      %p149 = scmp.ne.s32.totalorder %s141, %s144
      %p150 = scmp.eq.s32.totalorder %s16, 0
      %p151 = por %p149, %p150
      %p152 = scmp.ne.s32.totalorder %s141, %s144
      %p153 = scmp.eq.s32.totalorder %s21, 1
      %p154 = por %p152, %p153
      %p155 = scmp.ne.s32.totalorder %s144, %s145
      %p156 = scmp.eq.s32.totalorder %s21, 0
      %p157 = por %p155, %p156
      %p158 = scmp.ne.s32.totalorder %s144, %s145
      %p159 = scmp.eq.s32.totalorder %s22, 1
      %p160 = por %p158, %p159
      %p162 = scmp.ne.s32.totalorder %s145, %s161
      %p163 = scmp.eq.s32.totalorder %s22, 0
      %p164 = por %p162, %p163
      %s165 = ssub.s32 %s16, %s23
      %p166 = scmp.eq.s32.totalorder %s165, 0
      %s168 = sadd.s32 %s167, 1
      %s169 = scalar_select %p166, %s167, %s168
      %p172 = pneg %p166
      %p173 = scmp.eq.s32.totalorder %s16, 1
      %p174 = por %p172, %p173
      %p175 = scmp.ne.s32.totalorder %s167, %s170
      %p176 = scmp.eq.s32.totalorder %s16, 0
      %p177 = por %p175, %p176
      %p178 = scmp.ne.s32.totalorder %s167, %s170
      %p179 = scmp.eq.s32.totalorder %s21, 1
      %p180 = por %p178, %p179
      %p181 = scmp.ne.s32.totalorder %s170, %s171
      %p182 = scmp.eq.s32.totalorder %s21, 0
      %p183 = por %p181, %p182
      %p184 = scmp.ne.s32.totalorder %s170, %s171
      %p185 = scmp.eq.s32.totalorder %s22, 1
      %p186 = por %p184, %p185
      %p188 = scmp.ne.s32.totalorder %s171, %s187
      %p189 = scmp.eq.s32.totalorder %s22, 0
      %p190 = por %p188, %p189
      %p191 = scmp.le.s32.totalorder 1, %s16
      %p192 = scmp.lt.s32.totalorder %s16, 3
      %p193 = pnand %p191, %p192
      %p194 = pneg %p193
      // Predicated region
      $region9: #{tpu_custom_call.1} parent=5 // pred_check
        _
      $region10: #{tpu_custom_call.1} parent=5 // pred_check_branch
        %196 = sbr.rel (%p193) target = $region12
      $region11: #{tpu_custom_call.1} parent=5 // pred_region
        %s197 = ssub.s32 %s16, 1
        // Predicated region
        $region13: #{tpu_custom_call.1} parent=11 // pred_check
          %p198 = pneg %p37
        $region14: #{tpu_custom_call.1} parent=11 // pred_check_branch
          %200 = sbr.rel (%p198) target = $region16
        $region15: #{tpu_custom_call.1} parent=11 // pred_region
          _
        $region16: #{tpu_custom_call.1} parent=11 // pred_fallthru
          _
        // Predicated region
        $region17: #{tpu_custom_call.1} parent=11 // pred_check
          %p201 = pneg %p58
        $region18: #{tpu_custom_call.1} parent=11 // pred_check_branch
          %203 = sbr.rel (%p201) target = $region20
        $region19: #{tpu_custom_call.1} parent=11 // pred_region
          %s205 = ssub.s32 64, 64
          %206 = vsyncadd [#allocation3], %s205
          %s208 = sshll.u32 [#allocation2], 4
          %s209 = int_to_ptr.vmem [resolvable:$true] %s208
          %211 = dma.hbm_to_vmem [thread:$0]  %s1, 64, %s209, [#allocation3]
        $region20: #{tpu_custom_call.1} parent=11 // pred_fallthru
          _
        // Predicated region
        $region21: #{tpu_custom_call.1} parent=11 // pred_check
          %p212 = pneg %p79
        $region22: #{tpu_custom_call.1} parent=11 // pred_check_branch
          %214 = sbr.rel (%p212) target = $region24
        $region23: #{tpu_custom_call.1} parent=11 // pred_region
          _
        $region24: #{tpu_custom_call.1} parent=11 // pred_fallthru
          _
      $region12: #{tpu_custom_call.1} parent=5 // pred_fallthru
        _
      %p215 = scmp.lt.s32.totalorder %s16, 2
      // Predicated region
      $region25: #{tpu_custom_call.1} parent=5 // pred_check
        %p216 = pneg %p215
      $region26: #{tpu_custom_call.1} parent=5 // pred_check_branch
        %218 = sbr.rel (%p216) target = $region28
      $region27: #{tpu_custom_call.1} parent=5 // pred_region
        // Predicated region
        $region29: #{tpu_custom_call.1} parent=27 // pred_check
          %p219 = pneg %p99
        $region30: #{tpu_custom_call.1} parent=27 // pred_check_branch
          %221 = sbr.rel (%p219) target = $region32
        $region31: #{tpu_custom_call.1} parent=27 // pred_region
          %p222 = scmp.lt.s32.totalorder %s16, 1
          %s223 = scalar_select %p222, %s16, 1
          %s224 = smul.addr %s223, 8
          %s225 = scalar_lea.vmem %s3, %s224
        $region32: #{tpu_custom_call.1} parent=27 // pred_fallthru
          _
        // Predicated region
        $region33: #{tpu_custom_call.1} parent=27 // pred_check
          %p226 = pneg %p125
        $region34: #{tpu_custom_call.1} parent=27 // pred_check_branch
          %228 = sbr.rel (%p226) target = $region36
        $region35: #{tpu_custom_call.1} parent=27 // pred_region
          %p229 = scmp.lt.s32.totalorder %s16, 1
          %s230 = scalar_select %p229, %s16, 1
          %s231 = smul.addr %s230, 8
          %s232 = scalar_lea.vmem %s4, %s231
        $region36: #{tpu_custom_call.1} parent=27 // pred_fallthru
          _
        // Predicated region
        $region37: #{tpu_custom_call.1} parent=27 // pred_check
          %p233 = pneg %p151
        $region38: #{tpu_custom_call.1} parent=27 // pred_check_branch
          %235 = sbr.rel (%p233) target = $region40
        $region39: #{tpu_custom_call.1} parent=27 // pred_region
          %p236 = scmp.lt.s32.totalorder %s16, 1
          %s237 = scalar_select %p236, %s16, 1
          %s238 = smul.addr %s237, 8
          %s239 = scalar_lea.vmem %s5, %s238
        $region40: #{tpu_custom_call.1} parent=27 // pred_fallthru
          _
      $region28: #{tpu_custom_call.1} parent=5 // pred_fallthru
        _
      %p240 = scmp.le.s32.totalorder 1, %s16
      %p241 = scmp.lt.s32.totalorder %s16, 3
      %p242 = pnand %p240, %p241
      %p243 = pneg %p242
      // Predicated region
      $region41: #{tpu_custom_call.1} parent=5 // pred_check
        _
      $region42: #{tpu_custom_call.1} parent=5 // pred_check_branch
        %245 = sbr.rel (%p242) target = $region44
      $region43: #{tpu_custom_call.1} parent=5 // pred_region
        %s246 = ssub.s32 %s16, 1
        // Predicated region
        $region45: #{tpu_custom_call.1} parent=43 // pred_check
          %p247 = pneg %p58
        $region46: #{tpu_custom_call.1} parent=43 // pred_check_branch
          %249 = sbr.rel (%p247) target = $region48
        $region47: #{tpu_custom_call.1} parent=43 // pred_region
          %250 = dma.done [#allocation3], 64
        $region48: #{tpu_custom_call.1} parent=43 // pred_fallthru
          _
        %p251 = pneg %p37
        %p252 = pneg %p34
        %p253 = pneg %p58
        %p254 = pneg %p55
        %p255 = pneg %p79
        %p256 = pneg %p76
        %p257 = scmp.lt.s32.totalorder %s21, 1
        %s258 = scalar_select %p257, %s21, 1
        %s259 = smul.addr %s258, 8
        %s260 = scalar_lea.vmem %s3, %s259
        %p261 = pneg %p105
        %p262 = pneg %p102
        %p263 = scmp.lt.s32.totalorder %s21, 1
        %s264 = scalar_select %p263, %s21, 1
        %s265 = smul.addr %s264, 8
        %s266 = scalar_lea.vmem %s4, %s265
        %p267 = pneg %p131
        %p268 = pneg %p128
        %p269 = scmp.lt.s32.totalorder %s21, 1
        %s270 = scalar_select %p269, %s21, 1
        %s271 = smul.addr %s270, 8
        %s272 = scalar_lea.vmem %s5, %s271
        %p273 = pneg %p157
        %p274 = pneg %p154
        %p275 = pneg %p183
        %p276 = pneg %p180
        %s277 = sand.u32 %s170, 1
        %s278 = scalar_lea.sflag [#allocation4], %s277
        %s279 = sand.u32 %s170, 1
        %s280 = smul.addr %s279, 8
        %s281 = scalar_lea.vmem [#allocation5], %s280
        %p282 = scmp.lt.s32.totalorder %s21, 1
        %s283 = scalar_select %p282, %s21, 1
        %s284 = smul.addr %s283, 8
        %s285 = scalar_lea.vmem %s3, %s284
        %p286 = scmp.lt.s32.totalorder %s21, 1
        %s287 = scalar_select %p286, %s21, 1
        %s288 = smul.addr %s287, 8
        %s289 = scalar_lea.vmem %s4, %s288
        %p290 = scmp.lt.s32.totalorder %s21, 1
        %s291 = scalar_select %p290, %s21, 1
        %s292 = smul.addr %s291, 8
        %s293 = scalar_lea.vmem %s5, %s292
        %s294 = smul.u32 %s21, 8
        %v295 = vlaneseq
        %v296 = vshrl.u32 %v295, 7
        %v297 = vlaneseq
        %v298 = vand.u32 %v297, 127
        %v299 = vld [vmem:[%s2] sm:$0xff]
        %v300 = vld [vmem:[%s2 + $0x8] sm:$0xff]
        %v301 = vld [vmem:[%s293] sm:$0xff]
        %vm302 = vcmask 130048
        %v304 = vsel %vm302, %v301, 0
        %306 = vmatprep.subr.mxu0 0.0
        %307 = vmatpush1.msra.mxu0 %v299
        %308 = vmatprep.subr.mxu0 0.0
        %309 = vmatpush1.msra.mxu0 %v300
        %310 = vmatprep.subr.mxu0 0.0
        %311 = vmatpush1.msra.mxu0 0.0
        %312 = vmatprep.subr.mxu0 0.0
        %313 = vmatpush1.msra.mxu0 0.0
        %314 = vmatprep.subr.mxu0 0.0
        %315 = vmatpush1.msra.mxu0 0.0
        %316 = vmatprep.subr.mxu0 0.0
        %317 = vmatpush1.msra.mxu0 0.0
        %318 = vmatprep.subr.mxu0 0.0
        %319 = vmatpush1.msra.mxu0 0.0
        %320 = vmatprep.subr.mxu0 0.0
        %321 = vmatpush1.msra.mxu0 0.0
        %322 = vmatprep.subr.mxu0 0.0
        %323 = vmatpush1.msra.mxu0 0.0
        %324 = vmatprep.subr.mxu0 0.0
        %325 = vmatpush1.msra.mxu0 0.0
        %326 = vmatprep.subr.mxu0 0.0
        %327 = vmatpush1.msra.mxu0 0.0
        %328 = vmatprep.subr.mxu0 0.0
        %329 = vmatpush1.msra.mxu0 0.0
        %330 = vmatprep.subr.mxu0 0.0
        %331 = vmatpush1.msra.mxu0 0.0
        %332 = vmatprep.subr.mxu0 0.0
        %333 = vmatpush1.msra.mxu0 0.0
        %334 = vmatprep.subr.mxu0 0.0
        %335 = vmatpush1.msra.mxu0 0.0
        %336 = vmatprep.subr.mxu0 0.0
        %337 = vmatpush1.msra.mxu0 0.0
        %338 = vmatprep.subr.mxu0 0.0
        %339 = vmatpush1.msra.mxu0 0.0
        %340 = vmatprep.subr.mxu0 0.0
        %341 = vmatpush1.msra.mxu0 0.0
        %342 = vmatprep.subr.mxu0 0.0
        %343 = vmatpush1.msra.mxu0 0.0
        %344 = vmatprep.subr.mxu0 0.0
        %345 = vmatpush1.msra.mxu0 0.0
        %346 = vmatprep.subr.mxu0 0.0
        %347 = vmatpush1.msra.mxu0 0.0
        %348 = vmatprep.subr.mxu0 0.0
        %349 = vmatpush1.msra.mxu0 0.0
        %350 = vmatprep.subr.mxu0 0.0
        %351 = vmatpush1.msra.mxu0 0.0
        %352 = vmatprep.subr.mxu0 0.0
        %353 = vmatpush1.msra.mxu0 0.0
        %354 = vmatprep.subr.mxu0 0.0
        %355 = vmatpush1.msra.mxu0 0.0
        %356 = vmatprep.subr.mxu0 0.0
        %357 = vmatpush1.msra.mxu0 0.0
        %358 = vmatprep.subr.mxu0 0.0
        %359 = vmatpush1.msra.mxu0 0.0
        %360 = vmatprep.subr.mxu0 0.0
        %361 = vmatpush1.msra.mxu0 0.0
        %362 = vmatprep.subr.mxu0 0.0
        %363 = vmatpush1.msra.mxu0 0.0
        %364 = vmatprep.subr.mxu0 0.0
        %365 = vmatpush1.msra.mxu0 0.0
        %366 = vmatprep.subr.mxu0 0.0
        %367 = vmatpush1.msra.mxu0 0.0
        %368 = vmatprep.subr.mxu0 0.0
        %369 = vmatpush1.msra.mxu0 0.0
        %370 = vmatprep.mubr.f32.mxu0 0.0
        %371 = vmatmul.mubr.f32.gmra.mrb[0].mxu0 %v304
        %v372 = vpop.f32.mrb[0].mxu0
        %v373 = vadd.f32 0.0, %v372
        %v374 = vpop.f32.mrb[0].mxu0
        %375 = vdwg.mxu0
        %v376 = vmul.f32 %v299, %v299
        %v377 = vmul.f32 %v300, %v300
        %v378 = vsel %vm302, %v376, 0.0
        %v379 = vsel %vm302, %v377, 0.0
        %v380 = vadd.f32 %v378, %v379
        %v381 = vrot.slane %v380, 4
        %v382 = vadd.f32 %v380, %v381
        %v383 = vrot.slane %v382, 2
        %v384 = vadd.f32 %v382, %v383
        %v385 = vrot.slane %v384, 1
        %v386 = vadd.f32 %v384, %v385
        %v387 = vmul.f32 %v301, %v301
        %v388 = vsel %vm302, %v387, 0.0
        %389 = vadd.xlane.f32.xlu0 %v388
        %v390 = vpop.xlane.xlu0 %389
        %v391 = vadd.f32 %v390, %v386
        %v392 = vmul.f32 %v373, 2.0
        %v393 = vsub.f32 %v391, %v392
        %v394 = vmul.f32 %v393, 0.05
        %v395 = vmul.f32 %v394, 1.442695
        %v396 = vpow.pop %v395
        %v397 = vadd.f32 %v396, 1.0
        %v398 = vrcp.pop %v397
        %v399 = vstv %s294
        %v400 = vadd.s32 %v296, %v399
        %vm401 = vcmp.lt.s32.totalorder %v400, 16
        %v402 = vsel %vm401, %v398, 0.0
        %v403 = vsel %vm302, %v402, 0.0
        %404 = vadd.xlane.f32.xlu0 %v403
        %v405 = vpop.xlane.xlu0 %404
        %v406 = vrot.slane %v405, 4
        %v407 = vadd.f32 %v405, %v406
        %v408 = vrot.slane %v407, 2
        %v409 = vadd.f32 %v407, %v408
        %v410 = vrot.slane %v409, 1
        %v411 = vadd.f32 %v409, %v410
        %s412 = vtos %v411
        %v413 = vld [vmem:[%s0] sm:$0xf]
        %v414 = vld [vmem:[#allocation2] sm:$0xf]
        %v415 = vld [vmem:[%s285] sm:$0xff]
        %vm416 = vcmask 31744
        %v418 = vsel %vm416, %v415, 0
        %vm420 = vcmask 1043456
        %v422 = vsel %vm420, %v413, 0
        %424 = vmatprep.subr.mxu0 0.0
        %425 = vmatpush1.msra.mxu0 %v422
        %426 = vmatprep.subr.mxu0 0.0
        %427 = vmatpush1.msra.mxu0 0.0
        %428 = vmatprep.subr.mxu0 0.0
        %429 = vmatpush1.msra.mxu0 0.0
        %430 = vmatprep.subr.mxu0 0.0
        %431 = vmatpush1.msra.mxu0 0.0
        %432 = vmatprep.subr.mxu0 0.0
        %433 = vmatpush1.msra.mxu0 0.0
        %434 = vmatprep.subr.mxu0 0.0
        %435 = vmatpush1.msra.mxu0 0.0
        %436 = vmatprep.subr.mxu0 0.0
        %437 = vmatpush1.msra.mxu0 0.0
        %438 = vmatprep.subr.mxu0 0.0
        %439 = vmatpush1.msra.mxu0 0.0
        %440 = vmatprep.subr.mxu0 0.0
        %441 = vmatpush1.msra.mxu0 0.0
        %442 = vmatprep.subr.mxu0 0.0
        %443 = vmatpush1.msra.mxu0 0.0
        %444 = vmatprep.subr.mxu0 0.0
        %445 = vmatpush1.msra.mxu0 0.0
        %446 = vmatprep.subr.mxu0 0.0
        %447 = vmatpush1.msra.mxu0 0.0
        %448 = vmatprep.subr.mxu0 0.0
        %449 = vmatpush1.msra.mxu0 0.0
        %450 = vmatprep.subr.mxu0 0.0
        %451 = vmatpush1.msra.mxu0 0.0
        %452 = vmatprep.subr.mxu0 0.0
        %453 = vmatpush1.msra.mxu0 0.0
        %454 = vmatprep.subr.mxu0 0.0
        %455 = vmatpush1.msra.mxu0 0.0
        %456 = vmatprep.subr.mxu0 0.0
        %457 = vmatpush1.msra.mxu0 0.0
        %458 = vmatprep.subr.mxu0 0.0
        %459 = vmatpush1.msra.mxu0 0.0
        %460 = vmatprep.subr.mxu0 0.0
        %461 = vmatpush1.msra.mxu0 0.0
        %462 = vmatprep.subr.mxu0 0.0
        %463 = vmatpush1.msra.mxu0 0.0
        %464 = vmatprep.subr.mxu0 0.0
        %465 = vmatpush1.msra.mxu0 0.0
        %466 = vmatprep.subr.mxu0 0.0
        %467 = vmatpush1.msra.mxu0 0.0
        %468 = vmatprep.subr.mxu0 0.0
        %469 = vmatpush1.msra.mxu0 0.0
        %470 = vmatprep.subr.mxu0 0.0
        %471 = vmatpush1.msra.mxu0 0.0
        %472 = vmatprep.subr.mxu0 0.0
        %473 = vmatpush1.msra.mxu0 0.0
        %474 = vmatprep.subr.mxu0 0.0
        %475 = vmatpush1.msra.mxu0 0.0
        %476 = vmatprep.subr.mxu0 0.0
        %477 = vmatpush1.msra.mxu0 0.0
        %478 = vmatprep.subr.mxu0 0.0
        %479 = vmatpush1.msra.mxu0 0.0
        %480 = vmatprep.subr.mxu0 0.0
        %481 = vmatpush1.msra.mxu0 0.0
        %482 = vmatprep.subr.mxu0 0.0
        %483 = vmatpush1.msra.mxu0 0.0
        %484 = vmatprep.subr.mxu0 0.0
        %485 = vmatpush1.msra.mxu0 0.0
        %486 = vmatprep.subr.mxu0 0.0
        %487 = vmatpush1.msra.mxu0 0.0
        %488 = vmatprep.mubr.f32.mxu0 0.0
        %489 = vmatmul.mubr.f32.gmra.mrb[0].mxu0 %v418
        %v490 = vpop.f32.mrb[0].mxu0
        %v491 = vadd.f32 0.0, %v490
        %v492 = vpop.f32.mrb[0].mxu0
        %493 = vdwg.mxu0
        %v495 = vsel %vm420, %v414, 0
        %497 = vmatprep.subr.mxu0 0.0
        %498 = vmatpush1.msra.mxu0 %v495
        %499 = vmatprep.subr.mxu0 0.0
        %500 = vmatpush1.msra.mxu0 0.0
        %501 = vmatprep.subr.mxu0 0.0
        %502 = vmatpush1.msra.mxu0 0.0
        %503 = vmatprep.subr.mxu0 0.0
        %504 = vmatpush1.msra.mxu0 0.0
        %505 = vmatprep.subr.mxu0 0.0
        %506 = vmatpush1.msra.mxu0 0.0
        %507 = vmatprep.subr.mxu0 0.0
        %508 = vmatpush1.msra.mxu0 0.0
        %509 = vmatprep.subr.mxu0 0.0
        %510 = vmatpush1.msra.mxu0 0.0
        %511 = vmatprep.subr.mxu0 0.0
        %512 = vmatpush1.msra.mxu0 0.0
        %513 = vmatprep.subr.mxu0 0.0
        %514 = vmatpush1.msra.mxu0 0.0
        %515 = vmatprep.subr.mxu0 0.0
        %516 = vmatpush1.msra.mxu0 0.0
        %517 = vmatprep.subr.mxu0 0.0
        %518 = vmatpush1.msra.mxu0 0.0
        %519 = vmatprep.subr.mxu0 0.0
        %520 = vmatpush1.msra.mxu0 0.0
        %521 = vmatprep.subr.mxu0 0.0
        %522 = vmatpush1.msra.mxu0 0.0
        %523 = vmatprep.subr.mxu0 0.0
        %524 = vmatpush1.msra.mxu0 0.0
        %525 = vmatprep.subr.mxu0 0.0
        %526 = vmatpush1.msra.mxu0 0.0
        %527 = vmatprep.subr.mxu0 0.0
        %528 = vmatpush1.msra.mxu0 0.0
        %529 = vmatprep.subr.mxu0 0.0
        %530 = vmatpush1.msra.mxu0 0.0
        %531 = vmatprep.subr.mxu0 0.0
        %532 = vmatpush1.msra.mxu0 0.0
        %533 = vmatprep.subr.mxu0 0.0
        %534 = vmatpush1.msra.mxu0 0.0
        %535 = vmatprep.subr.mxu0 0.0
        %536 = vmatpush1.msra.mxu0 0.0
        %537 = vmatprep.subr.mxu0 0.0
        %538 = vmatpush1.msra.mxu0 0.0
        %539 = vmatprep.subr.mxu0 0.0
        %540 = vmatpush1.msra.mxu0 0.0
        %541 = vmatprep.subr.mxu0 0.0
        %542 = vmatpush1.msra.mxu0 0.0
        %543 = vmatprep.subr.mxu0 0.0
        %544 = vmatpush1.msra.mxu0 0.0
        %545 = vmatprep.subr.mxu0 0.0
        %546 = vmatpush1.msra.mxu0 0.0
        %547 = vmatprep.subr.mxu0 0.0
        %548 = vmatpush1.msra.mxu0 0.0
        %549 = vmatprep.subr.mxu0 0.0
        %550 = vmatpush1.msra.mxu0 0.0
        %551 = vmatprep.subr.mxu0 0.0
        %552 = vmatpush1.msra.mxu0 0.0
        %553 = vmatprep.subr.mxu0 0.0
        %554 = vmatpush1.msra.mxu0 0.0
        %555 = vmatprep.subr.mxu0 0.0
        %556 = vmatpush1.msra.mxu0 0.0
        %557 = vmatprep.subr.mxu0 0.0
        %558 = vmatpush1.msra.mxu0 0.0
        %559 = vmatprep.subr.mxu0 0.0
        %560 = vmatpush1.msra.mxu0 0.0
        %561 = vmatprep.mubr.f32.mxu0 0.0
        %562 = vmatmul.mubr.f32.gmra.mrb[0].mxu0 %v418
        %v563 = vpop.f32.mrb[0].mxu0
        %v564 = vadd.f32 0.0, %v563
        %v565 = vpop.f32.mrb[0].mxu0
        %566 = vdwg.mxu0
        %v567 = vadd.s32 %v296, 8
        %v568 = vadd.s32 %v298, 1
        %vm569 = vcmp.eq.s32.totalorder %v296, %v568
        %vm570 = vcmp.eq.s32.totalorder %v567, %v568
        %v571 = vsel %vm569, 1, 0
        %v572 = vsel %vm570, 1, 0
        %v573 = vcvt.s32.f32 %v571
        %v574 = vcvt.s32.f32 %v572
        %v576 = vsel %vm302, %v491, 0
        %578 = vmatprep.subr.mxu0 0.0
        %579 = vmatpush1.msra.mxu0 %v573
        %580 = vmatprep.subr.mxu0 0.0
        %581 = vmatpush1.msra.mxu0 %v574
        %582 = vmatprep.subr.mxu0 0.0
        %583 = vmatpush1.msra.mxu0 0.0
        %584 = vmatprep.subr.mxu0 0.0
        %585 = vmatpush1.msra.mxu0 0.0
        %586 = vmatprep.subr.mxu0 0.0
        %587 = vmatpush1.msra.mxu0 0.0
        %588 = vmatprep.subr.mxu0 0.0
        %589 = vmatpush1.msra.mxu0 0.0
        %590 = vmatprep.subr.mxu0 0.0
        %591 = vmatpush1.msra.mxu0 0.0
        %592 = vmatprep.subr.mxu0 0.0
        %593 = vmatpush1.msra.mxu0 0.0
        %594 = vmatprep.subr.mxu0 0.0
        %595 = vmatpush1.msra.mxu0 0.0
        %596 = vmatprep.subr.mxu0 0.0
        %597 = vmatpush1.msra.mxu0 0.0
        %598 = vmatprep.subr.mxu0 0.0
        %599 = vmatpush1.msra.mxu0 0.0
        %600 = vmatprep.subr.mxu0 0.0
        %601 = vmatpush1.msra.mxu0 0.0
        %602 = vmatprep.subr.mxu0 0.0
        %603 = vmatpush1.msra.mxu0 0.0
        %604 = vmatprep.subr.mxu0 0.0
        %605 = vmatpush1.msra.mxu0 0.0
        %606 = vmatprep.subr.mxu0 0.0
        %607 = vmatpush1.msra.mxu0 0.0
        %608 = vmatprep.subr.mxu0 0.0
        %609 = vmatpush1.msra.mxu0 0.0
        %610 = vmatprep.subr.mxu0 0.0
        %611 = vmatpush1.msra.mxu0 0.0
        %612 = vmatprep.subr.mxu0 0.0
        %613 = vmatpush1.msra.mxu0 0.0
        %614 = vmatprep.subr.mxu0 0.0
        %615 = vmatpush1.msra.mxu0 0.0
        %616 = vmatprep.subr.mxu0 0.0
        %617 = vmatpush1.msra.mxu0 0.0
        %618 = vmatprep.subr.mxu0 0.0
        %619 = vmatpush1.msra.mxu0 0.0
        %620 = vmatprep.subr.mxu0 0.0
        %621 = vmatpush1.msra.mxu0 0.0
        %622 = vmatprep.subr.mxu0 0.0
        %623 = vmatpush1.msra.mxu0 0.0
        %624 = vmatprep.subr.mxu0 0.0
        %625 = vmatpush1.msra.mxu0 0.0
        %626 = vmatprep.subr.mxu0 0.0
        %627 = vmatpush1.msra.mxu0 0.0
        %628 = vmatprep.subr.mxu0 0.0
        %629 = vmatpush1.msra.mxu0 0.0
        %630 = vmatprep.subr.mxu0 0.0
        %631 = vmatpush1.msra.mxu0 0.0
        %632 = vmatprep.subr.mxu0 0.0
        %633 = vmatpush1.msra.mxu0 0.0
        %634 = vmatprep.subr.mxu0 0.0
        %635 = vmatpush1.msra.mxu0 0.0
        %636 = vmatprep.subr.mxu0 0.0
        %637 = vmatpush1.msra.mxu0 0.0
        %638 = vmatprep.subr.mxu0 0.0
        %639 = vmatpush1.msra.mxu0 0.0
        %640 = vmatprep.subr.mxu0 0.0
        %641 = vmatpush1.msra.mxu0 0.0
        %642 = vmatprep.mubr.f32.mxu0 0.0
        %643 = vmatmul.mubr.f32.gmra.mrb[0].mxu0 %v576
        %v644 = vpop.f32.mrb[0].mxu0
        %v645 = vadd.f32 0.0, %v644
        %v646 = vpop.f32.mrb[0].mxu0
        %647 = vdwg.mxu0
        %vm648 = vcmp.eq.s32.totalorder %v298, 15
        %650 = vset.pattern.permute.xlu0 0
        %651 = vperm.xlu0 %650, %v564
        %v652 = vpop.permute.xlu0 %651
        %v654 = vsel %vm648, %v652, %v645
        %v655 = vsel %vm302, %v564, 0
        %657 = vmatprep.subr.mxu0 0.0
        %658 = vmatpush1.msra.mxu0 %v573
        %659 = vmatprep.subr.mxu0 0.0
        %660 = vmatpush1.msra.mxu0 %v574
        %661 = vmatprep.subr.mxu0 0.0
        %662 = vmatpush1.msra.mxu0 0.0
        %663 = vmatprep.subr.mxu0 0.0
        %664 = vmatpush1.msra.mxu0 0.0
        %665 = vmatprep.subr.mxu0 0.0
        %666 = vmatpush1.msra.mxu0 0.0
        %667 = vmatprep.subr.mxu0 0.0
        %668 = vmatpush1.msra.mxu0 0.0
        %669 = vmatprep.subr.mxu0 0.0
        %670 = vmatpush1.msra.mxu0 0.0
        %671 = vmatprep.subr.mxu0 0.0
        %672 = vmatpush1.msra.mxu0 0.0
        %673 = vmatprep.subr.mxu0 0.0
        %674 = vmatpush1.msra.mxu0 0.0
        %675 = vmatprep.subr.mxu0 0.0
        %676 = vmatpush1.msra.mxu0 0.0
        %677 = vmatprep.subr.mxu0 0.0
        %678 = vmatpush1.msra.mxu0 0.0
        %679 = vmatprep.subr.mxu0 0.0
        %680 = vmatpush1.msra.mxu0 0.0
        %681 = vmatprep.subr.mxu0 0.0
        %682 = vmatpush1.msra.mxu0 0.0
        %683 = vmatprep.subr.mxu0 0.0
        %684 = vmatpush1.msra.mxu0 0.0
        %685 = vmatprep.subr.mxu0 0.0
        %686 = vmatpush1.msra.mxu0 0.0
        %687 = vmatprep.subr.mxu0 0.0
        %688 = vmatpush1.msra.mxu0 0.0
        %689 = vmatprep.subr.mxu0 0.0
        %690 = vmatpush1.msra.mxu0 0.0
        %691 = vmatprep.subr.mxu0 0.0
        %692 = vmatpush1.msra.mxu0 0.0
        %693 = vmatprep.subr.mxu0 0.0
        %694 = vmatpush1.msra.mxu0 0.0
        %695 = vmatprep.subr.mxu0 0.0
        %696 = vmatpush1.msra.mxu0 0.0
        %697 = vmatprep.subr.mxu0 0.0
        %698 = vmatpush1.msra.mxu0 0.0
        %699 = vmatprep.subr.mxu0 0.0
        %700 = vmatpush1.msra.mxu0 0.0
        %701 = vmatprep.subr.mxu0 0.0
        %702 = vmatpush1.msra.mxu0 0.0
        %703 = vmatprep.subr.mxu0 0.0
        %704 = vmatpush1.msra.mxu0 0.0
        %705 = vmatprep.subr.mxu0 0.0
        %706 = vmatpush1.msra.mxu0 0.0
        %707 = vmatprep.subr.mxu0 0.0
        %708 = vmatpush1.msra.mxu0 0.0
        %709 = vmatprep.subr.mxu0 0.0
        %710 = vmatpush1.msra.mxu0 0.0
        %711 = vmatprep.subr.mxu0 0.0
        %712 = vmatpush1.msra.mxu0 0.0
        %713 = vmatprep.subr.mxu0 0.0
        %714 = vmatpush1.msra.mxu0 0.0
        %715 = vmatprep.subr.mxu0 0.0
        %716 = vmatpush1.msra.mxu0 0.0
        %717 = vmatprep.subr.mxu0 0.0
        %718 = vmatpush1.msra.mxu0 0.0
        %719 = vmatprep.subr.mxu0 0.0
        %720 = vmatpush1.msra.mxu0 0.0
        %721 = vmatprep.mubr.f32.mxu0 0.0
        %722 = vmatmul.mubr.f32.gmra.mrb[0].mxu0 %v655
        %v723 = vpop.f32.mrb[0].mxu0
        %v724 = vadd.f32 0.0, %v723
        %v725 = vpop.f32.mrb[0].mxu0
        %726 = vdwg.mxu0
        %v727 = vsel %vm648, %v652, %v724
        %v728 = vadd.s32 %v296, 1
        %v729 = vadd.s32 %v567, 1
        %vm730 = vcmp.eq.s32.totalorder %v728, %v298
        %vm731 = vcmp.eq.s32.totalorder %v729, %v298
        %v732 = vsel %vm730, 1, 0
        %v733 = vsel %vm731, 1, 0
        %v734 = vcvt.s32.f32 %v732
        %v735 = vcvt.s32.f32 %v733
        %736 = vmatprep.subr.mxu0 0.0
        %737 = vmatpush1.msra.mxu0 %v734
        %738 = vmatprep.subr.mxu0 0.0
        %739 = vmatpush1.msra.mxu0 %v735
        %740 = vmatprep.subr.mxu0 0.0
        %741 = vmatpush1.msra.mxu0 0.0
        %742 = vmatprep.subr.mxu0 0.0
        %743 = vmatpush1.msra.mxu0 0.0
        %744 = vmatprep.subr.mxu0 0.0
        %745 = vmatpush1.msra.mxu0 0.0
        %746 = vmatprep.subr.mxu0 0.0
        %747 = vmatpush1.msra.mxu0 0.0
        %748 = vmatprep.subr.mxu0 0.0
        %749 = vmatpush1.msra.mxu0 0.0
        %750 = vmatprep.subr.mxu0 0.0
        %751 = vmatpush1.msra.mxu0 0.0
        %752 = vmatprep.subr.mxu0 0.0
        %753 = vmatpush1.msra.mxu0 0.0
        %754 = vmatprep.subr.mxu0 0.0
        %755 = vmatpush1.msra.mxu0 0.0
        %756 = vmatprep.subr.mxu0 0.0
        %757 = vmatpush1.msra.mxu0 0.0
        %758 = vmatprep.subr.mxu0 0.0
        %759 = vmatpush1.msra.mxu0 0.0
        %760 = vmatprep.subr.mxu0 0.0
        %761 = vmatpush1.msra.mxu0 0.0
        %762 = vmatprep.subr.mxu0 0.0
        %763 = vmatpush1.msra.mxu0 0.0
        %764 = vmatprep.subr.mxu0 0.0
        %765 = vmatpush1.msra.mxu0 0.0
        %766 = vmatprep.subr.mxu0 0.0
        %767 = vmatpush1.msra.mxu0 0.0
        %768 = vmatprep.subr.mxu0 0.0
        %769 = vmatpush1.msra.mxu0 0.0
        %770 = vmatprep.subr.mxu0 0.0
        %771 = vmatpush1.msra.mxu0 0.0
        %772 = vmatprep.subr.mxu0 0.0
        %773 = vmatpush1.msra.mxu0 0.0
        %774 = vmatprep.subr.mxu0 0.0
        %775 = vmatpush1.msra.mxu0 0.0
        %776 = vmatprep.subr.mxu0 0.0
        %777 = vmatpush1.msra.mxu0 0.0
        %778 = vmatprep.subr.mxu0 0.0
        %779 = vmatpush1.msra.mxu0 0.0
        %780 = vmatprep.subr.mxu0 0.0
        %781 = vmatpush1.msra.mxu0 0.0
        %782 = vmatprep.subr.mxu0 0.0
        %783 = vmatpush1.msra.mxu0 0.0
        %784 = vmatprep.subr.mxu0 0.0
        %785 = vmatpush1.msra.mxu0 0.0
        %786 = vmatprep.subr.mxu0 0.0
        %787 = vmatpush1.msra.mxu0 0.0
        %788 = vmatprep.subr.mxu0 0.0
        %789 = vmatpush1.msra.mxu0 0.0
        %790 = vmatprep.subr.mxu0 0.0
        %791 = vmatpush1.msra.mxu0 0.0
        %792 = vmatprep.subr.mxu0 0.0
        %793 = vmatpush1.msra.mxu0 0.0
        %794 = vmatprep.subr.mxu0 0.0
        %795 = vmatpush1.msra.mxu0 0.0
        %796 = vmatprep.subr.mxu0 0.0
        %797 = vmatpush1.msra.mxu0 0.0
        %798 = vmatprep.subr.mxu0 0.0
        %799 = vmatpush1.msra.mxu0 0.0
        %800 = vmatprep.mubr.f32.mxu0 0.0
        %801 = vmatmul.mubr.f32.gmra.mrb[0].mxu0 %v576
        %v802 = vpop.f32.mrb[0].mxu0
        %v803 = vadd.f32 0.0, %v802
        %v804 = vpop.f32.mrb[0].mxu0
        %805 = vdwg.mxu0
        %vm806 = vcmp.eq.s32.totalorder %v298, 0
        %807 = vset.pattern.permute.xlu0 0
        %808 = vperm.xlu0 %807, %v491
        %v809 = vpop.permute.xlu0 %808
        %v811 = vsel %vm806, %v809, %v803
        %812 = vmatprep.subr.mxu0 0.0
        %813 = vmatpush1.msra.mxu0 %v734
        %814 = vmatprep.subr.mxu0 0.0
        %815 = vmatpush1.msra.mxu0 %v735
        %816 = vmatprep.subr.mxu0 0.0
        %817 = vmatpush1.msra.mxu0 0.0
        %818 = vmatprep.subr.mxu0 0.0
        %819 = vmatpush1.msra.mxu0 0.0
        %820 = vmatprep.subr.mxu0 0.0
        %821 = vmatpush1.msra.mxu0 0.0
        %822 = vmatprep.subr.mxu0 0.0
        %823 = vmatpush1.msra.mxu0 0.0
        %824 = vmatprep.subr.mxu0 0.0
        %825 = vmatpush1.msra.mxu0 0.0
        %826 = vmatprep.subr.mxu0 0.0
        %827 = vmatpush1.msra.mxu0 0.0
        %828 = vmatprep.subr.mxu0 0.0
        %829 = vmatpush1.msra.mxu0 0.0
        %830 = vmatprep.subr.mxu0 0.0
        %831 = vmatpush1.msra.mxu0 0.0
        %832 = vmatprep.subr.mxu0 0.0
        %833 = vmatpush1.msra.mxu0 0.0
        %834 = vmatprep.subr.mxu0 0.0
        %835 = vmatpush1.msra.mxu0 0.0
        %836 = vmatprep.subr.mxu0 0.0
        %837 = vmatpush1.msra.mxu0 0.0
        %838 = vmatprep.subr.mxu0 0.0
        %839 = vmatpush1.msra.mxu0 0.0
        %840 = vmatprep.subr.mxu0 0.0
        %841 = vmatpush1.msra.mxu0 0.0
        %842 = vmatprep.subr.mxu0 0.0
        %843 = vmatpush1.msra.mxu0 0.0
        %844 = vmatprep.subr.mxu0 0.0
        %845 = vmatpush1.msra.mxu0 0.0
        %846 = vmatprep.subr.mxu0 0.0
        %847 = vmatpush1.msra.mxu0 0.0
        %848 = vmatprep.subr.mxu0 0.0
        %849 = vmatpush1.msra.mxu0 0.0
        %850 = vmatprep.subr.mxu0 0.0
        %851 = vmatpush1.msra.mxu0 0.0
        %852 = vmatprep.subr.mxu0 0.0
        %853 = vmatpush1.msra.mxu0 0.0
        %854 = vmatprep.subr.mxu0 0.0
        %855 = vmatpush1.msra.mxu0 0.0
        %856 = vmatprep.subr.mxu0 0.0
        %857 = vmatpush1.msra.mxu0 0.0
        %858 = vmatprep.subr.mxu0 0.0
        %859 = vmatpush1.msra.mxu0 0.0
        %860 = vmatprep.subr.mxu0 0.0
        %861 = vmatpush1.msra.mxu0 0.0
        %862 = vmatprep.subr.mxu0 0.0
        %863 = vmatpush1.msra.mxu0 0.0
        %864 = vmatprep.subr.mxu0 0.0
        %865 = vmatpush1.msra.mxu0 0.0
        %866 = vmatprep.subr.mxu0 0.0
        %867 = vmatpush1.msra.mxu0 0.0
        %868 = vmatprep.subr.mxu0 0.0
        %869 = vmatpush1.msra.mxu0 0.0
        %870 = vmatprep.subr.mxu0 0.0
        %871 = vmatpush1.msra.mxu0 0.0
        %872 = vmatprep.subr.mxu0 0.0
        %873 = vmatpush1.msra.mxu0 0.0
        %874 = vmatprep.subr.mxu0 0.0
        %875 = vmatpush1.msra.mxu0 0.0
        %876 = vmatprep.mubr.f32.mxu0 0.0
        %877 = vmatmul.mubr.f32.gmra.mrb[0].mxu0 %v655
        %v878 = vpop.f32.mrb[0].mxu0
        %v879 = vadd.f32 0.0, %v878
        %v880 = vpop.f32.mrb[0].mxu0
        %881 = vdwg.mxu0
        %882 = vset.pattern.permute.xlu0 15
        %883 = vperm.xlu0 %882, %v491
        %v884 = vpop.permute.xlu0 %883
        %v886 = vsel %vm806, %v884, %v879
        %vm887 = vcmp.lt.s32.totalorder %v298, %v400
        %v888 = vadd.s32 %v298, 16
        %vm889 = vcmp.lt.s32.totalorder %v888, %v400
        %v890 = vsel %vm887, %v491, 0.0
        %v891 = vsub.s32 %v400, 2
        %vm892 = vcmp.ge.s32.totalorder %v298, %v891
        %v893 = vsel %vm892, %v654, 0.0
        %v894 = vadd.f32 %v890, %v893
        %v895 = vsel %vm889, %v564, 0.0
        %vm896 = vcmp.ge.s32.totalorder %v888, %v891
        %v897 = vsel %vm896, %v727, 0.0
        %v898 = vadd.f32 %v895, %v897
        %vm899 = vcmp.lt.s32.totalorder %v298, 15
        %v900 = vsel %vm899, %v898, -1e+30
        %v901 = vsel %vm302, %v894, -inf
        %902 = vmax.xlane.f32.xlu0 %v901
        %v903 = vpop.xlane.xlu0 %902
        %v904 = vsel %vm302, %v900, -inf
        %905 = vmax.xlane.f32.xlu0 %v904
        %v906 = vpop.xlane.xlu0 %905
        %v907 = vmax.f32 %v903, %v906
        %v908 = vsub.f32 %v894, %v907
        %v909 = vmul.f32 %v908, 1.442695
        %v910 = vpow.pop %v909
        %v911 = vsel %vm302, %v910, 0.0
        %912 = vadd.xlane.f32.xlu0 %v911
        %v913 = vpop.xlane.xlu0 %912
        %v914 = vsub.f32 %v900, %v907
        %v915 = vmul.f32 %v914, 1.442695
        %v916 = vpow.pop %v915
        %v917 = vsel %vm302, %v916, 0.0
        %918 = vadd.xlane.f32.xlu0 %v917
        %v919 = vpop.xlane.xlu0 %918
        %v920 = vadd.f32 %v913, %v919
        %v921 = vlog2.pop %v920
        %v922 = vmul.f32 %v921, 0.6931472
        %v923 = vadd.f32 %v907, %v922
        %vm924 = vcmp.le.s32.totalorder %v298, %v400
        %v925 = vsel %vm924, %v811, 0.0
        %v926 = vadd.f32 %v925, %v491
        %vm927 = vcmp.le.s32.totalorder %v888, %v400
        %v928 = vsel %vm927, %v886, 0.0
        %v929 = vadd.f32 %v928, %v564
        %v930 = vsub.s32 %v400, 1
        %vm931 = vcmp.ge.s32.totalorder %v298, %v930
        %vm932 = vcmp.ge.s32.totalorder %v298, 1
        %vm933 = vmand %vm931, %vm932
        %vm934 = vcmp.ge.s32.totalorder %v888, %v930
        %v935 = vsel %vm887, %v402, 0.0
        %v936 = vsel %vm889, %v402, 0.0
        %v937 = vsel %vm933, %v402, 0.0
        %v938 = vsel %vm934, %v402, 0.0
        %v939 = vadd.f32 %v935, %v936
        %v940 = vadd.f32 %v939, %v937
        %v941 = vadd.f32 %v940, %v938
        %v942 = vmul.f32 %v923, %v941
        %v943 = vmul.f32 %v894, %v935
        %v944 = vsub.f32 %v942, %v943
        %v945 = vmul.f32 %v898, %v936
        %v946 = vsub.f32 %v944, %v945
        %v947 = vmul.f32 %v926, %v937
        %v948 = vsub.f32 %v946, %v947
        %v949 = vmul.f32 %v929, %v938
        %v950 = vsub.f32 %v948, %v949
        %v951 = vsel %vm302, %v950, 0.0
        %952 = vadd.xlane.f32.xlu0 %v951
        %v953 = vpop.xlane.xlu0 %952
        %v954 = vrot.slane %v953, 4
        %v955 = vadd.f32 %v953, %v954
        %v956 = vrot.slane %v955, 2
        %v957 = vadd.f32 %v955, %v956
        %v958 = vrot.slane %v957, 1
        %v959 = vadd.f32 %v957, %v958
        %s960 = vtos %v959
        %v961 = vld [vmem:[%s289] sm:$0xff]
        %s962 = sadd.s32 %s294, 16
        %v963 = vstv %s962
        %v964 = vadd.s32 %v296, %v963
        %v966 = vsel %vm416, %v961, 0
        %968 = vmatprep.subr.mxu0 0.0
        %969 = vmatpush1.msra.mxu0 %v422
        %970 = vmatprep.subr.mxu0 0.0
        %971 = vmatpush1.msra.mxu0 0.0
        %972 = vmatprep.subr.mxu0 0.0
        %973 = vmatpush1.msra.mxu0 0.0
        %974 = vmatprep.subr.mxu0 0.0
        %975 = vmatpush1.msra.mxu0 0.0
        %976 = vmatprep.subr.mxu0 0.0
        %977 = vmatpush1.msra.mxu0 0.0
        %978 = vmatprep.subr.mxu0 0.0
        %979 = vmatpush1.msra.mxu0 0.0
        %980 = vmatprep.subr.mxu0 0.0
        %981 = vmatpush1.msra.mxu0 0.0
        %982 = vmatprep.subr.mxu0 0.0
        %983 = vmatpush1.msra.mxu0 0.0
        %984 = vmatprep.subr.mxu0 0.0
        %985 = vmatpush1.msra.mxu0 0.0
        %986 = vmatprep.subr.mxu0 0.0
        %987 = vmatpush1.msra.mxu0 0.0
        %988 = vmatprep.subr.mxu0 0.0
        %989 = vmatpush1.msra.mxu0 0.0
        %990 = vmatprep.subr.mxu0 0.0
        %991 = vmatpush1.msra.mxu0 0.0
        %992 = vmatprep.subr.mxu0 0.0
        %993 = vmatpush1.msra.mxu0 0.0
        %994 = vmatprep.subr.mxu0 0.0
        %995 = vmatpush1.msra.mxu0 0.0
        %996 = vmatprep.subr.mxu0 0.0
        %997 = vmatpush1.msra.mxu0 0.0
        %998 = vmatprep.subr.mxu0 0.0
        %999 = vmatpush1.msra.mxu0 0.0
        %1000 = vmatprep.subr.mxu0 0.0
        %1001 = vmatpush1.msra.mxu0 0.0
        %1002 = vmatprep.subr.mxu0 0.0
        %1003 = vmatpush1.msra.mxu0 0.0
        %1004 = vmatprep.subr.mxu0 0.0
        %1005 = vmatpush1.msra.mxu0 0.0
        %1006 = vmatprep.subr.mxu0 0.0
        %1007 = vmatpush1.msra.mxu0 0.0
        %1008 = vmatprep.subr.mxu0 0.0
        %1009 = vmatpush1.msra.mxu0 0.0
        %1010 = vmatprep.subr.mxu0 0.0
        %1011 = vmatpush1.msra.mxu0 0.0
        %1012 = vmatprep.subr.mxu0 0.0
        %1013 = vmatpush1.msra.mxu0 0.0
        %1014 = vmatprep.subr.mxu0 0.0
        %1015 = vmatpush1.msra.mxu0 0.0
        %1016 = vmatprep.subr.mxu0 0.0
        %1017 = vmatpush1.msra.mxu0 0.0
        %1018 = vmatprep.subr.mxu0 0.0
        %1019 = vmatpush1.msra.mxu0 0.0
        %1020 = vmatprep.subr.mxu0 0.0
        %1021 = vmatpush1.msra.mxu0 0.0
        %1022 = vmatprep.subr.mxu0 0.0
        %1023 = vmatpush1.msra.mxu0 0.0
        %1024 = vmatprep.subr.mxu0 0.0
        %1025 = vmatpush1.msra.mxu0 0.0
        %1026 = vmatprep.subr.mxu0 0.0
        %1027 = vmatpush1.msra.mxu0 0.0
        %1028 = vmatprep.subr.mxu0 0.0
        %1029 = vmatpush1.msra.mxu0 0.0
        %1030 = vmatprep.subr.mxu0 0.0
        %1031 = vmatpush1.msra.mxu0 0.0
        %1032 = vmatprep.mubr.f32.mxu0 0.0
        %1033 = vmatmul.mubr.f32.gmra.mrb[0].mxu0 %v966
        %v1034 = vpop.f32.mrb[0].mxu0
        %v1035 = vadd.f32 0.0, %v1034
        %v1036 = vpop.f32.mrb[0].mxu0
        %1037 = vdwg.mxu0
        %1038 = vmatprep.subr.mxu0 0.0
        %1039 = vmatpush1.msra.mxu0 %v495
        %1040 = vmatprep.subr.mxu0 0.0
        %1041 = vmatpush1.msra.mxu0 0.0
        %1042 = vmatprep.subr.mxu0 0.0
        %1043 = vmatpush1.msra.mxu0 0.0
        %1044 = vmatprep.subr.mxu0 0.0
        %1045 = vmatpush1.msra.mxu0 0.0
        %1046 = vmatprep.subr.mxu0 0.0
        %1047 = vmatpush1.msra.mxu0 0.0
        %1048 = vmatprep.subr.mxu0 0.0
        %1049 = vmatpush1.msra.mxu0 0.0
        %1050 = vmatprep.subr.mxu0 0.0
        %1051 = vmatpush1.msra.mxu0 0.0
        %1052 = vmatprep.subr.mxu0 0.0
        %1053 = vmatpush1.msra.mxu0 0.0
        %1054 = vmatprep.subr.mxu0 0.0
        %1055 = vmatpush1.msra.mxu0 0.0
        %1056 = vmatprep.subr.mxu0 0.0
        %1057 = vmatpush1.msra.mxu0 0.0
        %1058 = vmatprep.subr.mxu0 0.0
        %1059 = vmatpush1.msra.mxu0 0.0
        %1060 = vmatprep.subr.mxu0 0.0
        %1061 = vmatpush1.msra.mxu0 0.0
        %1062 = vmatprep.subr.mxu0 0.0
        %1063 = vmatpush1.msra.mxu0 0.0
        %1064 = vmatprep.subr.mxu0 0.0
        %1065 = vmatpush1.msra.mxu0 0.0
        %1066 = vmatprep.subr.mxu0 0.0
        %1067 = vmatpush1.msra.mxu0 0.0
        %1068 = vmatprep.subr.mxu0 0.0
        %1069 = vmatpush1.msra.mxu0 0.0
        %1070 = vmatprep.subr.mxu0 0.0
        %1071 = vmatpush1.msra.mxu0 0.0
        %1072 = vmatprep.subr.mxu0 0.0
        %1073 = vmatpush1.msra.mxu0 0.0
        %1074 = vmatprep.subr.mxu0 0.0
        %1075 = vmatpush1.msra.mxu0 0.0
        %1076 = vmatprep.subr.mxu0 0.0
        %1077 = vmatpush1.msra.mxu0 0.0
        %1078 = vmatprep.subr.mxu0 0.0
        %1079 = vmatpush1.msra.mxu0 0.0
        %1080 = vmatprep.subr.mxu0 0.0
        %1081 = vmatpush1.msra.mxu0 0.0
        %1082 = vmatprep.subr.mxu0 0.0
        %1083 = vmatpush1.msra.mxu0 0.0
        %1084 = vmatprep.subr.mxu0 0.0
        %1085 = vmatpush1.msra.mxu0 0.0
        %1086 = vmatprep.subr.mxu0 0.0
        %1087 = vmatpush1.msra.mxu0 0.0
        %1088 = vmatprep.subr.mxu0 0.0
        %1089 = vmatpush1.msra.mxu0 0.0
        %1090 = vmatprep.subr.mxu0 0.0
        %1091 = vmatpush1.msra.mxu0 0.0
        %1092 = vmatprep.subr.mxu0 0.0
        %1093 = vmatpush1.msra.mxu0 0.0
        %1094 = vmatprep.subr.mxu0 0.0
        %1095 = vmatpush1.msra.mxu0 0.0
        %1096 = vmatprep.subr.mxu0 0.0
        %1097 = vmatpush1.msra.mxu0 0.0
        %1098 = vmatprep.subr.mxu0 0.0
        %1099 = vmatpush1.msra.mxu0 0.0
        %1100 = vmatprep.subr.mxu0 0.0
        %1101 = vmatpush1.msra.mxu0 0.0
        %1102 = vmatprep.mubr.f32.mxu0 0.0
        %1103 = vmatmul.mubr.f32.gmra.mrb[0].mxu0 %v966
        %v1104 = vpop.f32.mrb[0].mxu0
        %v1105 = vadd.f32 0.0, %v1104
        %v1106 = vpop.f32.mrb[0].mxu0
        %1107 = vdwg.mxu0
        %v1109 = vsel %vm302, %v1035, 0
        %1111 = vmatprep.subr.mxu0 0.0
        %1112 = vmatpush1.msra.mxu0 %v573
        %1113 = vmatprep.subr.mxu0 0.0
        %1114 = vmatpush1.msra.mxu0 %v574
        %1115 = vmatprep.subr.mxu0 0.0
        %1116 = vmatpush1.msra.mxu0 0.0
        %1117 = vmatprep.subr.mxu0 0.0
        %1118 = vmatpush1.msra.mxu0 0.0
        %1119 = vmatprep.subr.mxu0 0.0
        %1120 = vmatpush1.msra.mxu0 0.0
        %1121 = vmatprep.subr.mxu0 0.0
        %1122 = vmatpush1.msra.mxu0 0.0
        %1123 = vmatprep.subr.mxu0 0.0
        %1124 = vmatpush1.msra.mxu0 0.0
        %1125 = vmatprep.subr.mxu0 0.0
        %1126 = vmatpush1.msra.mxu0 0.0
        %1127 = vmatprep.subr.mxu0 0.0
        %1128 = vmatpush1.msra.mxu0 0.0
        %1129 = vmatprep.subr.mxu0 0.0
        %1130 = vmatpush1.msra.mxu0 0.0
        %1131 = vmatprep.subr.mxu0 0.0
        %1132 = vmatpush1.msra.mxu0 0.0
        %1133 = vmatprep.subr.mxu0 0.0
        %1134 = vmatpush1.msra.mxu0 0.0
        %1135 = vmatprep.subr.mxu0 0.0
        %1136 = vmatpush1.msra.mxu0 0.0
        %1137 = vmatprep.subr.mxu0 0.0
        %1138 = vmatpush1.msra.mxu0 0.0
        %1139 = vmatprep.subr.mxu0 0.0
        %1140 = vmatpush1.msra.mxu0 0.0
        %1141 = vmatprep.subr.mxu0 0.0
        %1142 = vmatpush1.msra.mxu0 0.0
        %1143 = vmatprep.subr.mxu0 0.0
        %1144 = vmatpush1.msra.mxu0 0.0
        %1145 = vmatprep.subr.mxu0 0.0
        %1146 = vmatpush1.msra.mxu0 0.0
        %1147 = vmatprep.subr.mxu0 0.0
        %1148 = vmatpush1.msra.mxu0 0.0
        %1149 = vmatprep.subr.mxu0 0.0
        %1150 = vmatpush1.msra.mxu0 0.0
        %1151 = vmatprep.subr.mxu0 0.0
        %1152 = vmatpush1.msra.mxu0 0.0
        %1153 = vmatprep.subr.mxu0 0.0
        %1154 = vmatpush1.msra.mxu0 0.0
        %1155 = vmatprep.subr.mxu0 0.0
        %1156 = vmatpush1.msra.mxu0 0.0
        %1157 = vmatprep.subr.mxu0 0.0
        %1158 = vmatpush1.msra.mxu0 0.0
        %1159 = vmatprep.subr.mxu0 0.0
        %1160 = vmatpush1.msra.mxu0 0.0
        %1161 = vmatprep.subr.mxu0 0.0
        %1162 = vmatpush1.msra.mxu0 0.0
        %1163 = vmatprep.subr.mxu0 0.0
        %1164 = vmatpush1.msra.mxu0 0.0
        %1165 = vmatprep.subr.mxu0 0.0
        %1166 = vmatpush1.msra.mxu0 0.0
        %1167 = vmatprep.subr.mxu0 0.0
        %1168 = vmatpush1.msra.mxu0 0.0
        %1169 = vmatprep.subr.mxu0 0.0
        %1170 = vmatpush1.msra.mxu0 0.0
        %1171 = vmatprep.subr.mxu0 0.0
        %1172 = vmatpush1.msra.mxu0 0.0
        %1173 = vmatprep.subr.mxu0 0.0
        %1174 = vmatpush1.msra.mxu0 0.0
        %1175 = vmatprep.mubr.f32.mxu0 0.0
        %1176 = vmatmul.mubr.f32.gmra.mrb[0].mxu0 %v1109
        %v1177 = vpop.f32.mrb[0].mxu0
        %v1178 = vadd.f32 0.0, %v1177
        %v1179 = vpop.f32.mrb[0].mxu0
        %1180 = vdwg.mxu0
        %1182 = vset.pattern.permute.xlu0 0
        %1183 = vperm.xlu0 %1182, %v1105
        %v1184 = vpop.permute.xlu0 %1183
        %v1186 = vsel %vm648, %v1184, %v1178
        %v1187 = vsel %vm302, %v1105, 0
        %1189 = vmatprep.subr.mxu0 0.0
        %1190 = vmatpush1.msra.mxu0 %v573
        %1191 = vmatprep.subr.mxu0 0.0
        %1192 = vmatpush1.msra.mxu0 %v574
        %1193 = vmatprep.subr.mxu0 0.0
        %1194 = vmatpush1.msra.mxu0 0.0
        %1195 = vmatprep.subr.mxu0 0.0
        %1196 = vmatpush1.msra.mxu0 0.0
        %1197 = vmatprep.subr.mxu0 0.0
        %1198 = vmatpush1.msra.mxu0 0.0
        %1199 = vmatprep.subr.mxu0 0.0
        %1200 = vmatpush1.msra.mxu0 0.0
        %1201 = vmatprep.subr.mxu0 0.0
        %1202 = vmatpush1.msra.mxu0 0.0
        %1203 = vmatprep.subr.mxu0 0.0
        %1204 = vmatpush1.msra.mxu0 0.0
        %1205 = vmatprep.subr.mxu0 0.0
        %1206 = vmatpush1.msra.mxu0 0.0
        %1207 = vmatprep.subr.mxu0 0.0
        %1208 = vmatpush1.msra.mxu0 0.0
        %1209 = vmatprep.subr.mxu0 0.0
        %1210 = vmatpush1.msra.mxu0 0.0
        %1211 = vmatprep.subr.mxu0 0.0
        %1212 = vmatpush1.msra.mxu0 0.0
        %1213 = vmatprep.subr.mxu0 0.0
        %1214 = vmatpush1.msra.mxu0 0.0
        %1215 = vmatprep.subr.mxu0 0.0
        %1216 = vmatpush1.msra.mxu0 0.0
        %1217 = vmatprep.subr.mxu0 0.0
        %1218 = vmatpush1.msra.mxu0 0.0
        %1219 = vmatprep.subr.mxu0 0.0
        %1220 = vmatpush1.msra.mxu0 0.0
        %1221 = vmatprep.subr.mxu0 0.0
        %1222 = vmatpush1.msra.mxu0 0.0
        %1223 = vmatprep.subr.mxu0 0.0
        %1224 = vmatpush1.msra.mxu0 0.0
        %1225 = vmatprep.subr.mxu0 0.0
        %1226 = vmatpush1.msra.mxu0 0.0
        %1227 = vmatprep.subr.mxu0 0.0
        %1228 = vmatpush1.msra.mxu0 0.0
        %1229 = vmatprep.subr.mxu0 0.0
        %1230 = vmatpush1.msra.mxu0 0.0
        %1231 = vmatprep.subr.mxu0 0.0
        %1232 = vmatpush1.msra.mxu0 0.0
        %1233 = vmatprep.subr.mxu0 0.0
        %1234 = vmatpush1.msra.mxu0 0.0
        %1235 = vmatprep.subr.mxu0 0.0
        %1236 = vmatpush1.msra.mxu0 0.0
        %1237 = vmatprep.subr.mxu0 0.0
        %1238 = vmatpush1.msra.mxu0 0.0
        %1239 = vmatprep.subr.mxu0 0.0
        %1240 = vmatpush1.msra.mxu0 0.0
        %1241 = vmatprep.subr.mxu0 0.0
        %1242 = vmatpush1.msra.mxu0 0.0
        %1243 = vmatprep.subr.mxu0 0.0
        %1244 = vmatpush1.msra.mxu0 0.0
        %1245 = vmatprep.subr.mxu0 0.0
        %1246 = vmatpush1.msra.mxu0 0.0
        %1247 = vmatprep.subr.mxu0 0.0
        %1248 = vmatpush1.msra.mxu0 0.0
        %1249 = vmatprep.subr.mxu0 0.0
        %1250 = vmatpush1.msra.mxu0 0.0
        %1251 = vmatprep.subr.mxu0 0.0
        %1252 = vmatpush1.msra.mxu0 0.0
        %1253 = vmatprep.mubr.f32.mxu0 0.0
        %1254 = vmatmul.mubr.f32.gmra.mrb[0].mxu0 %v1187
        %v1255 = vpop.f32.mrb[0].mxu0
        %v1256 = vadd.f32 0.0, %v1255
        %v1257 = vpop.f32.mrb[0].mxu0
        %1258 = vdwg.mxu0
        %v1259 = vsel %vm648, %v1184, %v1256
        %1260 = vmatprep.subr.mxu0 0.0
        %1261 = vmatpush1.msra.mxu0 %v734
        %1262 = vmatprep.subr.mxu0 0.0
        %1263 = vmatpush1.msra.mxu0 %v735
        %1264 = vmatprep.subr.mxu0 0.0
        %1265 = vmatpush1.msra.mxu0 0.0
        %1266 = vmatprep.subr.mxu0 0.0
        %1267 = vmatpush1.msra.mxu0 0.0
        %1268 = vmatprep.subr.mxu0 0.0
        %1269 = vmatpush1.msra.mxu0 0.0
        %1270 = vmatprep.subr.mxu0 0.0
        %1271 = vmatpush1.msra.mxu0 0.0
        %1272 = vmatprep.subr.mxu0 0.0
        %1273 = vmatpush1.msra.mxu0 0.0
        %1274 = vmatprep.subr.mxu0 0.0
        %1275 = vmatpush1.msra.mxu0 0.0
        %1276 = vmatprep.subr.mxu0 0.0
        %1277 = vmatpush1.msra.mxu0 0.0
        %1278 = vmatprep.subr.mxu0 0.0
        %1279 = vmatpush1.msra.mxu0 0.0
        %1280 = vmatprep.subr.mxu0 0.0
        %1281 = vmatpush1.msra.mxu0 0.0
        %1282 = vmatprep.subr.mxu0 0.0
        %1283 = vmatpush1.msra.mxu0 0.0
        %1284 = vmatprep.subr.mxu0 0.0
        %1285 = vmatpush1.msra.mxu0 0.0
        %1286 = vmatprep.subr.mxu0 0.0
        %1287 = vmatpush1.msra.mxu0 0.0
        %1288 = vmatprep.subr.mxu0 0.0
        %1289 = vmatpush1.msra.mxu0 0.0
        %1290 = vmatprep.subr.mxu0 0.0
        %1291 = vmatpush1.msra.mxu0 0.0
        %1292 = vmatprep.subr.mxu0 0.0
        %1293 = vmatpush1.msra.mxu0 0.0
        %1294 = vmatprep.subr.mxu0 0.0
        %1295 = vmatpush1.msra.mxu0 0.0
        %1296 = vmatprep.subr.mxu0 0.0
        %1297 = vmatpush1.msra.mxu0 0.0
        %1298 = vmatprep.subr.mxu0 0.0
        %1299 = vmatpush1.msra.mxu0 0.0
        %1300 = vmatprep.subr.mxu0 0.0
        %1301 = vmatpush1.msra.mxu0 0.0
        %1302 = vmatprep.subr.mxu0 0.0
        %1303 = vmatpush1.msra.mxu0 0.0
        %1304 = vmatprep.subr.mxu0 0.0
        %1305 = vmatpush1.msra.mxu0 0.0
        %1306 = vmatprep.subr.mxu0 0.0
        %1307 = vmatpush1.msra.mxu0 0.0
        %1308 = vmatprep.subr.mxu0 0.0
        %1309 = vmatpush1.msra.mxu0 0.0
        %1310 = vmatprep.subr.mxu0 0.0
        %1311 = vmatpush1.msra.mxu0 0.0
        %1312 = vmatprep.subr.mxu0 0.0
        %1313 = vmatpush1.msra.mxu0 0.0
        %1314 = vmatprep.subr.mxu0 0.0
        %1315 = vmatpush1.msra.mxu0 0.0
        %1316 = vmatprep.subr.mxu0 0.0
        %1317 = vmatpush1.msra.mxu0 0.0
        %1318 = vmatprep.subr.mxu0 0.0
        %1319 = vmatpush1.msra.mxu0 0.0
        %1320 = vmatprep.subr.mxu0 0.0
        %1321 = vmatpush1.msra.mxu0 0.0
        %1322 = vmatprep.subr.mxu0 0.0
        %1323 = vmatpush1.msra.mxu0 0.0
        %1324 = vmatprep.mubr.f32.mxu0 0.0
        %1325 = vmatmul.mubr.f32.gmra.mrb[0].mxu0 %v1109
        %v1326 = vpop.f32.mrb[0].mxu0
        %v1327 = vadd.f32 0.0, %v1326
        %v1328 = vpop.f32.mrb[0].mxu0
        %1329 = vdwg.mxu0
        %1330 = vset.pattern.permute.xlu0 0
        %1331 = vperm.xlu0 %1330, %v1035
        %v1332 = vpop.permute.xlu0 %1331
        %v1334 = vsel %vm806, %v1332, %v1327
        %1335 = vmatprep.subr.mxu0 0.0
        %1336 = vmatpush1.msra.mxu0 %v734
        %1337 = vmatprep.subr.mxu0 0.0
        %1338 = vmatpush1.msra.mxu0 %v735
        %1339 = vmatprep.subr.mxu0 0.0
        %1340 = vmatpush1.msra.mxu0 0.0
        %1341 = vmatprep.subr.mxu0 0.0
        %1342 = vmatpush1.msra.mxu0 0.0
        %1343 = vmatprep.subr.mxu0 0.0
        %1344 = vmatpush1.msra.mxu0 0.0
        %1345 = vmatprep.subr.mxu0 0.0
        %1346 = vmatpush1.msra.mxu0 0.0
        %1347 = vmatprep.subr.mxu0 0.0
        %1348 = vmatpush1.msra.mxu0 0.0
        %1349 = vmatprep.subr.mxu0 0.0
        %1350 = vmatpush1.msra.mxu0 0.0
        %1351 = vmatprep.subr.mxu0 0.0
        %1352 = vmatpush1.msra.mxu0 0.0
        %1353 = vmatprep.subr.mxu0 0.0
        %1354 = vmatpush1.msra.mxu0 0.0
        %1355 = vmatprep.subr.mxu0 0.0
        %1356 = vmatpush1.msra.mxu0 0.0
        %1357 = vmatprep.subr.mxu0 0.0
        %1358 = vmatpush1.msra.mxu0 0.0
        %1359 = vmatprep.subr.mxu0 0.0
        %1360 = vmatpush1.msra.mxu0 0.0
        %1361 = vmatprep.subr.mxu0 0.0
        %1362 = vmatpush1.msra.mxu0 0.0
        %1363 = vmatprep.subr.mxu0 0.0
        %1364 = vmatpush1.msra.mxu0 0.0
        %1365 = vmatprep.subr.mxu0 0.0
        %1366 = vmatpush1.msra.mxu0 0.0
        %1367 = vmatprep.subr.mxu0 0.0
        %1368 = vmatpush1.msra.mxu0 0.0
        %1369 = vmatprep.subr.mxu0 0.0
        %1370 = vmatpush1.msra.mxu0 0.0
        %1371 = vmatprep.subr.mxu0 0.0
        %1372 = vmatpush1.msra.mxu0 0.0
        %1373 = vmatprep.subr.mxu0 0.0
        %1374 = vmatpush1.msra.mxu0 0.0
        %1375 = vmatprep.subr.mxu0 0.0
        %1376 = vmatpush1.msra.mxu0 0.0
        %1377 = vmatprep.subr.mxu0 0.0
        %1378 = vmatpush1.msra.mxu0 0.0
        %1379 = vmatprep.subr.mxu0 0.0
        %1380 = vmatpush1.msra.mxu0 0.0
        %1381 = vmatprep.subr.mxu0 0.0
        %1382 = vmatpush1.msra.mxu0 0.0
        %1383 = vmatprep.subr.mxu0 0.0
        %1384 = vmatpush1.msra.mxu0 0.0
        %1385 = vmatprep.subr.mxu0 0.0
        %1386 = vmatpush1.msra.mxu0 0.0
        %1387 = vmatprep.subr.mxu0 0.0
        %1388 = vmatpush1.msra.mxu0 0.0
        %1389 = vmatprep.subr.mxu0 0.0
        %1390 = vmatpush1.msra.mxu0 0.0
        %1391 = vmatprep.subr.mxu0 0.0
        %1392 = vmatpush1.msra.mxu0 0.0
        %1393 = vmatprep.subr.mxu0 0.0
        %1394 = vmatpush1.msra.mxu0 0.0
        %1395 = vmatprep.subr.mxu0 0.0
        %1396 = vmatpush1.msra.mxu0 0.0
        %1397 = vmatprep.subr.mxu0 0.0
        %1398 = vmatpush1.msra.mxu0 0.0
        %1399 = vmatprep.mubr.f32.mxu0 0.0
        %1400 = vmatmul.mubr.f32.gmra.mrb[0].mxu0 %v1187
        %v1401 = vpop.f32.mrb[0].mxu0
        %v1402 = vadd.f32 0.0, %v1401
        %v1403 = vpop.f32.mrb[0].mxu0
        %1404 = vdwg.mxu0
        %1405 = vset.pattern.permute.xlu0 15
        %1406 = vperm.xlu0 %1405, %v1035
        %v1407 = vpop.permute.xlu0 %1406
        %v1409 = vsel %vm806, %v1407, %v1402
        %vm1410 = vcmp.lt.s32.totalorder %v298, %v964
        %vm1411 = vcmp.lt.s32.totalorder %v888, %v964
        %v1412 = vsel %vm1410, %v1035, 0.0
        %v1413 = vsub.s32 %v964, 2
        %vm1414 = vcmp.ge.s32.totalorder %v298, %v1413
        %v1415 = vsel %vm1414, %v1186, 0.0
        %v1416 = vadd.f32 %v1412, %v1415
        %v1417 = vsel %vm1411, %v1105, 0.0
        %vm1418 = vcmp.ge.s32.totalorder %v888, %v1413
        %v1419 = vsel %vm1418, %v1259, 0.0
        %v1420 = vadd.f32 %v1417, %v1419
        %v1421 = vsel %vm899, %v1420, -1e+30
        %v1422 = vsel %vm302, %v1416, -inf
        %1423 = vmax.xlane.f32.xlu0 %v1422
        %v1424 = vpop.xlane.xlu0 %1423
        %v1425 = vsel %vm302, %v1421, -inf
        %1426 = vmax.xlane.f32.xlu0 %v1425
        %v1427 = vpop.xlane.xlu0 %1426
        %v1428 = vmax.f32 %v1424, %v1427
        %v1429 = vsub.f32 %v1416, %v1428
        %v1430 = vmul.f32 %v1429, 1.442695
        %v1431 = vpow.pop %v1430
        %v1432 = vsel %vm302, %v1431, 0.0
        %1433 = vadd.xlane.f32.xlu0 %v1432
        %v1434 = vpop.xlane.xlu0 %1433
        %v1435 = vsub.f32 %v1421, %v1428
        %v1436 = vmul.f32 %v1435, 1.442695
        %v1437 = vpow.pop %v1436
        %v1438 = vsel %vm302, %v1437, 0.0
        %1439 = vadd.xlane.f32.xlu0 %v1438
        %v1440 = vpop.xlane.xlu0 %1439
        %v1441 = vadd.f32 %v1434, %v1440
        %v1442 = vlog2.pop %v1441
        %v1443 = vmul.f32 %v1442, 0.6931472
        %v1444 = vadd.f32 %v1428, %v1443
        %vm1445 = vcmp.le.s32.totalorder %v298, %v964
        %v1446 = vsel %vm1445, %v1334, 0.0
        %v1447 = vadd.f32 %v1446, %v1035
        %vm1448 = vcmp.le.s32.totalorder %v888, %v964
        %v1449 = vsel %vm1448, %v1409, 0.0
        %v1450 = vadd.f32 %v1449, %v1105
        %v1451 = vsub.s32 %v964, 1
        %vm1452 = vcmp.ge.s32.totalorder %v298, %v1451
        %vm1453 = vmand %vm1452, %vm932
        %vm1454 = vcmp.ge.s32.totalorder %v888, %v1451
        %v1455 = vsel %vm1410, %v402, 0.0
        %v1456 = vsel %vm1411, %v402, 0.0
        %v1457 = vsel %vm1453, %v402, 0.0
        %v1458 = vsel %vm1454, %v402, 0.0
        %v1459 = vadd.f32 %v1455, %v1456
        %v1460 = vadd.f32 %v1459, %v1457
        %v1461 = vadd.f32 %v1460, %v1458
        %v1462 = vmul.f32 %v1444, %v1461
        %v1463 = vmul.f32 %v1416, %v1455
        %v1464 = vsub.f32 %v1462, %v1463
        %v1465 = vmul.f32 %v1420, %v1456
        %v1466 = vsub.f32 %v1464, %v1465
        %v1467 = vmul.f32 %v1447, %v1457
        %v1468 = vsub.f32 %v1466, %v1467
        %v1469 = vmul.f32 %v1450, %v1458
        %v1470 = vsub.f32 %v1468, %v1469
        %v1471 = vsel %vm302, %v1470, 0.0
        %1472 = vadd.xlane.f32.xlu0 %v1471
        %v1473 = vpop.xlane.xlu0 %1472
        %v1474 = vrot.slane %v1473, 4
        %v1475 = vadd.f32 %v1473, %v1474
        %v1476 = vrot.slane %v1475, 2
        %v1477 = vadd.f32 %v1475, %v1476
        %v1478 = vrot.slane %v1477, 1
        %v1479 = vadd.f32 %v1477, %v1478
        %s1480 = vtos %v1479
        %s1481 = sadd.f32 %s960, %s1480
        %vm1482 = vcmp.eq.s32.totalorder %v296, 0
        %vm1483 = vmand %vm1482, %vm806
        %vm1484 = vcmp.eq.s32.totalorder %v298, 1
        %vm1485 = vmand %vm1482, %vm1484
        %v1486 = vstv %s412
        %v1487 = vsel %vm1485, %v1486, 0.0
        %v1488 = vstv %s1481
        %v1489 = vsel %vm1483, %v1488, %v1487
        %1490 = vst [vmem:[%s281] sm:$0xff] %v1489
        %s1491 = sand.u32 %s170, 1
        %s1492 = scalar_lea.sflag [#allocation4], %s1491
        %s1493 = sand.u32 %s170, 1
        %s1494 = smul.addr %s1493, 8
        %s1495 = scalar_lea.vmem [#allocation5], %s1494
        // Predicated region
        $region49: #{tpu_custom_call.1} parent=43 // pred_check
          %p1496 = pneg %p180
        $region50: #{tpu_custom_call.1} parent=43 // pred_check_branch
          %1498 = sbr.rel (%p1496) target = $region52
        $region51: #{tpu_custom_call.1} parent=43 // pred_region
          %s1500 = ssub.s32 128, 128
          %1501 = vsyncadd %s1492, %s1500
          %s1502 = smul.addr %s21, 128
          %s1503 = scalar_lea.hbm %s6, %s1502
          %s1505 = sshll.u32 %s1495, 4
          %s1506 = int_to_ptr.vmem [resolvable:$true] %s1505
          %1508 = dma.vmem_to_hbm [thread:$0]  %s1506, 128, %s1503, %s1492
        $region52: #{tpu_custom_call.1} parent=43 // pred_fallthru
          _
      $region44: #{tpu_custom_call.1} parent=5 // pred_fallthru
        _
      %p1509 = scmp.le.s32.totalorder 2, %s16
      // Predicated region
      $region53: #{tpu_custom_call.1} parent=5 // pred_check
        %p1510 = pneg %p1509
      $region54: #{tpu_custom_call.1} parent=5 // pred_check_branch
        %1512 = sbr.rel (%p1510) target = $region56
      $region55: #{tpu_custom_call.1} parent=5 // pred_region
        %s1513 = ssub.s32 %s16, 2
        // Predicated region
        $region57: #{tpu_custom_call.1} parent=55 // pred_check
          %p1514 = pneg %p186
        $region58: #{tpu_custom_call.1} parent=55 // pred_check_branch
          %1516 = sbr.rel (%p1514) target = $region60
        $region59: #{tpu_custom_call.1} parent=55 // pred_region
          %s1517 = sand.u32 %s171, 1
          %s1518 = scalar_lea.sflag [#allocation4], %s1517
          %s1519 = sand.u32 %s171, 1
          %s1520 = smul.addr %s1519, 8
          %s1521 = scalar_lea.vmem [#allocation5], %s1520
          %1522 = dma.done %s1518, 128
        $region60: #{tpu_custom_call.1} parent=55 // pred_fallthru
          _
      $region56: #{tpu_custom_call.1} parent=5 // pred_fallthru
        _
    $region6: #{tpu_custom_call.1} parent=1 // loop_footer
      %s20 = sadd.s32 1, %s16
    $region7: #{tpu_custom_call.1} parent=1 // loop_footer_branch
      %15 = sbr.rel target = $region3
    $region8: #{tpu_custom_call.1} parent=1 // loop_exit
      _
    %1523 = vsyncpa [#allocation3], 1
    %s1524 = scalar_lea.sflag [#allocation3], 1
    %1525 = vsyncpa %s1524, 1
    %1526 = vsyncpa [#allocation4], 1
    %s1527 = scalar_lea.sflag [#allocation4], 1
    %1528 = vsyncpa %s1527, 1

</llo_original>
